<compile_context>
chip_gen: v6e
topology: v6e:2x2x1
jax: 0.10.0
libtpu: 0.0.40
codegen_flags: <defaults>
</compile_context>

<pallas_src>
import functools

import jax
import jax.numpy as jnp
from jax import lax
from jax.experimental import pallas as pl
from jax.experimental.pallas import tpu as pltpu

LANE = 128


def _round_up(x, m):
    return (x + m - 1) // m * m


# ----------------------------------------------------------------------------
# Shared conv core: single im2col matmul off the VMEM halo scratch
# ----------------------------------------------------------------------------
def _im2col_dot(xp_ref, w_ref, H, W, C):
    # xp_ref: (H+2, W+2, C) zero-haloed tile in VMEM scratch
    # w_ref : (9*C, Cout) packed taps (dy, dx, cin) row-major
    cols = [xp_ref[pl.ds(dy, H), pl.ds(dx, W), :].reshape(H * W, C)
            for dy in range(3) for dx in range(3)]
    patches = jnp.concatenate(cols, axis=-1)                     # (H*W, 9*C)
    return jnp.dot(patches, w_ref[...], preferred_element_type=jnp.float32)


# ----------------------------------------------------------------------------
# Kernel 1: conv1 (bias dropped) + per-channel sum / sum-of-squares for BN1
# ----------------------------------------------------------------------------
def _conv_stats_kernel(x_ref, w_ref, y_ref, sum_ref, ssq_ref, xp_ref,
                       *, H, W, Cin, Cp, Cop):
    n = pl.program_id(0)

    @pl.when(n == 0)
    def _init():
        # Zero halo/channel-pad scratch once; borders & padded lanes stay zero forever.
        xp_ref[...] = jnp.zeros_like(xp_ref)
        sum_ref[...] = jnp.zeros_like(sum_ref)
        ssq_ref[...] = jnp.zeros_like(ssq_ref)

    # In-kernel halo + channel padding: compact (H, W, Cin) tile -> interior / first
    # Cin lanes of the zeroed (H+2, W+2, Cp) scratch.  No wrapper-side jnp.pad.
    xp_ref[pl.ds(1, H), pl.ds(1, W), pl.ds(0, Cin)] = x_ref[...][0].astype(jnp.float32)

    y = _im2col_dot(xp_ref, w_ref, H, W, Cp)                     # (H*W, Cop) f32
    y_ref[...] = y.reshape(1, H, W, Cop).astype(y_ref.dtype)
    sum_ref[...] += jnp.sum(y, axis=0, keepdims=True)
    ssq_ref[...] += jnp.sum(y * y, axis=0, keepdims=True)


# ----------------------------------------------------------------------------
# Kernel 2: BN1 affine + ReLU + conv2 (bias dropped) + stats for BN2 (fused)
# ----------------------------------------------------------------------------
def _bnrelu_conv_stats_kernel(x_ref, s_ref, t_ref, w_ref, y_ref, sum_ref, ssq_ref,
                              xp_ref, *, H, W, Cp, Cop):
    n = pl.program_id(0)

    @pl.when(n == 0)
    def _init():
        xp_ref[...] = jnp.zeros_like(xp_ref)
        sum_ref[...] = jnp.zeros_like(sum_ref)
        ssq_ref[...] = jnp.zeros_like(ssq_ref)

    a = x_ref[...][0].astype(jnp.float32)                        # (H, W, Cp)
    a = jnp.maximum(a * s_ref[...] + t_ref[...], 0.0)            # BN1 affine + ReLU (f32)
    xp_ref[pl.ds(1, H), pl.ds(1, W), :] = a                      # interior of zero halo

    y = _im2col_dot(xp_ref, w_ref, H, W, Cp)                     # (H*W, Cop) f32
    y_ref[...] = y.reshape(1, H, W, Cop).astype(y_ref.dtype)
    sum_ref[...] += jnp.sum(y, axis=0, keepdims=True)
    ssq_ref[...] += jnp.sum(y * y, axis=0, keepdims=True)


# ----------------------------------------------------------------------------
# Kernel 3: BN2 affine + ReLU (lane-dense elementwise)
# ----------------------------------------------------------------------------
def _bn_relu_kernel(x_ref, s_ref, t_ref, o_ref):
    x = x_ref[...].astype(jnp.float32)
    o_ref[...] = jnp.maximum(x * s_ref[...] + t_ref[...], 0.0).astype(o_ref.dtype)


# ----------------------------------------------------------------------------
# DoubleConv forward (Pallas)
# ----------------------------------------------------------------------------
def double_conv_pallas(x_nchw, params, eps=1e-5):
    N, Cin, H, W = x_nchw.shape
    Cout = params["w1"].shape[-1]
    Cp = _round_up(Cin, LANE)     # lane-dense conv1 input-channel width
    Cop = _round_up(Cout, LANE)   # lane-dense channel width carried through the pipeline

    x = jnp.transpose(x_nchw, (0, 2, 3, 1))                      # NCHW -> NHWC

    # Pack weights lane-dense: (3,3,Ci,Co) -> zero-pad channels -> (9*Cp, Cop).
    w1 = jnp.pad(params["w1"], ((0, 0), (0, 0), (0, Cp - Cin), (0, Cop - Cout)))
    w1 = w1.reshape(9 * Cp, Cop)
    w2 = jnp.pad(params["w2"], ((0, 0), (0, 0), (0, Cop - Cout), (0, Cop - Cout)))
    w2 = w2.reshape(9 * Cop, Cop)
    g1 = jnp.pad(params["g1"], (0, Cop - Cout), constant_values=1.0).reshape(1, Cop)
    be1 = jnp.pad(params["be1"], (0, Cop - Cout)).reshape(1, Cop)
    g2 = jnp.pad(params["g2"], (0, Cop - Cout), constant_values=1.0).reshape(1, Cop)
    be2 = jnp.pad(params["be2"], (0, Cop - Cout)).reshape(1, Cop)
    # NOTE: conv biases b1/b2 are intentionally NOT applied: a per-channel constant
    # added before training-mode BatchNorm is exactly cancelled by the mean subtraction.

    cnt = jnp.float32(N * H * W)

    # ---- pass 1: conv1 + BN1 statistics (batch axis = "arbitrary" accumulation) ----
    y1, s1, q1 = pl.pallas_call(
        functools.partial(_conv_stats_kernel, H=H, W=W, Cin=Cin, Cp=Cp, Cop=Cop),
        out_shape=(jax.ShapeDtypeStruct((N, H, W, Cop), jnp.float32),
                   jax.ShapeDtypeStruct((1, Cop), jnp.float32),
                   jax.ShapeDtypeStruct((1, Cop), jnp.float32)),
        grid=(N,),
        in_specs=[pl.BlockSpec((1, H, W, Cin), lambda n: (n, 0, 0, 0)),
                  pl.BlockSpec((9 * Cp, Cop), lambda n: (0, 0))],
        out_specs=(pl.BlockSpec((1, H, W, Cop), lambda n: (n, 0, 0, 0)),
                   pl.BlockSpec((1, Cop), lambda n: (0, 0)),
                   pl.BlockSpec((1, Cop), lambda n: (0, 0))),
        scratch_shapes=[pltpu.VMEM((H + 2, W + 2, Cp), jnp.float32)],
        compiler_params=pltpu.CompilerParams(dimension_semantics=("arbitrary",)),
        cost_estimate=pl.CostEstimate(
            flops=2 * N * H * W * 9 * Cp * Cop, transcendentals=0,
            bytes_accessed=4 * (x.size + w1.size + N * H * W * Cop + 2 * Cop)),
    )(x, w1)

    mean1 = s1 / cnt
    var1 = jnp.maximum(q1 / cnt - mean1 * mean1, 0.0)            # biased variance
    scale1 = g1 * lax.rsqrt(var1 + eps)
    shift1 = be1 - mean1 * scale1

    # ---- pass 2: BN1+ReLU fused into conv2, plus BN2 statistics ----
    y2, s2, q2 = pl.pallas_call(
        functools.partial(_bnrelu_conv_stats_kernel, H=H, W=W, Cp=Cop, Cop=Cop),
        out_shape=(jax.ShapeDtypeStruct((N, H, W, Cop), jnp.float32),
                   jax.ShapeDtypeStruct((1, Cop), jnp.float32),
                   jax.ShapeDtypeStruct((1, Cop), jnp.float32)),
        grid=(N,),
        in_specs=[pl.BlockSpec((1, H, W, Cop), lambda n: (n, 0, 0, 0)),
                  pl.BlockSpec((1, Cop), lambda n: (0, 0)),
                  pl.BlockSpec((1, Cop), lambda n: (0, 0)),
                  pl.BlockSpec((9 * Cop, Cop), lambda n: (0, 0))],
        out_specs=(pl.BlockSpec((1, H, W, Cop), lambda n: (n, 0, 0, 0)),
                   pl.BlockSpec((1, Cop), lambda n: (0, 0)),
                   pl.BlockSpec((1, Cop), lambda n: (0, 0))),
        scratch_shapes=[pltpu.VMEM((H + 2, W + 2, Cop), jnp.float32)],
        compiler_params=pltpu.CompilerParams(dimension_semantics=("arbitrary",)),
        cost_estimate=pl.CostEstimate(
            flops=2 * N * H * W * 9 * Cop * Cop, transcendentals=0,
            bytes_accessed=4 * (2 * N * H * W * Cop + w2.size + 6 * Cop)),
    )(y1, scale1, shift1, w2)

    mean2 = s2 / cnt
    var2 = jnp.maximum(q2 / cnt - mean2 * mean2, 0.0)
    scale2 = g2 * lax.rsqrt(var2 + eps)
    shift2 = be2 - mean2 * scale2

    # ---- pass 3: BN2 + ReLU (parallel over batch, lane-dense blocks) ----
    out = pl.pallas_call(
        _bn_relu_kernel,
        out_shape=jax.ShapeDtypeStruct((N, H, W, Cop), jnp.float32),
        grid=(N,),
        in_specs=[pl.BlockSpec((1, H, W, Cop), lambda n: (n, 0, 0, 0)),
                  pl.BlockSpec((1, Cop), lambda n: (0, 0)),
                  pl.BlockSpec((1, Cop), lambda n: (0, 0))],
        out_specs=pl.BlockSpec((1, H, W, Cop), lambda n: (n, 0, 0, 0)),
        compiler_params=pltpu.CompilerParams(dimension_semantics=("parallel",)),
    )(y2, scale2, shift2)

    out = out[:, :, :, :Cout]                                    # drop padded channels
    return jnp.transpose(out, (0, 3, 1, 2))                      # NHWC -> NCHW
    # TODO(synk): for large H*W on v7x (64 MiB VMEM), tile H into row strips with a
    # 2-row halo via the index_map instead of one whole image per grid step.


# ----------------------------------------------------------------------------
# Pure-JAX reference (faithful PyTorch semantics, including conv bias)
# ----------------------------------------------------------------------------
def _ref_conv(x_nchw, w_hwio, b):
    w_oihw = jnp.transpose(w_hwio, (3, 2, 0, 1))                 # HWIO -> OIHW
    y = lax.conv_general_dilated(
        x_nchw, w_oihw, window_strides=(1, 1), padding=((1, 1), (1, 1)),
        dimension_numbers=("NCHW", "OIHW", "NCHW"))
    return y + b.reshape(1, -1, 1, 1)


def _ref_bn_relu(x_nchw, gamma, beta, eps=1e-5):
    mean = jnp.mean(x_nchw, axis=(0, 2, 3), keepdims=True)
    var = jnp.mean((x_nchw - mean) ** 2, axis=(0, 2, 3), keepdims=True)
    y = (x_nchw - mean) * lax.rsqrt(var + eps)
    y = y * gamma.reshape(1, -1, 1, 1) + beta.reshape(1, -1, 1, 1)
    return jnp.maximum(y, 0.0)


def double_conv_ref(x_nchw, params):
    y = _ref_bn_relu(_ref_conv(x_nchw, params["w1"], params["b1"]),
                     params["g1"], params["be1"])
    y = _ref_bn_relu(_ref_conv(y, params["w2"], params["b2"]),
                     params["g2"], params["be2"])
    return y


# ----------------------------------------------------------------------------
# Main
# ----------------------------------------------------------------------------
if __name__ == "__main__":
    N, Cin, H, W = 2, 4, 16, 16
    Cout = 8

    key = jax.random.PRNGKey(0)
    kx, k1, kb1, k2, kb2 = jax.random.split(key, 5)

    x = jax.random.normal(kx, (N, Cin, H, W), dtype=jnp.float32)

    params = {
        "w1": 0.1 * jax.random.normal(k1, (3, 3, Cin, Cout), dtype=jnp.float32),
        "b1": 0.1 * jax.random.normal(kb1, (Cout,), dtype=jnp.float32),
        "g1": jnp.ones((Cout,), jnp.float32),
        "be1": jnp.zeros((Cout,), jnp.float32),
        "w2": 0.1 * jax.random.normal(k2, (3, 3, Cout, Cout), dtype=jnp.float32),
        "b2": 0.1 * jax.random.normal(kb2, (Cout,), dtype=jnp.float32),
        "g2": jnp.ones((Cout,), jnp.float32),
        "be2": jnp.zeros((Cout,), jnp.float32),
    }

    out = jax.block_until_ready(jax.jit(double_conv_pallas)(x, params))
    ref = jax.block_until_ready(double_conv_ref(x, params))

    assert out.shape == (N, Cout, H, W), out.shape
    max_err = float(jnp.max(jnp.abs(out - ref)))
    assert jnp.allclose(out, ref, rtol=1e-3, atol=1e-3), max_err

    print("KERNEL_OK")
</pallas_src>

<mosaic_0001>
module attributes {stable_mosaic.version = 11 : i64} {
  func.func @_conv_stats_kernel(%arg0: i32, %arg1: memref<1x16x16x4xf32, #tpu.memory_space<vmem>>, %arg2: memref<1152x128xf32, #tpu.memory_space<vmem>>, %arg3: memref<1x16x16x128xf32, #tpu.memory_space<vmem>>, %arg4: memref<1x128xf32, #tpu.memory_space<vmem>>, %arg5: memref<1x128xf32, #tpu.memory_space<vmem>>, %arg6: memref<18x18x128xf32, #tpu.memory_space<vmem>>) attributes {dimension_semantics = [#tpu.dimension_semantics<arbitrary>], iteration_bounds = array<i64: 2>, scalar_prefetch = 0 : i64, scratch_operands = 1 : i64, tpu.core_type = #tpu.core_type<tc>, window_params = [{transform_indices = @transform_0, window_bounds = array<i64: 1, 16, 16, 4>}, {pipeline_mode = #tpu.pipeline_mode<synchronous>, transform_indices = @transform_1, window_bounds = array<i64: 1152, 128>}, {transform_indices = @transform_2, window_bounds = array<i64: 1, 16, 16, 128>}, {pipeline_mode = #tpu.pipeline_mode<synchronous>, transform_indices = @transform_3, window_bounds = array<i64: 1, 128>}, {pipeline_mode = #tpu.pipeline_mode<synchronous>, transform_indices = @transform_4, window_bounds = array<i64: 1, 128>}]} {
    %c0_i32 = arith.constant 0 : i32
    %0 = arith.cmpi eq, %arg0, %c0_i32 : i32
    %1 = arith.extui %0 : i1 to i32
    %c0_i32_0 = arith.constant 0 : i32
    %2 = arith.cmpi ne, %1, %c0_i32_0 : i32
    scf.if %2 {
      %cst_48 = arith.constant 0.000000e+00 : f32
      %40 = vector.broadcast %cst_48 : f32 to vector<18x18x128xf32>
      %c0_49 = arith.constant 0 : index
      %c0_50 = arith.constant 0 : index
      %c0_51 = arith.constant 0 : index
      %41 = vector.load %arg6[%c0_49, %c0_50, %c0_51] : memref<18x18x128xf32, #tpu.memory_space<vmem>>, vector<18x18x128xf32>
      tpu.vector_store %arg6[%c0_49, %c0_50, %c0_51], %40 {strides = array<i32>} : memref<18x18x128xf32, #tpu.memory_space<vmem>>, vector<18x18x128xf32>,
      %cst_52 = arith.constant 0.000000e+00 : f32
      %42 = vector.broadcast %cst_52 : f32 to vector<1x128xf32>
      %c0_53 = arith.constant 0 : index
      %c0_54 = arith.constant 0 : index
      %43 = vector.load %arg4[%c0_53, %c0_54] : memref<1x128xf32, #tpu.memory_space<vmem>>, vector<1x128xf32>
      tpu.vector_store %arg4[%c0_53, %c0_54], %42 {strides = array<i32>} : memref<1x128xf32, #tpu.memory_space<vmem>>, vector<1x128xf32>,
      %cst_55 = arith.constant 0.000000e+00 : f32
      %44 = vector.broadcast %cst_55 : f32 to vector<1x128xf32>
      %c0_56 = arith.constant 0 : index
      %c0_57 = arith.constant 0 : index
      %45 = vector.load %arg5[%c0_56, %c0_57] : memref<1x128xf32, #tpu.memory_space<vmem>>, vector<1x128xf32>
      tpu.vector_store %arg5[%c0_56, %c0_57], %44 {strides = array<i32>} : memref<1x128xf32, #tpu.memory_space<vmem>>, vector<1x128xf32>,
    } else {
    }
    %c0 = arith.constant 0 : index
    %c0_1 = arith.constant 0 : index
    %c0_2 = arith.constant 0 : index
    %c0_3 = arith.constant 0 : index
    %3 = vector.load %arg1[%c0, %c0_1, %c0_2, %c0_3] : memref<1x16x16x4xf32, #tpu.memory_space<vmem>>, vector<1x16x16x4xf32>
    %4 = vector.shape_cast %3 : vector<1x16x16x4xf32> to vector<16x16x4xf32>
    %c1 = arith.constant 1 : index
    %c1_4 = arith.constant 1 : index
    %c0_5 = arith.constant 0 : index
    %5 = vector.load %arg6[%c1, %c1_4, %c0_5] : memref<18x18x128xf32, #tpu.memory_space<vmem>>, vector<16x16x4xf32>
    tpu.vector_store %arg6[%c1, %c1_4, %c0_5], %4 {strides = array<i32>} : memref<18x18x128xf32, #tpu.memory_space<vmem>>, vector<16x16x4xf32>,
    %c0_6 = arith.constant 0 : index
    %c0_7 = arith.constant 0 : index
    %c0_8 = arith.constant 0 : index
    %6 = vector.load %arg6[%c0_6, %c0_7, %c0_8] : memref<18x18x128xf32, #tpu.memory_space<vmem>>, vector<16x16x128xf32>
    %7 = vector.shape_cast %6 : vector<16x16x128xf32> to vector<256x128xf32>
    %c0_9 = arith.constant 0 : index
    %c1_10 = arith.constant 1 : index
    %c0_11 = arith.constant 0 : index
    %8 = vector.load %arg6[%c0_9, %c1_10, %c0_11] : memref<18x18x128xf32, #tpu.memory_space<vmem>>, vector<16x16x128xf32>
    %9 = vector.shape_cast %8 : vector<16x16x128xf32> to vector<256x128xf32>
    %c0_12 = arith.constant 0 : index
    %c2 = arith.constant 2 : index
    %c0_13 = arith.constant 0 : index
    %10 = vector.load %arg6[%c0_12, %c2, %c0_13] : memref<18x18x128xf32, #tpu.memory_space<vmem>>, vector<16x16x128xf32>
    %11 = vector.shape_cast %10 : vector<16x16x128xf32> to vector<256x128xf32>
    %c1_14 = arith.constant 1 : index
    %c0_15 = arith.constant 0 : index
    %c0_16 = arith.constant 0 : index
    %12 = vector.load %arg6[%c1_14, %c0_15, %c0_16] : memref<18x18x128xf32, #tpu.memory_space<vmem>>, vector<16x16x128xf32>
    %13 = vector.shape_cast %12 : vector<16x16x128xf32> to vector<256x128xf32>
    %c1_17 = arith.constant 1 : index
    %c1_18 = arith.constant 1 : index
    %c0_19 = arith.constant 0 : index
    %14 = vector.load %arg6[%c1_17, %c1_18, %c0_19] : memref<18x18x128xf32, #tpu.memory_space<vmem>>, vector<16x16x128xf32>
    %15 = vector.shape_cast %14 : vector<16x16x128xf32> to vector<256x128xf32>
    %c1_20 = arith.constant 1 : index
    %c2_21 = arith.constant 2 : index
    %c0_22 = arith.constant 0 : index
    %16 = vector.load %arg6[%c1_20, %c2_21, %c0_22] : memref<18x18x128xf32, #tpu.memory_space<vmem>>, vector<16x16x128xf32>
    %17 = vector.shape_cast %16 : vector<16x16x128xf32> to vector<256x128xf32>
    %c2_23 = arith.constant 2 : index
    %c0_24 = arith.constant 0 : index
    %c0_25 = arith.constant 0 : index
    %18 = vector.load %arg6[%c2_23, %c0_24, %c0_25] : memref<18x18x128xf32, #tpu.memory_space<vmem>>, vector<16x16x128xf32>
    %19 = vector.shape_cast %18 : vector<16x16x128xf32> to vector<256x128xf32>
    %c2_26 = arith.constant 2 : index
    %c1_27 = arith.constant 1 : index
    %c0_28 = arith.constant 0 : index
    %20 = vector.load %arg6[%c2_26, %c1_27, %c0_28] : memref<18x18x128xf32, #tpu.memory_space<vmem>>, vector<16x16x128xf32>
    %21 = vector.shape_cast %20 : vector<16x16x128xf32> to vector<256x128xf32>
    %c2_29 = arith.constant 2 : index
    %c2_30 = arith.constant 2 : index
    %c0_31 = arith.constant 0 : index
    %22 = vector.load %arg6[%c2_29, %c2_30, %c0_31] : memref<18x18x128xf32, #tpu.memory_space<vmem>>, vector<16x16x128xf32>
    %23 = vector.shape_cast %22 : vector<16x16x128xf32> to vector<256x128xf32>
    %24 = tpu.concatenate %7, %9, %11, %13, %15, %17, %19, %21, %23 in 1 : vector<256x128xf32>, vector<256x128xf32>, vector<256x128xf32>, vector<256x128xf32>, vector<256x128xf32>, vector<256x128xf32>, vector<256x128xf32>, vector<256x128xf32>, vector<256x128xf32> -> vector<256x1152xf32>
    %c0_32 = arith.constant 0 : index
    %c0_33 = arith.constant 0 : index
    %25 = vector.load %arg2[%c0_32, %c0_33] : memref<1152x128xf32, #tpu.memory_space<vmem>>, vector<1152x128xf32>
    %cst = arith.constant dense<0.000000e+00> : vector<256x128xf32>
    %26 = tpu.matmul %24, %25, %cst {dimension_numbers = #tpu.dot_dimension_numbers<[1], [0], [0], [1], [0, 0, 1, 1], [], []>} : vector<256x1152xf32>, vector<1152x128xf32>, vector<256x128xf32> -> vector<256x128xf32>
    %27 = vector.shape_cast %26 : vector<256x128xf32> to vector<1x16x16x128xf32>
    %c0_34 = arith.constant 0 : index
    %c0_35 = arith.constant 0 : index
    %c0_36 = arith.constant 0 : index
    %c0_37 = arith.constant 0 : index
    %28 = vector.load %arg3[%c0_34, %c0_35, %c0_36, %c0_37] : memref<1x16x16x128xf32, #tpu.memory_space<vmem>>, vector<1x16x16x128xf32>
    tpu.vector_store %arg3[%c0_34, %c0_35, %c0_36, %c0_37], %27 {strides = array<i32>} : memref<1x16x16x128xf32, #tpu.memory_space<vmem>>, vector<1x16x16x128xf32>,
    %c0_38 = arith.constant 0 : index
    %c0_39 = arith.constant 0 : index
    %29 = vector.load %arg4[%c0_38, %c0_39] : memref<1x128xf32, #tpu.memory_space<vmem>>, vector<1x128xf32>
    %cst_40 = arith.constant dense<0.000000e+00> : vector<128xf32>
    %30 = vector.multi_reduction <add>, %26, %cst_40 [0] : vector<256x128xf32> to vector<128xf32>
    %31 = vector.shape_cast %30 : vector<128xf32> to vector<1x128xf32>
    %32 = arith.addf %29, %31 : vector<1x128xf32>
    %c0_41 = arith.constant 0 : index
    %c0_42 = arith.constant 0 : index
    %33 = vector.load %arg4[%c0_41, %c0_42] : memref<1x128xf32, #tpu.memory_space<vmem>>, vector<1x128xf32>
    tpu.vector_store %arg4[%c0_41, %c0_42], %32 {strides = array<i32>} : memref<1x128xf32, #tpu.memory_space<vmem>>, vector<1x128xf32>,
    %c0_43 = arith.constant 0 : index
    %c0_44 = arith.constant 0 : index
    %34 = vector.load %arg5[%c0_43, %c0_44] : memref<1x128xf32, #tpu.memory_space<vmem>>, vector<1x128xf32>
    %35 = arith.mulf %26, %26 : vector<256x128xf32>
    %cst_45 = arith.constant dense<0.000000e+00> : vector<128xf32>
    %36 = vector.multi_reduction <add>, %35, %cst_45 [0] : vector<256x128xf32> to vector<128xf32>
    %37 = vector.shape_cast %36 : vector<128xf32> to vector<1x128xf32>
    %38 = arith.addf %34, %37 : vector<1x128xf32>
    %c0_46 = arith.constant 0 : index
    %c0_47 = arith.constant 0 : index
    %39 = vector.load %arg5[%c0_46, %c0_47] : memref<1x128xf32, #tpu.memory_space<vmem>>, vector<1x128xf32>
    tpu.vector_store %arg5[%c0_46, %c0_47], %38 {strides = array<i32>} : memref<1x128xf32, #tpu.memory_space<vmem>>, vector<1x128xf32>,
    return
  }
  func.func @transform_0(%arg0: i32) -> (i32, i32, i32, i32) {
    %c0_i32 = arith.constant 0 : i32
    %c0_i32_0 = arith.constant 0 : i32
    %c0_i32_1 = arith.constant 0 : i32
    %c0_i32_2 = arith.constant 0 : i32
    return %arg0, %c0_i32, %c0_i32_0, %c0_i32_1 : i32, i32, i32, i32
  }
  func.func @transform_1(%arg0: i32) -> (i32, i32) {
    %c0_i32 = arith.constant 0 : i32
    %c0_i32_0 = arith.constant 0 : i32
    %c0_i32_1 = arith.constant 0 : i32
    return %c0_i32, %c0_i32_0 : i32, i32
  }
  func.func @transform_2(%arg0: i32) -> (i32, i32, i32, i32) {
    %c0_i32 = arith.constant 0 : i32
    %c0_i32_0 = arith.constant 0 : i32
    %c0_i32_1 = arith.constant 0 : i32
    %c0_i32_2 = arith.constant 0 : i32
    return %arg0, %c0_i32, %c0_i32_0, %c0_i32_1 : i32, i32, i32, i32
  }
  func.func @transform_3(%arg0: i32) -> (i32, i32) {
    %c0_i32 = arith.constant 0 : i32
    %c0_i32_0 = arith.constant 0 : i32
    %c0_i32_1 = arith.constant 0 : i32
    return %c0_i32, %c0_i32_0 : i32, i32
  }
  func.func @transform_4(%arg0: i32) -> (i32, i32) {
    %c0_i32 = arith.constant 0 : i32
    %c0_i32_0 = arith.constant 0 : i32
    %c0_i32_1 = arith.constant 0 : i32
    return %c0_i32, %c0_i32_0 : i32, i32
  }
}

module attributes {stable_mosaic.version = 11 : i64} {
  func.func @_bnrelu_conv_stats_kernel(%arg0: i32, %arg1: memref<1x16x16x128xf32, #tpu.memory_space<vmem>>, %arg2: memref<1x128xf32, #tpu.memory_space<vmem>>, %arg3: memref<1x128xf32, #tpu.memory_space<vmem>>, %arg4: memref<1152x128xf32, #tpu.memory_space<vmem>>, %arg5: memref<1x16x16x128xf32, #tpu.memory_space<vmem>>, %arg6: memref<1x128xf32, #tpu.memory_space<vmem>>, %arg7: memref<1x128xf32, #tpu.memory_space<vmem>>, %arg8: memref<18x18x128xf32, #tpu.memory_space<vmem>>) attributes {dimension_semantics = [#tpu.dimension_semantics<arbitrary>], iteration_bounds = array<i64: 2>, scalar_prefetch = 0 : i64, scratch_operands = 1 : i64, tpu.core_type = #tpu.core_type<tc>, window_params = [{transform_indices = @transform_0, window_bounds = array<i64: 1, 16, 16, 128>}, {pipeline_mode = #tpu.pipeline_mode<synchronous>, transform_indices = @transform_1, window_bounds = array<i64: 1, 128>}, {pipeline_mode = #tpu.pipeline_mode<synchronous>, transform_indices = @transform_2, window_bounds = array<i64: 1, 128>}, {pipeline_mode = #tpu.pipeline_mode<synchronous>, transform_indices = @transform_3, window_bounds = array<i64: 1152, 128>}, {transform_indices = @transform_4, window_bounds = array<i64: 1, 16, 16, 128>}, {pipeline_mode = #tpu.pipeline_mode<synchronous>, transform_indices = @transform_5, window_bounds = array<i64: 1, 128>}, {pipeline_mode = #tpu.pipeline_mode<synchronous>, transform_indices = @transform_6, window_bounds = array<i64: 1, 128>}]} {
    %c0_i32 = arith.constant 0 : i32
    %0 = arith.cmpi eq, %arg0, %c0_i32 : i32
    %1 = arith.extui %0 : i1 to i32
    %c0_i32_0 = arith.constant 0 : i32
    %2 = arith.cmpi ne, %1, %c0_i32_0 : i32
    scf.if %2 {
      %cst_53 = arith.constant 0.000000e+00 : f32
      %50 = vector.broadcast %cst_53 : f32 to vector<18x18x128xf32>
      %c0_54 = arith.constant 0 : index
      %c0_55 = arith.constant 0 : index
      %c0_56 = arith.constant 0 : index
      %51 = vector.load %arg8[%c0_54, %c0_55, %c0_56] : memref<18x18x128xf32, #tpu.memory_space<vmem>>, vector<18x18x128xf32>
      tpu.vector_store %arg8[%c0_54, %c0_55, %c0_56], %50 {strides = array<i32>} : memref<18x18x128xf32, #tpu.memory_space<vmem>>, vector<18x18x128xf32>,
      %cst_57 = arith.constant 0.000000e+00 : f32
      %52 = vector.broadcast %cst_57 : f32 to vector<1x128xf32>
      %c0_58 = arith.constant 0 : index
      %c0_59 = arith.constant 0 : index
      %53 = vector.load %arg6[%c0_58, %c0_59] : memref<1x128xf32, #tpu.memory_space<vmem>>, vector<1x128xf32>
      tpu.vector_store %arg6[%c0_58, %c0_59], %52 {strides = array<i32>} : memref<1x128xf32, #tpu.memory_space<vmem>>, vector<1x128xf32>,
      %cst_60 = arith.constant 0.000000e+00 : f32
      %54 = vector.broadcast %cst_60 : f32 to vector<1x128xf32>
      %c0_61 = arith.constant 0 : index
      %c0_62 = arith.constant 0 : index
      %55 = vector.load %arg7[%c0_61, %c0_62] : memref<1x128xf32, #tpu.memory_space<vmem>>, vector<1x128xf32>
      tpu.vector_store %arg7[%c0_61, %c0_62], %54 {strides = array<i32>} : memref<1x128xf32, #tpu.memory_space<vmem>>, vector<1x128xf32>,
    } else {
    }
    %c0 = arith.constant 0 : index
    %c0_1 = arith.constant 0 : index
    %c0_2 = arith.constant 0 : index
    %c0_3 = arith.constant 0 : index
    %3 = vector.load %arg1[%c0, %c0_1, %c0_2, %c0_3] : memref<1x16x16x128xf32, #tpu.memory_space<vmem>>, vector<1x16x16x128xf32>
    %4 = vector.shape_cast %3 : vector<1x16x16x128xf32> to vector<16x16x128xf32>
    %c0_4 = arith.constant 0 : index
    %c0_5 = arith.constant 0 : index
    %5 = vector.load %arg2[%c0_4, %c0_5] : memref<1x128xf32, #tpu.memory_space<vmem>>, vector<1x128xf32>
    %6 = vector.shape_cast %5 : vector<1x128xf32> to vector<1x1x128xf32>
    %7 = vector.broadcast %6 : vector<1x1x128xf32> to vector<16x16x128xf32>
    %8 = arith.mulf %4, %7 : vector<16x16x128xf32>
    %c0_6 = arith.constant 0 : index
    %c0_7 = arith.constant 0 : index
    %9 = vector.load %arg3[%c0_6, %c0_7] : memref<1x128xf32, #tpu.memory_space<vmem>>, vector<1x128xf32>
    %10 = vector.shape_cast %9 : vector<1x128xf32> to vector<1x1x128xf32>
    %11 = vector.broadcast %10 : vector<1x1x128xf32> to vector<16x16x128xf32>
    %12 = arith.addf %8, %11 : vector<16x16x128xf32>
    %cst = arith.constant 0.000000e+00 : f32
    %13 = vector.broadcast %cst : f32 to vector<16x16x128xf32>
    %14 = arith.maximumf %12, %13 : vector<16x16x128xf32>
    %c1 = arith.constant 1 : index
    %c1_8 = arith.constant 1 : index
    %c0_9 = arith.constant 0 : index
    %15 = vector.load %arg8[%c1, %c1_8, %c0_9] : memref<18x18x128xf32, #tpu.memory_space<vmem>>, vector<16x16x128xf32>
    tpu.vector_store %arg8[%c1, %c1_8, %c0_9], %14 {strides = array<i32>} : memref<18x18x128xf32, #tpu.memory_space<vmem>>, vector<16x16x128xf32>,
    %c0_10 = arith.constant 0 : index
    %c0_11 = arith.constant 0 : index
    %c0_12 = arith.constant 0 : index
    %16 = vector.load %arg8[%c0_10, %c0_11, %c0_12] : memref<18x18x128xf32, #tpu.memory_space<vmem>>, vector<16x16x128xf32>
    %17 = vector.shape_cast %16 : vector<16x16x128xf32> to vector<256x128xf32>
    %c0_13 = arith.constant 0 : index
    %c1_14 = arith.constant 1 : index
    %c0_15 = arith.constant 0 : index
    %18 = vector.load %arg8[%c0_13, %c1_14, %c0_15] : memref<18x18x128xf32, #tpu.memory_space<vmem>>, vector<16x16x128xf32>
    %19 = vector.shape_cast %18 : vector<16x16x128xf32> to vector<256x128xf32>
    %c0_16 = arith.constant 0 : index
    %c2 = arith.constant 2 : index
    %c0_17 = arith.constant 0 : index
    %20 = vector.load %arg8[%c0_16, %c2, %c0_17] : memref<18x18x128xf32, #tpu.memory_space<vmem>>, vector<16x16x128xf32>
    %21 = vector.shape_cast %20 : vector<16x16x128xf32> to vector<256x128xf32>
    %c1_18 = arith.constant 1 : index
    %c0_19 = arith.constant 0 : index
    %c0_20 = arith.constant 0 : index
    %22 = vector.load %arg8[%c1_18, %c0_19, %c0_20] : memref<18x18x128xf32, #tpu.memory_space<vmem>>, vector<16x16x128xf32>
    %23 = vector.shape_cast %22 : vector<16x16x128xf32> to vector<256x128xf32>
    %c1_21 = arith.constant 1 : index
    %c1_22 = arith.constant 1 : index
    %c0_23 = arith.constant 0 : index
    %24 = vector.load %arg8[%c1_21, %c1_22, %c0_23] : memref<18x18x128xf32, #tpu.memory_space<vmem>>, vector<16x16x128xf32>
    %25 = vector.shape_cast %24 : vector<16x16x128xf32> to vector<256x128xf32>
    %c1_24 = arith.constant 1 : index
    %c2_25 = arith.constant 2 : index
    %c0_26 = arith.constant 0 : index
    %26 = vector.load %arg8[%c1_24, %c2_25, %c0_26] : memref<18x18x128xf32, #tpu.memory_space<vmem>>, vector<16x16x128xf32>
    %27 = vector.shape_cast %26 : vector<16x16x128xf32> to vector<256x128xf32>
    %c2_27 = arith.constant 2 : index
    %c0_28 = arith.constant 0 : index
    %c0_29 = arith.constant 0 : index
    %28 = vector.load %arg8[%c2_27, %c0_28, %c0_29] : memref<18x18x128xf32, #tpu.memory_space<vmem>>, vector<16x16x128xf32>
    %29 = vector.shape_cast %28 : vector<16x16x128xf32> to vector<256x128xf32>
    %c2_30 = arith.constant 2 : index
    %c1_31 = arith.constant 1 : index
    %c0_32 = arith.constant 0 : index
    %30 = vector.load %arg8[%c2_30, %c1_31, %c0_32] : memref<18x18x128xf32, #tpu.memory_space<vmem>>, vector<16x16x128xf32>
    %31 = vector.shape_cast %30 : vector<16x16x128xf32> to vector<256x128xf32>
    %c2_33 = arith.constant 2 : index
    %c2_34 = arith.constant 2 : index
    %c0_35 = arith.constant 0 : index
    %32 = vector.load %arg8[%c2_33, %c2_34, %c0_35] : memref<18x18x128xf32, #tpu.memory_space<vmem>>, vector<16x16x128xf32>
    %33 = vector.shape_cast %32 : vector<16x16x128xf32> to vector<256x128xf32>
    %34 = tpu.concatenate %17, %19, %21, %23, %25, %27, %29, %31, %33 in 1 : vector<256x128xf32>, vector<256x128xf32>, vector<256x128xf32>, vector<256x128xf32>, vector<256x128xf32>, vector<256x128xf32>, vector<256x128xf32>, vector<256x128xf32>, vector<256x128xf32> -> vector<256x1152xf32>
    %c0_36 = arith.constant 0 : index
    %c0_37 = arith.constant 0 : index
    %35 = vector.load %arg4[%c0_36, %c0_37] : memref<1152x128xf32, #tpu.memory_space<vmem>>, vector<1152x128xf32>
    %cst_38 = arith.constant dense<0.000000e+00> : vector<256x128xf32>
    %36 = tpu.matmul %34, %35, %cst_38 {dimension_numbers = #tpu.dot_dimension_numbers<[1], [0], [0], [1], [0, 0, 1, 1], [], []>} : vector<256x1152xf32>, vector<1152x128xf32>, vector<256x128xf32> -> vector<256x128xf32>
    %37 = vector.shape_cast %36 : vector<256x128xf32> to vector<1x16x16x128xf32>
    %c0_39 = arith.constant 0 : index
    %c0_40 = arith.constant 0 : index
    %c0_41 = arith.constant 0 : index
    %c0_42 = arith.constant 0 : index
    %38 = vector.load %arg5[%c0_39, %c0_40, %c0_41, %c0_42] : memref<1x16x16x128xf32, #tpu.memory_space<vmem>>, vector<1x16x16x128xf32>
    tpu.vector_store %arg5[%c0_39, %c0_40, %c0_41, %c0_42], %37 {strides = array<i32>} : memref<1x16x16x128xf32, #tpu.memory_space<vmem>>, vector<1x16x16x128xf32>,
    %c0_43 = arith.constant 0 : index
    %c0_44 = arith.constant 0 : index
    %39 = vector.load %arg6[%c0_43, %c0_44] : memref<1x128xf32, #tpu.memory_space<vmem>>, vector<1x128xf32>
    %cst_45 = arith.constant dense<0.000000e+00> : vector<128xf32>
    %40 = vector.multi_reduction <add>, %36, %cst_45 [0] : vector<256x128xf32> to vector<128xf32>
    %41 = vector.shape_cast %40 : vector<128xf32> to vector<1x128xf32>
    %42 = arith.addf %39, %41 : vector<1x128xf32>
    %c0_46 = arith.constant 0 : index
    %c0_47 = arith.constant 0 : index
    %43 = vector.load %arg6[%c0_46, %c0_47] : memref<1x128xf32, #tpu.memory_space<vmem>>, vector<1x128xf32>
    tpu.vector_store %arg6[%c0_46, %c0_47], %42 {strides = array<i32>} : memref<1x128xf32, #tpu.memory_space<vmem>>, vector<1x128xf32>,
    %c0_48 = arith.constant 0 : index
    %c0_49 = arith.constant 0 : index
    %44 = vector.load %arg7[%c0_48, %c0_49] : memref<1x128xf32, #tpu.memory_space<vmem>>, vector<1x128xf32>
    %45 = arith.mulf %36, %36 : vector<256x128xf32>
    %cst_50 = arith.constant dense<0.000000e+00> : vector<128xf32>
    %46 = vector.multi_reduction <add>, %45, %cst_50 [0] : vector<256x128xf32> to vector<128xf32>
    %47 = vector.shape_cast %46 : vector<128xf32> to vector<1x128xf32>
    %48 = arith.addf %44, %47 : vector<1x128xf32>
    %c0_51 = arith.constant 0 : index
    %c0_52 = arith.constant 0 : index
    %49 = vector.load %arg7[%c0_51, %c0_52] : memref<1x128xf32, #tpu.memory_space<vmem>>, vector<1x128xf32>
    tpu.vector_store %arg7[%c0_51, %c0_52], %48 {strides = array<i32>} : memref<1x128xf32, #tpu.memory_space<vmem>>, vector<1x128xf32>,
    return
  }
  func.func @transform_0(%arg0: i32) -> (i32, i32, i32, i32) {
    %c0_i32 = arith.constant 0 : i32
    %c0_i32_0 = arith.constant 0 : i32
    %c0_i32_1 = arith.constant 0 : i32
    %c0_i32_2 = arith.constant 0 : i32
    return %arg0, %c0_i32, %c0_i32_0, %c0_i32_1 : i32, i32, i32, i32
  }
  func.func @transform_1(%arg0: i32) -> (i32, i32) {
    %c0_i32 = arith.constant 0 : i32
    %c0_i32_0 = arith.constant 0 : i32
    %c0_i32_1 = arith.constant 0 : i32
    return %c0_i32, %c0_i32_0 : i32, i32
  }
  func.func @transform_2(%arg0: i32) -> (i32, i32) {
    %c0_i32 = arith.constant 0 : i32
    %c0_i32_0 = arith.constant 0 : i32
    %c0_i32_1 = arith.constant 0 : i32
    return %c0_i32, %c0_i32_0 : i32, i32
  }
  func.func @transform_3(%arg0: i32) -> (i32, i32) {
    %c0_i32 = arith.constant 0 : i32
    %c0_i32_0 = arith.constant 0 : i32
    %c0_i32_1 = arith.constant 0 : i32
    return %c0_i32, %c0_i32_0 : i32, i32
  }
  func.func @transform_4(%arg0: i32) -> (i32, i32, i32, i32) {
    %c0_i32 = arith.constant 0 : i32
    %c0_i32_0 = arith.constant 0 : i32
    %c0_i32_1 = arith.constant 0 : i32
    %c0_i32_2 = arith.constant 0 : i32
    return %arg0, %c0_i32, %c0_i32_0, %c0_i32_1 : i32, i32, i32, i32
  }
  func.func @transform_5(%arg0: i32) -> (i32, i32) {
    %c0_i32 = arith.constant 0 : i32
    %c0_i32_0 = arith.constant 0 : i32
    %c0_i32_1 = arith.constant 0 : i32
    return %c0_i32, %c0_i32_0 : i32, i32
  }
  func.func @transform_6(%arg0: i32) -> (i32, i32) {
    %c0_i32 = arith.constant 0 : i32
    %c0_i32_0 = arith.constant 0 : i32
    %c0_i32_1 = arith.constant 0 : i32
    return %c0_i32, %c0_i32_0 : i32, i32
  }
}

module attributes {stable_mosaic.version = 11 : i64} {
  func.func @_bn_relu_kernel(%arg0: i32, %arg1: memref<1x16x16x128xf32, #tpu.memory_space<vmem>>, %arg2: memref<1x128xf32, #tpu.memory_space<vmem>>, %arg3: memref<1x128xf32, #tpu.memory_space<vmem>>, %arg4: memref<1x16x16x128xf32, #tpu.memory_space<vmem>>) attributes {dimension_semantics = [#tpu.dimension_semantics<parallel>], iteration_bounds = array<i64: 2>, scalar_prefetch = 0 : i64, scratch_operands = 0 : i64, tpu.core_type = #tpu.core_type<tc>, window_params = [{transform_indices = @transform_0, window_bounds = array<i64: 1, 16, 16, 128>}, {pipeline_mode = #tpu.pipeline_mode<synchronous>, transform_indices = @transform_1, window_bounds = array<i64: 1, 128>}, {pipeline_mode = #tpu.pipeline_mode<synchronous>, transform_indices = @transform_2, window_bounds = array<i64: 1, 128>}, {transform_indices = @transform_3, window_bounds = array<i64: 1, 16, 16, 128>}]} {
    %c0 = arith.constant 0 : index
    %c0_0 = arith.constant 0 : index
    %c0_1 = arith.constant 0 : index
    %c0_2 = arith.constant 0 : index
    %0 = vector.load %arg1[%c0, %c0_0, %c0_1, %c0_2] : memref<1x16x16x128xf32, #tpu.memory_space<vmem>>, vector<1x16x16x128xf32>
    %c0_3 = arith.constant 0 : index
    %c0_4 = arith.constant 0 : index
    %1 = vector.load %arg2[%c0_3, %c0_4] : memref<1x128xf32, #tpu.memory_space<vmem>>, vector<1x128xf32>
    %2 = vector.shape_cast %1 : vector<1x128xf32> to vector<1x1x1x128xf32>
    %3 = vector.broadcast %2 : vector<1x1x1x128xf32> to vector<1x16x16x128xf32>
    %4 = arith.mulf %0, %3 : vector<1x16x16x128xf32>
    %c0_5 = arith.constant 0 : index
    %c0_6 = arith.constant 0 : index
    %5 = vector.load %arg3[%c0_5, %c0_6] : memref<1x128xf32, #tpu.memory_space<vmem>>, vector<1x128xf32>
    %6 = vector.shape_cast %5 : vector<1x128xf32> to vector<1x1x1x128xf32>
    %7 = vector.broadcast %6 : vector<1x1x1x128xf32> to vector<1x16x16x128xf32>
    %8 = arith.addf %4, %7 : vector<1x16x16x128xf32>
    %cst = arith.constant 0.000000e+00 : f32
    %9 = vector.broadcast %cst : f32 to vector<1x16x16x128xf32>
    %10 = arith.maximumf %8, %9 : vector<1x16x16x128xf32>
    %c0_7 = arith.constant 0 : index
    %c0_8 = arith.constant 0 : index
    %c0_9 = arith.constant 0 : index
    %c0_10 = arith.constant 0 : index
    %11 = vector.load %arg4[%c0_7, %c0_8, %c0_9, %c0_10] : memref<1x16x16x128xf32, #tpu.memory_space<vmem>>, vector<1x16x16x128xf32>
    tpu.vector_store %arg4[%c0_7, %c0_8, %c0_9, %c0_10], %10 {strides = array<i32>} : memref<1x16x16x128xf32, #tpu.memory_space<vmem>>, vector<1x16x16x128xf32>,
    return
  }
  func.func @transform_0(%arg0: i32) -> (i32, i32, i32, i32) {
    %c0_i32 = arith.constant 0 : i32
    %c0_i32_0 = arith.constant 0 : i32
    %c0_i32_1 = arith.constant 0 : i32
    %c0_i32_2 = arith.constant 0 : i32
    return %arg0, %c0_i32, %c0_i32_0, %c0_i32_1 : i32, i32, i32, i32
  }
  func.func @transform_1(%arg0: i32) -> (i32, i32) {
    %c0_i32 = arith.constant 0 : i32
    %c0_i32_0 = arith.constant 0 : i32
    %c0_i32_1 = arith.constant 0 : i32
    return %c0_i32, %c0_i32_0 : i32, i32
  }
  func.func @transform_2(%arg0: i32) -> (i32, i32) {
    %c0_i32 = arith.constant 0 : i32
    %c0_i32_0 = arith.constant 0 : i32
    %c0_i32_1 = arith.constant 0 : i32
    return %c0_i32, %c0_i32_0 : i32, i32
  }
  func.func @transform_3(%arg0: i32) -> (i32, i32, i32, i32) {
    %c0_i32 = arith.constant 0 : i32
    %c0_i32_0 = arith.constant 0 : i32
    %c0_i32_1 = arith.constant 0 : i32
    %c0_i32_2 = arith.constant 0 : i32
    return %arg0, %c0_i32, %c0_i32_0, %c0_i32_1 : i32, i32, i32, i32
  }
}

</mosaic_0001>

<llo_original>
// kernel: double_conv_pallas.5
$region0: #{double_conv_pallas.5}
  #allocation0 [shape = 'u32[]', space=smem, size = 0x4, offset = 0x4, fixed_abs, tag = 'smem constant byte address 0x4 - core index']
  #allocation1 [shape = 'u32[144,128]{1,0:T(1,128)}', space=vmem, size = 0x12000, scoped, tag = 'internal scratch']
  %s0 = inlined_call_operand.vmem [shape: f32[2,16,16,128], index: 0, kind: input, shape index: {}]
  %s1 = inlined_call_operand.vmem [shape: f32[1,128], index: 1, kind: input, shape index: {}]
  %s2 = inlined_call_operand.vmem [shape: f32[1,128], index: 2, kind: input, shape index: {}]
  %s3 = inlined_call_operand.vmem [shape: f32[2,16,16,128], index: 3, kind: output, shape index: {}]
  %s4 = sld [smem:[#allocation0]]
  $region45: #{double_conv_pallas.5} parent=0
    _
  %s6 = ssub.s32 1, %s4
  %s7 = scalar_select 0, %s6, %s4
  loop: start=0, step=1, limit=4
  $region2: #{double_conv_pallas.5} parent=0 // loop_pre_header
    _
  $region3: #{double_conv_pallas.5} parent=0 // loop_header
    %s9 = sphi 0, %s13
    %p10 = scmp.ge.s32.totalorder %s9, 4
    %s19 = sphi 0, %s21
    %s22 = sphi 0, %s19
    %s23 = sphi 0, %s22
    %s39 = sphi 0, %s23
    %s43 = sphi 0, %s43
    %s45 = sphi 0, %s43
    %s46 = sphi 0, %s45
    %s60 = sphi 0, %s46
    %s64 = sphi 0, %s64
    %s66 = sphi 0, %s64
    %s67 = sphi 0, %s66
    %s81 = sphi 0, %s67
    %s87 = sphi 0, %s89
    %s90 = sphi 0, %s87
    %s91 = sphi 0, %s90
    %s107 = sphi 0, %s91
  $region4: #{double_conv_pallas.5} parent=0 // loop_header_branch
    %12 = sbr.rel (%p10) target = $region8
  $region5: #{double_conv_pallas.5} parent=0 // loop_body
    %s14 = ssub.s32 %s9, 1
    %s15 = ssub.s32 %s9, 2
    %s16 = sadd.s32 %s9, 1
    %s17 = ssub.s32 %s9, %s16
    %p18 = scmp.eq.s32.totalorder %s17, 0
    %s20 = sadd.s32 %s19, 1
    %s21 = scalar_select %p18, %s19, %s20
    %p24 = pneg %p18
    %p25 = scmp.eq.s32.totalorder %s9, 1
    %p26 = por %p24, %p25
    %p27 = scmp.ne.s32.totalorder %s19, %s22
    %p28 = scmp.eq.s32.totalorder %s9, 0
    %p29 = por %p27, %p28
    %p30 = scmp.ne.s32.totalorder %s19, %s22
    %p31 = scmp.eq.s32.totalorder %s14, 1
    %p32 = por %p30, %p31
    %p33 = scmp.ne.s32.totalorder %s22, %s23
    %p34 = scmp.eq.s32.totalorder %s14, 0
    %p35 = por %p33, %p34
    %p36 = scmp.ne.s32.totalorder %s22, %s23
    %p37 = scmp.eq.s32.totalorder %s15, 1
    %p38 = por %p36, %p37
    %p40 = scmp.ne.s32.totalorder %s23, %s39
    %p41 = scmp.eq.s32.totalorder %s15, 0
    %p42 = por %p40, %p41
    %s44 = sadd.s32 %s43, 1
    %p47 = scmp.eq.s32.totalorder %s9, 1
    %p48 = scmp.ne.s32.totalorder %s43, %s45
    %p49 = scmp.eq.s32.totalorder %s9, 0
    %p50 = por %p48, %p49
    %p51 = scmp.ne.s32.totalorder %s43, %s45
    %p52 = scmp.eq.s32.totalorder %s14, 1
    %p53 = por %p51, %p52
    %p54 = scmp.ne.s32.totalorder %s45, %s46
    %p55 = scmp.eq.s32.totalorder %s14, 0
    %p56 = por %p54, %p55
    %p57 = scmp.ne.s32.totalorder %s45, %s46
    %p58 = scmp.eq.s32.totalorder %s15, 1
    %p59 = por %p57, %p58
    %p61 = scmp.ne.s32.totalorder %s46, %s60
    %p62 = scmp.eq.s32.totalorder %s15, 0
    %p63 = por %p61, %p62
    %s65 = sadd.s32 %s64, 1
    %p68 = scmp.eq.s32.totalorder %s9, 1
    %p69 = scmp.ne.s32.totalorder %s64, %s66
    %p70 = scmp.eq.s32.totalorder %s9, 0
    %p71 = por %p69, %p70
    %p72 = scmp.ne.s32.totalorder %s64, %s66
    %p73 = scmp.eq.s32.totalorder %s14, 1
    %p74 = por %p72, %p73
    %p75 = scmp.ne.s32.totalorder %s66, %s67
    %p76 = scmp.eq.s32.totalorder %s14, 0
    %p77 = por %p75, %p76
    %p78 = scmp.ne.s32.totalorder %s66, %s67
    %p79 = scmp.eq.s32.totalorder %s15, 1
    %p80 = por %p78, %p79
    %p82 = scmp.ne.s32.totalorder %s67, %s81
    %p83 = scmp.eq.s32.totalorder %s15, 0
    %p84 = por %p82, %p83
    %s85 = ssub.s32 %s9, %s16
    %p86 = scmp.eq.s32.totalorder %s85, 0
    %s88 = sadd.s32 %s87, 1
    %s89 = scalar_select %p86, %s87, %s88
    %p92 = pneg %p86
    %p93 = scmp.eq.s32.totalorder %s9, 1
    %p94 = por %p92, %p93
    %p95 = scmp.ne.s32.totalorder %s87, %s90
    %p96 = scmp.eq.s32.totalorder %s9, 0
    %p97 = por %p95, %p96
    %p98 = scmp.ne.s32.totalorder %s87, %s90
    %p99 = scmp.eq.s32.totalorder %s14, 1
    %p100 = por %p98, %p99
    %p101 = scmp.ne.s32.totalorder %s90, %s91
    %p102 = scmp.eq.s32.totalorder %s14, 0
    %p103 = por %p101, %p102
    %p104 = scmp.ne.s32.totalorder %s90, %s91
    %p105 = scmp.eq.s32.totalorder %s15, 1
    %p106 = por %p104, %p105
    %p108 = scmp.ne.s32.totalorder %s91, %s107
    %p109 = scmp.eq.s32.totalorder %s15, 0
    %p110 = por %p108, %p109
    %p111 = scmp.le.s32.totalorder 1, %s9
    %p112 = scmp.lt.s32.totalorder %s9, 3
    %p113 = pnand %p111, %p112
    %p114 = pneg %p113
    // Predicated region
    $region9: #{double_conv_pallas.5} parent=5 // pred_check
      _
    $region10: #{double_conv_pallas.5} parent=5 // pred_check_branch
      %116 = sbr.rel (%p113) target = $region12
    $region11: #{double_conv_pallas.5} parent=5 // pred_region
      %s117 = ssub.s32 %s9, 1
      // Predicated region
      $region13: #{double_conv_pallas.5} parent=11 // pred_check
        %p118 = pneg %p56
      $region14: #{double_conv_pallas.5} parent=11 // pred_check_branch
        %120 = sbr.rel (%p118) target = $region16
      $region15: #{double_conv_pallas.5} parent=11 // pred_region
        _
      $region16: #{double_conv_pallas.5} parent=11 // pred_fallthru
        _
      // Predicated region
      $region17: #{double_conv_pallas.5} parent=11 // pred_check
        %p121 = pneg %p77
      $region18: #{double_conv_pallas.5} parent=11 // pred_check_branch
        %123 = sbr.rel (%p121) target = $region20
      $region19: #{double_conv_pallas.5} parent=11 // pred_region
        _
      $region20: #{double_conv_pallas.5} parent=11 // pred_fallthru
        _
    $region12: #{double_conv_pallas.5} parent=5 // pred_fallthru
      _
    %p124 = scmp.lt.s32.totalorder %s9, 2
    // Predicated region
    $region21: #{double_conv_pallas.5} parent=5 // pred_check
      %p125 = pneg %p124
    $region22: #{double_conv_pallas.5} parent=5 // pred_check_branch
      %127 = sbr.rel (%p125) target = $region24
    $region23: #{double_conv_pallas.5} parent=5 // pred_region
      // Predicated region
      $region25: #{double_conv_pallas.5} parent=23 // pred_check
        %p128 = pneg %p29
      $region26: #{double_conv_pallas.5} parent=23 // pred_check_branch
        %130 = sbr.rel (%p128) target = $region28
      $region27: #{double_conv_pallas.5} parent=23 // pred_region
        %p131 = scmp.lt.s32.totalorder %s9, 1
        %s132 = scalar_select %p131, %s9, 1
        %s133 = smul.addr %s132, 32
        %s134 = smul.addr %s133, 8
        %s135 = scalar_lea.vmem %s0, %s134
      $region28: #{double_conv_pallas.5} parent=23 // pred_fallthru
        _
    $region24: #{double_conv_pallas.5} parent=5 // pred_fallthru
      _
    %p136 = scmp.le.s32.totalorder 1, %s9
    %p137 = scmp.lt.s32.totalorder %s9, 3
    %p138 = pnand %p136, %p137
    %p139 = pneg %p138
    // Predicated region
    $region29: #{double_conv_pallas.5} parent=5 // pred_check
      _
    $region30: #{double_conv_pallas.5} parent=5 // pred_check_branch
      %141 = sbr.rel (%p138) target = $region32
    $region31: #{double_conv_pallas.5} parent=5 // pred_region
      %s142 = ssub.s32 %s9, 1
      %p143 = scmp.lt.s32.totalorder %s14, 1
      %s144 = scalar_select %p143, %s14, 1
      %s145 = smul.addr %s144, 32
      %s146 = smul.addr %s145, 8
      %s147 = scalar_lea.vmem %s0, %s146
      %p148 = pneg %p35
      %p149 = pneg %p32
      %p150 = pneg %p56
      %p151 = pneg %p53
      %p152 = pneg %p77
      %p153 = pneg %p74
      %p154 = pneg %p103
      %p155 = pneg %p100
      %p156 = scmp.lt.s32.totalorder %s14, 1
      %s157 = scalar_select %p156, %s14, 1
      %s158 = smul.addr %s157, 32
      %s159 = smul.addr %s158, 8
      %s160 = scalar_lea.vmem %s3, %s159
      %p161 = scmp.lt.s32.totalorder %s14, 1
      %s162 = scalar_select %p161, %s14, 1
      %s163 = smul.addr %s162, 32
      %s164 = smul.addr %s163, 8
      %s165 = scalar_lea.vmem %s0, %s164
      %p166 = scmp.lt.s32.totalorder %s14, 1
      %s167 = scalar_select %p166, %s14, 1
      %s168 = smul.addr %s167, 32
      %s169 = smul.addr %s168, 8
      %s170 = scalar_lea.vmem %s3, %s169
      %v171 = vld [vmem:[%s165] sm:$0xff]
      %v172 = vld [vmem:[%s165 + $0x8] sm:$0xff]
      %v173 = vld [vmem:[%s165 + $0x10] sm:$0xff]
      %v174 = vld [vmem:[%s165 + $0x18] sm:$0xff]
      %v175 = vld [vmem:[%s165 + $0x20] sm:$0xff]
      %v176 = vld [vmem:[%s165 + $0x28] sm:$0xff]
      %v177 = vld [vmem:[%s165 + $0x30] sm:$0xff]
      %v178 = vld [vmem:[%s165 + $0x38] sm:$0xff]
      %v179 = vld [vmem:[%s165 + $0x40] sm:$0xff]
      %v180 = vld [vmem:[%s165 + $0x48] sm:$0xff]
      %v181 = vld [vmem:[%s165 + $0x50] sm:$0xff]
      %v182 = vld [vmem:[%s165 + $0x58] sm:$0xff]
      %v183 = vld [vmem:[%s165 + $0x60] sm:$0xff]
      %v184 = vld [vmem:[%s165 + $0x68] sm:$0xff]
      %v185 = vld [vmem:[%s165 + $0x70] sm:$0xff]
      %v186 = vld [vmem:[%s165 + $0x78] sm:$0xff]
      %v187 = vld [vmem:[%s165 + $0x80] sm:$0xff]
      %v188 = vld [vmem:[%s165 + $0x88] sm:$0xff]
      %v189 = vld [vmem:[%s165 + $0x90] sm:$0xff]
      %v190 = vld [vmem:[%s165 + $0x98] sm:$0xff]
      %v191 = vld [vmem:[%s165 + $0xa0] sm:$0xff]
      %v192 = vld [vmem:[%s165 + $0xa8] sm:$0xff]
      %v193 = vld [vmem:[%s165 + $0xb0] sm:$0xff]
      %v194 = vld [vmem:[%s165 + $0xb8] sm:$0xff]
      %v195 = vld [vmem:[%s165 + $0xc0] sm:$0xff]
      %v196 = vld [vmem:[%s165 + $0xc8] sm:$0xff]
      %v197 = vld [vmem:[%s165 + $0xd0] sm:$0xff]
      %v198 = vld [vmem:[%s165 + $0xd8] sm:$0xff]
      %v199 = vld [vmem:[%s165 + $0xe0] sm:$0xff]
      %v200 = vld [vmem:[%s165 + $0xe8] sm:$0xff]
      %v201 = vld [vmem:[%s165 + $0xf0] sm:$0xff]
      %v202 = vld [vmem:[%s165 + $0xf8] sm:$0xff]
      %v203 = vld [vmem:[%s1] sm:$0x1]
      %v205 = vlaneseq
      %v206 = vshrl.u32 %v205, 7
      %v207 = vsub.s32 0, %v206
      %v208 = vrot.slane %v203, %v207
      %v210 = vmul.f32 %v171, %v208
      %v211 = vmul.f32 %v172, %v208
      %v212 = vmul.f32 %v173, %v208
      %v213 = vmul.f32 %v174, %v208
      %v214 = vmul.f32 %v175, %v208
      %v215 = vmul.f32 %v176, %v208
      %v216 = vmul.f32 %v177, %v208
      %v217 = vmul.f32 %v178, %v208
      %v218 = vmul.f32 %v179, %v208
      %v219 = vmul.f32 %v180, %v208
      %v220 = vmul.f32 %v181, %v208
      %v221 = vmul.f32 %v182, %v208
      %v222 = vmul.f32 %v183, %v208
      %v223 = vmul.f32 %v184, %v208
      %v224 = vmul.f32 %v185, %v208
      %v225 = vmul.f32 %v186, %v208
      %v226 = vmul.f32 %v187, %v208
      %v227 = vmul.f32 %v188, %v208
      %v228 = vmul.f32 %v189, %v208
      %v229 = vmul.f32 %v190, %v208
      %v230 = vmul.f32 %v191, %v208
      %v231 = vmul.f32 %v192, %v208
      %v232 = vmul.f32 %v193, %v208
      %v233 = vmul.f32 %v194, %v208
      %v234 = vmul.f32 %v195, %v208
      %v235 = vmul.f32 %v196, %v208
      %v236 = vmul.f32 %v197, %v208
      %v237 = vmul.f32 %v198, %v208
      %v238 = vmul.f32 %v199, %v208
      %v239 = vmul.f32 %v200, %v208
      %v240 = vmul.f32 %v201, %v208
      %v241 = vmul.f32 %v202, %v208
      %v242 = vld [vmem:[%s2] sm:$0x1]
      %v244 = vlaneseq
      %v245 = vshrl.u32 %v244, 7
      %v246 = vsub.s32 0, %v245
      %v247 = vrot.slane %v242, %v246
      %v249 = vadd.f32 %v210, %v247
      %v250 = vadd.f32 %v211, %v247
      %v251 = vadd.f32 %v212, %v247
      %v252 = vadd.f32 %v213, %v247
      %v253 = vadd.f32 %v214, %v247
      %v254 = vadd.f32 %v215, %v247
      %v255 = vadd.f32 %v216, %v247
      %v256 = vadd.f32 %v217, %v247
      %v257 = vadd.f32 %v218, %v247
      %v258 = vadd.f32 %v219, %v247
      %v259 = vadd.f32 %v220, %v247
      %v260 = vadd.f32 %v221, %v247
      %v261 = vadd.f32 %v222, %v247
      %v262 = vadd.f32 %v223, %v247
      %v263 = vadd.f32 %v224, %v247
      %v264 = vadd.f32 %v225, %v247
      %v265 = vadd.f32 %v226, %v247
      %v266 = vadd.f32 %v227, %v247
      %v267 = vadd.f32 %v228, %v247
      %v268 = vadd.f32 %v229, %v247
      %v269 = vadd.f32 %v230, %v247
      %v270 = vadd.f32 %v231, %v247
      %v271 = vadd.f32 %v232, %v247
      %v272 = vadd.f32 %v233, %v247
      %v273 = vadd.f32 %v234, %v247
      %v274 = vadd.f32 %v235, %v247
      %v275 = vadd.f32 %v236, %v247
      %v276 = vadd.f32 %v237, %v247
      %v277 = vadd.f32 %v238, %v247
      %v278 = vadd.f32 %v239, %v247
      %v279 = vadd.f32 %v240, %v247
      %v280 = vadd.f32 %v241, %v247
      %v281 = vmax.f32 %v249, 0.0
      %v282 = vmax.f32 %v250, 0.0
      %v283 = vmax.f32 %v251, 0.0
      %v284 = vmax.f32 %v252, 0.0
      %v285 = vmax.f32 %v253, 0.0
      %v286 = vmax.f32 %v254, 0.0
      %v287 = vmax.f32 %v255, 0.0
      %v288 = vmax.f32 %v256, 0.0
      %v289 = vmax.f32 %v257, 0.0
      %v290 = vmax.f32 %v258, 0.0
      %v291 = vmax.f32 %v259, 0.0
      %v292 = vmax.f32 %v260, 0.0
      %v293 = vmax.f32 %v261, 0.0
      %v294 = vmax.f32 %v262, 0.0
      %v295 = vmax.f32 %v263, 0.0
      %v296 = vmax.f32 %v264, 0.0
      %v297 = vmax.f32 %v265, 0.0
      %v298 = vmax.f32 %v266, 0.0
      %v299 = vmax.f32 %v267, 0.0
      %v300 = vmax.f32 %v268, 0.0
      %v301 = vmax.f32 %v269, 0.0
      %v302 = vmax.f32 %v270, 0.0
      %v303 = vmax.f32 %v271, 0.0
      %v304 = vmax.f32 %v272, 0.0
      %v305 = vmax.f32 %v273, 0.0
      %v306 = vmax.f32 %v274, 0.0
      %v307 = vmax.f32 %v275, 0.0
      %v308 = vmax.f32 %v276, 0.0
      %v309 = vmax.f32 %v277, 0.0
      %v310 = vmax.f32 %v278, 0.0
      %v311 = vmax.f32 %v279, 0.0
      %v312 = vmax.f32 %v280, 0.0
      %313 = vst [vmem:[%s170] sm:$0xff] %v281
      %314 = vst [vmem:[%s170 + $0x8] sm:$0xff] %v282
      %315 = vst [vmem:[%s170 + $0x10] sm:$0xff] %v283
      %316 = vst [vmem:[%s170 + $0x18] sm:$0xff] %v284
      %317 = vst [vmem:[%s170 + $0x20] sm:$0xff] %v285
      %318 = vst [vmem:[%s170 + $0x28] sm:$0xff] %v286
      %319 = vst [vmem:[%s170 + $0x30] sm:$0xff] %v287
      %320 = vst [vmem:[%s170 + $0x38] sm:$0xff] %v288
      %321 = vst [vmem:[%s170 + $0x40] sm:$0xff] %v289
      %322 = vst [vmem:[%s170 + $0x48] sm:$0xff] %v290
      %323 = vst [vmem:[%s170 + $0x50] sm:$0xff] %v291
      %324 = vst [vmem:[%s170 + $0x58] sm:$0xff] %v292
      %325 = vst [vmem:[%s170 + $0x60] sm:$0xff] %v293
      %326 = vst [vmem:[%s170 + $0x68] sm:$0xff] %v294
      %327 = vst [vmem:[%s170 + $0x70] sm:$0xff] %v295
      %328 = vst [vmem:[%s170 + $0x78] sm:$0xff] %v296
      %329 = vst [vmem:[%s170 + $0x80] sm:$0xff] %v297
      %330 = vst [vmem:[%s170 + $0x88] sm:$0xff] %v298
      %331 = vst [vmem:[%s170 + $0x90] sm:$0xff] %v299
      %332 = vst [vmem:[%s170 + $0x98] sm:$0xff] %v300
      %333 = vst [vmem:[%s170 + $0xa0] sm:$0xff] %v301
      %334 = vst [vmem:[%s170 + $0xa8] sm:$0xff] %v302
      %335 = vst [vmem:[%s170 + $0xb0] sm:$0xff] %v303
      %336 = vst [vmem:[%s170 + $0xb8] sm:$0xff] %v304
      %337 = vst [vmem:[%s170 + $0xc0] sm:$0xff] %v305
      %338 = vst [vmem:[%s170 + $0xc8] sm:$0xff] %v306
      %339 = vst [vmem:[%s170 + $0xd0] sm:$0xff] %v307
      %340 = vst [vmem:[%s170 + $0xd8] sm:$0xff] %v308
      %341 = vst [vmem:[%s170 + $0xe0] sm:$0xff] %v309
      %342 = vst [vmem:[%s170 + $0xe8] sm:$0xff] %v310
      %343 = vst [vmem:[%s170 + $0xf0] sm:$0xff] %v311
      %344 = vst [vmem:[%s170 + $0xf8] sm:$0xff] %v312
      %p345 = scmp.lt.s32.totalorder %s14, 1
      %s346 = scalar_select %p345, %s14, 1
      %s347 = smul.addr %s346, 32
      %s348 = smul.addr %s347, 8
      %s349 = scalar_lea.vmem %s3, %s348
      // Predicated region
      $region33: #{double_conv_pallas.5} parent=31 // pred_check
        %p350 = pneg %p100
      $region34: #{double_conv_pallas.5} parent=31 // pred_check_branch
        %352 = sbr.rel (%p350) target = $region36
      $region35: #{double_conv_pallas.5} parent=31 // pred_region
        _
      $region36: #{double_conv_pallas.5} parent=31 // pred_fallthru
        _
    $region32: #{double_conv_pallas.5} parent=5 // pred_fallthru
      _
    %p353 = scmp.le.s32.totalorder 2, %s9
    // Predicated region
    $region37: #{double_conv_pallas.5} parent=5 // pred_check
      %p354 = pneg %p353
    $region38: #{double_conv_pallas.5} parent=5 // pred_check_branch
      %356 = sbr.rel (%p354) target = $region40
    $region39: #{double_conv_pallas.5} parent=5 // pred_region
      %s357 = ssub.s32 %s9, 2
      // Predicated region
      $region41: #{double_conv_pallas.5} parent=39 // pred_check
        %p358 = pneg %p106
      $region42: #{double_conv_pallas.5} parent=39 // pred_check_branch
        %360 = sbr.rel (%p358) target = $region44
      $region43: #{double_conv_pallas.5} parent=39 // pred_region
        %p361 = scmp.lt.s32.totalorder %s15, 1
        %s362 = scalar_select %p361, %s15, 1
        %s363 = smul.addr %s362, 32
        %s364 = smul.addr %s363, 8
        %s365 = scalar_lea.vmem %s3, %s364
      $region44: #{double_conv_pallas.5} parent=39 // pred_fallthru
        _
    $region40: #{double_conv_pallas.5} parent=5 // pred_fallthru
      _
  $region6: #{double_conv_pallas.5} parent=0 // loop_footer
    %s13 = sadd.s32 1, %s9
  $region7: #{double_conv_pallas.5} parent=0 // loop_footer_branch
    %8 = sbr.rel target = $region3
  $region8: #{double_conv_pallas.5} parent=0 // loop_exit
    _

// kernel: double_conv_pallas.3
$region0: #{double_conv_pallas.3}
  #allocation0 [shape = 'u32[]', space=smem, size = 0x4, offset = 0x4, fixed_abs, tag = 'smem constant byte address 0x4 - core index']
  #allocation1 [shape = 'u32[144,128]{1,0:T(1,128)}', space=vmem, size = 0x12000, scoped, tag = 'internal scratch']
  #allocation2 [shape = 'f32[18,18,128]{2,1,0:T(8,128)}', space=vmem, size = 0x36000, scoped, tag = 'scratch operand']
  %s0 = inlined_call_operand.vmem [shape: f32[2,16,16,4], index: 0, kind: input, shape index: {}]
  %s1 = inlined_call_operand.vmem [shape: f32[1152,128], index: 1, kind: input, shape index: {}]
  %s2 = inlined_call_operand.vmem [shape: f32[2,16,16,128], index: 2, kind: output, shape index: {0}]
  %s3 = inlined_call_operand.vmem [shape: f32[1,128], index: 3, kind: output, shape index: {1}]
  %s4 = inlined_call_operand.vmem [shape: f32[1,128], index: 4, kind: output, shape index: {2}]
  %5 = xla_tuple %s2, %s3, %s4
  %s6 = sld [smem:[#allocation0]]
  $region61: #{double_conv_pallas.3} parent=0
    _
  %s8 = ssub.s32 1, %s6
  %s9 = scalar_select 0, %s8, %s6
  loop: start=0, step=1, limit=4
  $region2: #{double_conv_pallas.3} parent=0 // loop_pre_header
    _
  $region3: #{double_conv_pallas.3} parent=0 // loop_header
    %s11 = sphi 0, %s15
    %p12 = scmp.ge.s32.totalorder %s11, 4
    %s21 = sphi 0, %s23
    %s24 = sphi 0, %s21
    %s25 = sphi 0, %s24
    %s41 = sphi 0, %s25
    %s45 = sphi 0, %s45
    %s47 = sphi 0, %s45
    %s48 = sphi 0, %s47
    %s62 = sphi 0, %s48
    %s68 = sphi 0, %s70
    %s71 = sphi 0, %s68
    %s72 = sphi 0, %s71
    %s88 = sphi 0, %s72
    %s92 = sphi 0, %s92
    %s94 = sphi 0, %s92
    %s95 = sphi 0, %s94
    %s109 = sphi 0, %s95
    %s113 = sphi 0, %s113
    %s115 = sphi 0, %s113
    %s116 = sphi 0, %s115
    %s130 = sphi 0, %s116
  $region4: #{double_conv_pallas.3} parent=0 // loop_header_branch
    %14 = sbr.rel (%p12) target = $region8
  $region5: #{double_conv_pallas.3} parent=0 // loop_body
    %s16 = ssub.s32 %s11, 1
    %s17 = ssub.s32 %s11, 2
    %s18 = sadd.s32 %s11, 1
    %s19 = ssub.s32 %s11, %s18
    %p20 = scmp.eq.s32.totalorder %s19, 0
    %s22 = sadd.s32 %s21, 1
    %s23 = scalar_select %p20, %s21, %s22
    %p26 = pneg %p20
    %p27 = scmp.eq.s32.totalorder %s11, 1
    %p28 = por %p26, %p27
    %p29 = scmp.ne.s32.totalorder %s21, %s24
    %p30 = scmp.eq.s32.totalorder %s11, 0
    %p31 = por %p29, %p30
    %p32 = scmp.ne.s32.totalorder %s21, %s24
    %p33 = scmp.eq.s32.totalorder %s16, 1
    %p34 = por %p32, %p33
    %p35 = scmp.ne.s32.totalorder %s24, %s25
    %p36 = scmp.eq.s32.totalorder %s16, 0
    %p37 = por %p35, %p36
    %p38 = scmp.ne.s32.totalorder %s24, %s25
    %p39 = scmp.eq.s32.totalorder %s17, 1
    %p40 = por %p38, %p39
    %p42 = scmp.ne.s32.totalorder %s25, %s41
    %p43 = scmp.eq.s32.totalorder %s17, 0
    %p44 = por %p42, %p43
    %s46 = sadd.s32 %s45, 1
    %p49 = scmp.eq.s32.totalorder %s11, 1
    %p50 = scmp.ne.s32.totalorder %s45, %s47
    %p51 = scmp.eq.s32.totalorder %s11, 0
    %p52 = por %p50, %p51
    %p53 = scmp.ne.s32.totalorder %s45, %s47
    %p54 = scmp.eq.s32.totalorder %s16, 1
    %p55 = por %p53, %p54
    %p56 = scmp.ne.s32.totalorder %s47, %s48
    %p57 = scmp.eq.s32.totalorder %s16, 0
    %p58 = por %p56, %p57
    %p59 = scmp.ne.s32.totalorder %s47, %s48
    %p60 = scmp.eq.s32.totalorder %s17, 1
    %p61 = por %p59, %p60
    %p63 = scmp.ne.s32.totalorder %s48, %s62
    %p64 = scmp.eq.s32.totalorder %s17, 0
    %p65 = por %p63, %p64
    %s66 = ssub.s32 %s11, %s18
    %p67 = scmp.eq.s32.totalorder %s66, 0
    %s69 = sadd.s32 %s68, 1
    %s70 = scalar_select %p67, %s68, %s69
    %p73 = pneg %p67
    %p74 = scmp.eq.s32.totalorder %s11, 1
    %p75 = por %p73, %p74
    %p76 = scmp.ne.s32.totalorder %s68, %s71
    %p77 = scmp.eq.s32.totalorder %s11, 0
    %p78 = por %p76, %p77
    %p79 = scmp.ne.s32.totalorder %s68, %s71
    %p80 = scmp.eq.s32.totalorder %s16, 1
    %p81 = por %p79, %p80
    %p82 = scmp.ne.s32.totalorder %s71, %s72
    %p83 = scmp.eq.s32.totalorder %s16, 0
    %p84 = por %p82, %p83
    %p85 = scmp.ne.s32.totalorder %s71, %s72
    %p86 = scmp.eq.s32.totalorder %s17, 1
    %p87 = por %p85, %p86
    %p89 = scmp.ne.s32.totalorder %s72, %s88
    %p90 = scmp.eq.s32.totalorder %s17, 0
    %p91 = por %p89, %p90
    %s93 = sadd.s32 %s92, 1
    %p96 = scmp.eq.s32.totalorder %s11, 1
    %p97 = scmp.ne.s32.totalorder %s92, %s94
    %p98 = scmp.eq.s32.totalorder %s11, 0
    %p99 = por %p97, %p98
    %p100 = scmp.ne.s32.totalorder %s92, %s94
    %p101 = scmp.eq.s32.totalorder %s16, 1
    %p102 = por %p100, %p101
    %p103 = scmp.ne.s32.totalorder %s94, %s95
    %p104 = scmp.eq.s32.totalorder %s16, 0
    %p105 = por %p103, %p104
    %p106 = scmp.ne.s32.totalorder %s94, %s95
    %p107 = scmp.eq.s32.totalorder %s17, 1
    %p108 = por %p106, %p107
    %p110 = scmp.ne.s32.totalorder %s95, %s109
    %p111 = scmp.eq.s32.totalorder %s17, 0
    %p112 = por %p110, %p111
    %s114 = sadd.s32 %s113, 1
    %p117 = scmp.eq.s32.totalorder %s11, 1
    %p118 = scmp.ne.s32.totalorder %s113, %s115
    %p119 = scmp.eq.s32.totalorder %s11, 0
    %p120 = por %p118, %p119
    %p121 = scmp.ne.s32.totalorder %s113, %s115
    %p122 = scmp.eq.s32.totalorder %s16, 1
    %p123 = por %p121, %p122
    %p124 = scmp.ne.s32.totalorder %s115, %s116
    %p125 = scmp.eq.s32.totalorder %s16, 0
    %p126 = por %p124, %p125
    %p127 = scmp.ne.s32.totalorder %s115, %s116
    %p128 = scmp.eq.s32.totalorder %s17, 1
    %p129 = por %p127, %p128
    %p131 = scmp.ne.s32.totalorder %s116, %s130
    %p132 = scmp.eq.s32.totalorder %s17, 0
    %p133 = por %p131, %p132
    %p134 = scmp.le.s32.totalorder 1, %s11
    %p135 = scmp.lt.s32.totalorder %s11, 3
    %p136 = pnand %p134, %p135
    %p137 = pneg %p136
    // Predicated region
    $region9: #{double_conv_pallas.3} parent=5 // pred_check
      _
    $region10: #{double_conv_pallas.3} parent=5 // pred_check_branch
      %139 = sbr.rel (%p136) target = $region12
    $region11: #{double_conv_pallas.3} parent=5 // pred_region
      %s140 = ssub.s32 %s11, 1
      // Predicated region
      $region13: #{double_conv_pallas.3} parent=11 // pred_check
        %p141 = pneg %p58
      $region14: #{double_conv_pallas.3} parent=11 // pred_check_branch
        %143 = sbr.rel (%p141) target = $region16
      $region15: #{double_conv_pallas.3} parent=11 // pred_region
        _
      $region16: #{double_conv_pallas.3} parent=11 // pred_fallthru
        _
    $region12: #{double_conv_pallas.3} parent=5 // pred_fallthru
      _
    %p144 = scmp.lt.s32.totalorder %s11, 2
    // Predicated region
    $region17: #{double_conv_pallas.3} parent=5 // pred_check
      %p145 = pneg %p144
    $region18: #{double_conv_pallas.3} parent=5 // pred_check_branch
      %147 = sbr.rel (%p145) target = $region20
    $region19: #{double_conv_pallas.3} parent=5 // pred_region
      // Predicated region
      $region21: #{double_conv_pallas.3} parent=19 // pred_check
        %p148 = pneg %p31
      $region22: #{double_conv_pallas.3} parent=19 // pred_check_branch
        %150 = sbr.rel (%p148) target = $region24
      $region23: #{double_conv_pallas.3} parent=19 // pred_region
        %p151 = scmp.lt.s32.totalorder %s11, 1
        %s152 = scalar_select %p151, %s11, 1
        %s153 = smul.addr %s152, 32
        %s154 = smul.addr %s153, 8
        %s155 = scalar_lea.vmem %s0, %s154
      $region24: #{double_conv_pallas.3} parent=19 // pred_fallthru
        _
    $region20: #{double_conv_pallas.3} parent=5 // pred_fallthru
      _
    %p156 = scmp.le.s32.totalorder 1, %s11
    %p157 = scmp.lt.s32.totalorder %s11, 3
    %p158 = pnand %p156, %p157
    %p159 = pneg %p158
    // Predicated region
    $region25: #{double_conv_pallas.3} parent=5 // pred_check
      _
    $region26: #{double_conv_pallas.3} parent=5 // pred_check_branch
      %161 = sbr.rel (%p158) target = $region28
    $region27: #{double_conv_pallas.3} parent=5 // pred_region
      %s162 = ssub.s32 %s11, 1
      %p163 = scmp.lt.s32.totalorder %s16, 1
      %s164 = scalar_select %p163, %s16, 1
      %s165 = smul.addr %s164, 32
      %s166 = smul.addr %s165, 8
      %s167 = scalar_lea.vmem %s0, %s166
      %p168 = pneg %p37
      %p169 = pneg %p34
      %p170 = pneg %p58
      %p171 = pneg %p55
      %p172 = pneg %p84
      %p173 = pneg %p81
      %p174 = scmp.lt.s32.totalorder %s16, 1
      %s175 = scalar_select %p174, %s16, 1
      %s176 = smul.addr %s175, 32
      %s177 = smul.addr %s176, 8
      %s178 = scalar_lea.vmem %s2, %s177
      %p179 = pneg %p105
      %p180 = pneg %p102
      %p181 = pneg %p126
      %p182 = pneg %p123
      %p183 = scmp.lt.s32.totalorder %s16, 1
      %s184 = scalar_select %p183, %s16, 1
      %s185 = smul.addr %s184, 32
      %s186 = smul.addr %s185, 8
      %s187 = scalar_lea.vmem %s0, %s186
      %p188 = scmp.lt.s32.totalorder %s16, 1
      %s189 = scalar_select %p188, %s16, 1
      %s190 = smul.addr %s189, 32
      %s191 = smul.addr %s190, 8
      %s192 = scalar_lea.vmem %s2, %s191
      %p193 = scmp.eq.s32.totalorder %s16, 0
      // Predicated region
      $region29: #{double_conv_pallas.3} parent=27 // pred_check
        %p194 = pneg %p193
      $region30: #{double_conv_pallas.3} parent=27 // pred_check_branch
        %196 = sbr.rel (%p194) target = $region32
      $region31: #{double_conv_pallas.3} parent=27 // pred_region
        %197 = vst [vmem:[#allocation2] sm:$0xff] 0.0
        %198 = vst [vmem:[#allocation2 + $0x8] sm:$0xff] 0.0
        %199 = vst [vmem:[#allocation2 + $0x10] sm:$0x3] 0.0
        %200 = vst [vmem:[#allocation2 + $0x18] sm:$0xff] 0.0
        %201 = vst [vmem:[#allocation2 + $0x20] sm:$0xff] 0.0
        %202 = vst [vmem:[#allocation2 + $0x28] sm:$0x3] 0.0
        %203 = vst [vmem:[#allocation2 + $0x30] sm:$0xff] 0.0
        %204 = vst [vmem:[#allocation2 + $0x38] sm:$0xff] 0.0
        %205 = vst [vmem:[#allocation2 + $0x40] sm:$0x3] 0.0
        %206 = vst [vmem:[#allocation2 + $0x48] sm:$0xff] 0.0
        %207 = vst [vmem:[#allocation2 + $0x50] sm:$0xff] 0.0
        %208 = vst [vmem:[#allocation2 + $0x58] sm:$0x3] 0.0
        %209 = vst [vmem:[#allocation2 + $0x60] sm:$0xff] 0.0
        %210 = vst [vmem:[#allocation2 + $0x68] sm:$0xff] 0.0
        %211 = vst [vmem:[#allocation2 + $0x70] sm:$0x3] 0.0
        %212 = vst [vmem:[#allocation2 + $0x78] sm:$0xff] 0.0
        %213 = vst [vmem:[#allocation2 + $0x80] sm:$0xff] 0.0
        %214 = vst [vmem:[#allocation2 + $0x88] sm:$0x3] 0.0
        %215 = vst [vmem:[#allocation2 + $0x90] sm:$0xff] 0.0
        %216 = vst [vmem:[#allocation2 + $0x98] sm:$0xff] 0.0
        %217 = vst [vmem:[#allocation2 + $0xa0] sm:$0x3] 0.0
        %218 = vst [vmem:[#allocation2 + $0xa8] sm:$0xff] 0.0
        %219 = vst [vmem:[#allocation2 + $0xb0] sm:$0xff] 0.0
        %220 = vst [vmem:[#allocation2 + $0xb8] sm:$0x3] 0.0
        %221 = vst [vmem:[#allocation2 + $0xc0] sm:$0xff] 0.0
        %222 = vst [vmem:[#allocation2 + $0xc8] sm:$0xff] 0.0
        %223 = vst [vmem:[#allocation2 + $0xd0] sm:$0x3] 0.0
        %224 = vst [vmem:[#allocation2 + $0xd8] sm:$0xff] 0.0
        %225 = vst [vmem:[#allocation2 + $0xe0] sm:$0xff] 0.0
        %226 = vst [vmem:[#allocation2 + $0xe8] sm:$0x3] 0.0
        %227 = vst [vmem:[#allocation2 + $0xf0] sm:$0xff] 0.0
        %228 = vst [vmem:[#allocation2 + $0xf8] sm:$0xff] 0.0
        %229 = vst [vmem:[#allocation2 + $0x100] sm:$0x3] 0.0
        %230 = vst [vmem:[#allocation2 + $0x108] sm:$0xff] 0.0
        %231 = vst [vmem:[#allocation2 + $0x110] sm:$0xff] 0.0
        %232 = vst [vmem:[#allocation2 + $0x118] sm:$0x3] 0.0
        %233 = vst [vmem:[#allocation2 + $0x120] sm:$0xff] 0.0
        %234 = vst [vmem:[#allocation2 + $0x128] sm:$0xff] 0.0
        %235 = vst [vmem:[#allocation2 + $0x130] sm:$0x3] 0.0
        %236 = vst [vmem:[#allocation2 + $0x138] sm:$0xff] 0.0
        %237 = vst [vmem:[#allocation2 + $0x140] sm:$0xff] 0.0
        %238 = vst [vmem:[#allocation2 + $0x148] sm:$0x3] 0.0
        %239 = vst [vmem:[#allocation2 + $0x150] sm:$0xff] 0.0
        %240 = vst [vmem:[#allocation2 + $0x158] sm:$0xff] 0.0
        %241 = vst [vmem:[#allocation2 + $0x160] sm:$0x3] 0.0
        %242 = vst [vmem:[#allocation2 + $0x168] sm:$0xff] 0.0
        %243 = vst [vmem:[#allocation2 + $0x170] sm:$0xff] 0.0
        %244 = vst [vmem:[#allocation2 + $0x178] sm:$0x3] 0.0
        %245 = vst [vmem:[#allocation2 + $0x180] sm:$0xff] 0.0
        %246 = vst [vmem:[#allocation2 + $0x188] sm:$0xff] 0.0
        %247 = vst [vmem:[#allocation2 + $0x190] sm:$0x3] 0.0
        %248 = vst [vmem:[#allocation2 + $0x198] sm:$0xff] 0.0
        %249 = vst [vmem:[#allocation2 + $0x1a0] sm:$0xff] 0.0
        %250 = vst [vmem:[#allocation2 + $0x1a8] sm:$0x3] 0.0
        %251 = vst [vmem:[%s3] sm:$0x1] 0.0
        %252 = vst [vmem:[%s4] sm:$0x1] 0.0
      $region32: #{double_conv_pallas.3} parent=27 // pred_fallthru
        _
      %v253 = vld [vmem:[%s187] sm:$0xff]
      %v254 = vld [vmem:[%s187 + $0x8] sm:$0xff]
      %v255 = vld [vmem:[%s187 + $0x10] sm:$0xff]
      %v256 = vld [vmem:[%s187 + $0x18] sm:$0xff]
      %v257 = vld [vmem:[%s187 + $0x20] sm:$0xff]
      %v258 = vld [vmem:[%s187 + $0x28] sm:$0xff]
      %v259 = vld [vmem:[%s187 + $0x30] sm:$0xff]
      %v260 = vld [vmem:[%s187 + $0x38] sm:$0xff]
      %v261 = vld [vmem:[%s187 + $0x40] sm:$0xff]
      %v262 = vld [vmem:[%s187 + $0x48] sm:$0xff]
      %v263 = vld [vmem:[%s187 + $0x50] sm:$0xff]
      %v264 = vld [vmem:[%s187 + $0x58] sm:$0xff]
      %v265 = vld [vmem:[%s187 + $0x60] sm:$0xff]
      %v266 = vld [vmem:[%s187 + $0x68] sm:$0xff]
      %v267 = vld [vmem:[%s187 + $0x70] sm:$0xff]
      %v268 = vld [vmem:[%s187 + $0x78] sm:$0xff]
      %v269 = vld [vmem:[%s187 + $0x80] sm:$0xff]
      %v270 = vld [vmem:[%s187 + $0x88] sm:$0xff]
      %v271 = vld [vmem:[%s187 + $0x90] sm:$0xff]
      %v272 = vld [vmem:[%s187 + $0x98] sm:$0xff]
      %v273 = vld [vmem:[%s187 + $0xa0] sm:$0xff]
      %v274 = vld [vmem:[%s187 + $0xa8] sm:$0xff]
      %v275 = vld [vmem:[%s187 + $0xb0] sm:$0xff]
      %v276 = vld [vmem:[%s187 + $0xb8] sm:$0xff]
      %v277 = vld [vmem:[%s187 + $0xc0] sm:$0xff]
      %v278 = vld [vmem:[%s187 + $0xc8] sm:$0xff]
      %v279 = vld [vmem:[%s187 + $0xd0] sm:$0xff]
      %v280 = vld [vmem:[%s187 + $0xd8] sm:$0xff]
      %v281 = vld [vmem:[%s187 + $0xe0] sm:$0xff]
      %v282 = vld [vmem:[%s187 + $0xe8] sm:$0xff]
      %v283 = vld [vmem:[%s187 + $0xf0] sm:$0xff]
      %v284 = vld [vmem:[%s187 + $0xf8] sm:$0xff]
      %s285 = scalar_lea.vmem [#allocation2], 24
      %vm286 = vcmask 31744
      %287 = vst.msk [vmem:[%s285 + $0x1] sm:$0xff] %vm286, %v253
      %288 = vst.msk [vmem:[%s285 + $0x9] sm:$0xff] %vm286, %v254
      %289 = vst.msk [vmem:[%s285 + $0x19] sm:$0xff] %vm286, %v255
      %290 = vst.msk [vmem:[%s285 + $0x21] sm:$0xff] %vm286, %v256
      %291 = vst.msk [vmem:[%s285 + $0x31] sm:$0xff] %vm286, %v257
      %292 = vst.msk [vmem:[%s285 + $0x39] sm:$0xff] %vm286, %v258
      %293 = vst.msk [vmem:[%s285 + $0x49] sm:$0xff] %vm286, %v259
      %294 = vst.msk [vmem:[%s285 + $0x51] sm:$0xff] %vm286, %v260
      %295 = vst.msk [vmem:[%s285 + $0x61] sm:$0xff] %vm286, %v261
      %296 = vst.msk [vmem:[%s285 + $0x69] sm:$0xff] %vm286, %v262
      %297 = vst.msk [vmem:[%s285 + $0x79] sm:$0xff] %vm286, %v263
      %298 = vst.msk [vmem:[%s285 + $0x81] sm:$0xff] %vm286, %v264
      %299 = vst.msk [vmem:[%s285 + $0x91] sm:$0xff] %vm286, %v265
      %300 = vst.msk [vmem:[%s285 + $0x99] sm:$0xff] %vm286, %v266
      %301 = vst.msk [vmem:[%s285 + $0xa9] sm:$0xff] %vm286, %v267
      %302 = vst.msk [vmem:[%s285 + $0xb1] sm:$0xff] %vm286, %v268
      %303 = vst.msk [vmem:[%s285 + $0xc1] sm:$0xff] %vm286, %v269
      %304 = vst.msk [vmem:[%s285 + $0xc9] sm:$0xff] %vm286, %v270
      %305 = vst.msk [vmem:[%s285 + $0xd9] sm:$0xff] %vm286, %v271
      %306 = vst.msk [vmem:[%s285 + $0xe1] sm:$0xff] %vm286, %v272
      %307 = vst.msk [vmem:[%s285 + $0xf1] sm:$0xff] %vm286, %v273
      %308 = vst.msk [vmem:[%s285 + $0xf9] sm:$0xff] %vm286, %v274
      %309 = vst.msk [vmem:[%s285 + $0x109] sm:$0xff] %vm286, %v275
      %310 = vst.msk [vmem:[%s285 + $0x111] sm:$0xff] %vm286, %v276
      %311 = vst.msk [vmem:[%s285 + $0x121] sm:$0xff] %vm286, %v277
      %312 = vst.msk [vmem:[%s285 + $0x129] sm:$0xff] %vm286, %v278
      %313 = vst.msk [vmem:[%s285 + $0x139] sm:$0xff] %vm286, %v279
      %314 = vst.msk [vmem:[%s285 + $0x141] sm:$0xff] %vm286, %v280
      %315 = vst.msk [vmem:[%s285 + $0x151] sm:$0xff] %vm286, %v281
      %316 = vst.msk [vmem:[%s285 + $0x159] sm:$0xff] %vm286, %v282
      %317 = vst.msk [vmem:[%s285 + $0x169] sm:$0xff] %vm286, %v283
      %318 = vst.msk [vmem:[%s285 + $0x171] sm:$0xff] %vm286, %v284
      %v319 = vld [vmem:[#allocation2] sm:$0xff]
      %v320 = vld [vmem:[#allocation2 + $0x8] sm:$0xff]
      %v321 = vld [vmem:[#allocation2 + $0x18] sm:$0xff]
      %v322 = vld [vmem:[#allocation2 + $0x20] sm:$0xff]
      %v323 = vld [vmem:[#allocation2 + $0x30] sm:$0xff]
      %v324 = vld [vmem:[#allocation2 + $0x38] sm:$0xff]
      %v325 = vld [vmem:[#allocation2 + $0x48] sm:$0xff]
      %v326 = vld [vmem:[#allocation2 + $0x50] sm:$0xff]
      %v327 = vld [vmem:[#allocation2 + $0x60] sm:$0xff]
      %v328 = vld [vmem:[#allocation2 + $0x68] sm:$0xff]
      %v329 = vld [vmem:[#allocation2 + $0x78] sm:$0xff]
      %v330 = vld [vmem:[#allocation2 + $0x80] sm:$0xff]
      %v331 = vld [vmem:[#allocation2 + $0x90] sm:$0xff]
      %v332 = vld [vmem:[#allocation2 + $0x98] sm:$0xff]
      %v333 = vld [vmem:[#allocation2 + $0xa8] sm:$0xff]
      %v334 = vld [vmem:[#allocation2 + $0xb0] sm:$0xff]
      %v335 = vld [vmem:[#allocation2 + $0xc0] sm:$0xff]
      %v336 = vld [vmem:[#allocation2 + $0xc8] sm:$0xff]
      %v337 = vld [vmem:[#allocation2 + $0xd8] sm:$0xff]
      %v338 = vld [vmem:[#allocation2 + $0xe0] sm:$0xff]
      %v339 = vld [vmem:[#allocation2 + $0xf0] sm:$0xff]
      %v340 = vld [vmem:[#allocation2 + $0xf8] sm:$0xff]
      %v341 = vld [vmem:[#allocation2 + $0x108] sm:$0xff]
      %v342 = vld [vmem:[#allocation2 + $0x110] sm:$0xff]
      %v343 = vld [vmem:[#allocation2 + $0x120] sm:$0xff]
      %v344 = vld [vmem:[#allocation2 + $0x128] sm:$0xff]
      %v345 = vld [vmem:[#allocation2 + $0x138] sm:$0xff]
      %v346 = vld [vmem:[#allocation2 + $0x140] sm:$0xff]
      %v347 = vld [vmem:[#allocation2 + $0x150] sm:$0xff]
      %v348 = vld [vmem:[#allocation2 + $0x158] sm:$0xff]
      %v349 = vld [vmem:[#allocation2 + $0x168] sm:$0xff]
      %v350 = vld [vmem:[#allocation2 + $0x170] sm:$0xff]
      %v351 = vld [vmem:[#allocation2 + $0x1] sm:$0xff]
      %v352 = vld [vmem:[#allocation2 + $0x9] sm:$0xff]
      %v353 = vld [vmem:[#allocation2 + $0x19] sm:$0xff]
      %v354 = vld [vmem:[#allocation2 + $0x21] sm:$0xff]
      %v355 = vld [vmem:[#allocation2 + $0x31] sm:$0xff]
      %v356 = vld [vmem:[#allocation2 + $0x39] sm:$0xff]
      %v357 = vld [vmem:[#allocation2 + $0x49] sm:$0xff]
      %v358 = vld [vmem:[#allocation2 + $0x51] sm:$0xff]
      %v359 = vld [vmem:[#allocation2 + $0x61] sm:$0xff]
      %v360 = vld [vmem:[#allocation2 + $0x69] sm:$0xff]
      %v361 = vld [vmem:[#allocation2 + $0x79] sm:$0xff]
      %v362 = vld [vmem:[#allocation2 + $0x81] sm:$0xff]
      %v363 = vld [vmem:[#allocation2 + $0x91] sm:$0xff]
      %v364 = vld [vmem:[#allocation2 + $0x99] sm:$0xff]
      %v365 = vld [vmem:[#allocation2 + $0xa9] sm:$0xff]
      %v366 = vld [vmem:[#allocation2 + $0xb1] sm:$0xff]
      %v367 = vld [vmem:[#allocation2 + $0xc1] sm:$0xff]
      %v368 = vld [vmem:[#allocation2 + $0xc9] sm:$0xff]
      %v369 = vld [vmem:[#allocation2 + $0xd9] sm:$0xff]
      %v370 = vld [vmem:[#allocation2 + $0xe1] sm:$0xff]
      %v371 = vld [vmem:[#allocation2 + $0xf1] sm:$0xff]
      %v372 = vld [vmem:[#allocation2 + $0xf9] sm:$0xff]
      %v373 = vld [vmem:[#allocation2 + $0x109] sm:$0xff]
      %v374 = vld [vmem:[#allocation2 + $0x111] sm:$0xff]
      %v375 = vld [vmem:[#allocation2 + $0x121] sm:$0xff]
      %v376 = vld [vmem:[#allocation2 + $0x129] sm:$0xff]
      %v377 = vld [vmem:[#allocation2 + $0x139] sm:$0xff]
      %v378 = vld [vmem:[#allocation2 + $0x141] sm:$0xff]
      %v379 = vld [vmem:[#allocation2 + $0x151] sm:$0xff]
      %v380 = vld [vmem:[#allocation2 + $0x159] sm:$0xff]
      %v381 = vld [vmem:[#allocation2 + $0x169] sm:$0xff]
      %v382 = vld [vmem:[#allocation2 + $0x171] sm:$0xff]
      %v383 = vld [vmem:[#allocation2 + $0x2] sm:$0xff]
      %v384 = vld [vmem:[#allocation2 + $0xa] sm:$0xff]
      %v385 = vld [vmem:[#allocation2 + $0x1a] sm:$0xff]
      %v386 = vld [vmem:[#allocation2 + $0x22] sm:$0xff]
      %v387 = vld [vmem:[#allocation2 + $0x32] sm:$0xff]
      %v388 = vld [vmem:[#allocation2 + $0x3a] sm:$0xff]
      %v389 = vld [vmem:[#allocation2 + $0x4a] sm:$0xff]
      %v390 = vld [vmem:[#allocation2 + $0x52] sm:$0xff]
      %v391 = vld [vmem:[#allocation2 + $0x62] sm:$0xff]
      %v392 = vld [vmem:[#allocation2 + $0x6a] sm:$0xff]
      %v393 = vld [vmem:[#allocation2 + $0x7a] sm:$0xff]
      %v394 = vld [vmem:[#allocation2 + $0x82] sm:$0xff]
      %v395 = vld [vmem:[#allocation2 + $0x92] sm:$0xff]
      %v396 = vld [vmem:[#allocation2 + $0x9a] sm:$0xff]
      %v397 = vld [vmem:[#allocation2 + $0xaa] sm:$0xff]
      %v398 = vld [vmem:[#allocation2 + $0xb2] sm:$0xff]
      %v399 = vld [vmem:[#allocation2 + $0xc2] sm:$0xff]
      %v400 = vld [vmem:[#allocation2 + $0xca] sm:$0xff]
      %v401 = vld [vmem:[#allocation2 + $0xda] sm:$0xff]
      %v402 = vld [vmem:[#allocation2 + $0xe2] sm:$0xff]
      %v403 = vld [vmem:[#allocation2 + $0xf2] sm:$0xff]
      %v404 = vld [vmem:[#allocation2 + $0xfa] sm:$0xff]
      %v405 = vld [vmem:[#allocation2 + $0x10a] sm:$0xff]
      %v406 = vld [vmem:[#allocation2 + $0x112] sm:$0xff]
      %v407 = vld [vmem:[#allocation2 + $0x122] sm:$0xff]
      %v408 = vld [vmem:[#allocation2 + $0x12a] sm:$0xff]
      %v409 = vld [vmem:[#allocation2 + $0x13a] sm:$0xff]
      %v410 = vld [vmem:[#allocation2 + $0x142] sm:$0xff]
      %v411 = vld [vmem:[#allocation2 + $0x152] sm:$0xff]
      %v412 = vld [vmem:[#allocation2 + $0x15a] sm:$0xff]
      %v413 = vld [vmem:[#allocation2 + $0x16a] sm:$0xff]
      %v414 = vld [vmem:[#allocation2 + $0x172] sm:$0xff]
      %v415 = vld [vmem:[%s285] sm:$0xff]
      %v416 = vld [vmem:[%s285 + $0x8] sm:$0xff]
      %v417 = vld [vmem:[%s285 + $0x18] sm:$0xff]
      %v418 = vld [vmem:[%s285 + $0x20] sm:$0xff]
      %v419 = vld [vmem:[%s285 + $0x30] sm:$0xff]
      %v420 = vld [vmem:[%s285 + $0x38] sm:$0xff]
      %v421 = vld [vmem:[%s285 + $0x48] sm:$0xff]
      %v422 = vld [vmem:[%s285 + $0x50] sm:$0xff]
      %v423 = vld [vmem:[%s285 + $0x60] sm:$0xff]
      %v424 = vld [vmem:[%s285 + $0x68] sm:$0xff]
      %v425 = vld [vmem:[%s285 + $0x78] sm:$0xff]
      %v426 = vld [vmem:[%s285 + $0x80] sm:$0xff]
      %v427 = vld [vmem:[%s285 + $0x90] sm:$0xff]
      %v428 = vld [vmem:[%s285 + $0x98] sm:$0xff]
      %v429 = vld [vmem:[%s285 + $0xa8] sm:$0xff]
      %v430 = vld [vmem:[%s285 + $0xb0] sm:$0xff]
      %v431 = vld [vmem:[%s285 + $0xc0] sm:$0xff]
      %v432 = vld [vmem:[%s285 + $0xc8] sm:$0xff]
      %v433 = vld [vmem:[%s285 + $0xd8] sm:$0xff]
      %v434 = vld [vmem:[%s285 + $0xe0] sm:$0xff]
      %v435 = vld [vmem:[%s285 + $0xf0] sm:$0xff]
      %v436 = vld [vmem:[%s285 + $0xf8] sm:$0xff]
      %v437 = vld [vmem:[%s285 + $0x108] sm:$0xff]
      %v438 = vld [vmem:[%s285 + $0x110] sm:$0xff]
      %v439 = vld [vmem:[%s285 + $0x120] sm:$0xff]
      %v440 = vld [vmem:[%s285 + $0x128] sm:$0xff]
      %v441 = vld [vmem:[%s285 + $0x138] sm:$0xff]
      %v442 = vld [vmem:[%s285 + $0x140] sm:$0xff]
      %v443 = vld [vmem:[%s285 + $0x150] sm:$0xff]
      %v444 = vld [vmem:[%s285 + $0x158] sm:$0xff]
      %v445 = vld [vmem:[%s285 + $0x168] sm:$0xff]
      %v446 = vld [vmem:[%s285 + $0x170] sm:$0xff]
      %v447 = vld [vmem:[%s285 + $0x1] sm:$0xff]
      %v448 = vld [vmem:[%s285 + $0x9] sm:$0xff]
      %v449 = vld [vmem:[%s285 + $0x19] sm:$0xff]
      %v450 = vld [vmem:[%s285 + $0x21] sm:$0xff]
      %v451 = vld [vmem:[%s285 + $0x31] sm:$0xff]
      %v452 = vld [vmem:[%s285 + $0x39] sm:$0xff]
      %v453 = vld [vmem:[%s285 + $0x49] sm:$0xff]
      %v454 = vld [vmem:[%s285 + $0x51] sm:$0xff]
      %v455 = vld [vmem:[%s285 + $0x61] sm:$0xff]
      %v456 = vld [vmem:[%s285 + $0x69] sm:$0xff]
      %v457 = vld [vmem:[%s285 + $0x79] sm:$0xff]
      %v458 = vld [vmem:[%s285 + $0x81] sm:$0xff]
      %v459 = vld [vmem:[%s285 + $0x91] sm:$0xff]
      %v460 = vld [vmem:[%s285 + $0x99] sm:$0xff]
      %v461 = vld [vmem:[%s285 + $0xa9] sm:$0xff]
      %v462 = vld [vmem:[%s285 + $0xb1] sm:$0xff]
      %v463 = vld [vmem:[%s285 + $0xc1] sm:$0xff]
      %v464 = vld [vmem:[%s285 + $0xc9] sm:$0xff]
      %v465 = vld [vmem:[%s285 + $0xd9] sm:$0xff]
      %v466 = vld [vmem:[%s285 + $0xe1] sm:$0xff]
      %v467 = vld [vmem:[%s285 + $0xf1] sm:$0xff]
      %v468 = vld [vmem:[%s285 + $0xf9] sm:$0xff]
      %v469 = vld [vmem:[%s285 + $0x109] sm:$0xff]
      %v470 = vld [vmem:[%s285 + $0x111] sm:$0xff]
      %v471 = vld [vmem:[%s285 + $0x121] sm:$0xff]
      %v472 = vld [vmem:[%s285 + $0x129] sm:$0xff]
      %v473 = vld [vmem:[%s285 + $0x139] sm:$0xff]
      %v474 = vld [vmem:[%s285 + $0x141] sm:$0xff]
      %v475 = vld [vmem:[%s285 + $0x151] sm:$0xff]
      %v476 = vld [vmem:[%s285 + $0x159] sm:$0xff]
      %v477 = vld [vmem:[%s285 + $0x169] sm:$0xff]
      %v478 = vld [vmem:[%s285 + $0x171] sm:$0xff]
      %v479 = vld [vmem:[%s285 + $0x2] sm:$0xff]
      %v480 = vld [vmem:[%s285 + $0xa] sm:$0xff]
      %v481 = vld [vmem:[%s285 + $0x1a] sm:$0xff]
      %v482 = vld [vmem:[%s285 + $0x22] sm:$0xff]
      %v483 = vld [vmem:[%s285 + $0x32] sm:$0xff]
      %v484 = vld [vmem:[%s285 + $0x3a] sm:$0xff]
      %v485 = vld [vmem:[%s285 + $0x4a] sm:$0xff]
      %v486 = vld [vmem:[%s285 + $0x52] sm:$0xff]
      %v487 = vld [vmem:[%s285 + $0x62] sm:$0xff]
      %v488 = vld [vmem:[%s285 + $0x6a] sm:$0xff]
      %v489 = vld [vmem:[%s285 + $0x7a] sm:$0xff]
      %v490 = vld [vmem:[%s285 + $0x82] sm:$0xff]
      %v491 = vld [vmem:[%s285 + $0x92] sm:$0xff]
      %v492 = vld [vmem:[%s285 + $0x9a] sm:$0xff]
      %v493 = vld [vmem:[%s285 + $0xaa] sm:$0xff]
      %v494 = vld [vmem:[%s285 + $0xb2] sm:$0xff]
      %v495 = vld [vmem:[%s285 + $0xc2] sm:$0xff]
      %v496 = vld [vmem:[%s285 + $0xca] sm:$0xff]
      %v497 = vld [vmem:[%s285 + $0xda] sm:$0xff]
      %v498 = vld [vmem:[%s285 + $0xe2] sm:$0xff]
      %v499 = vld [vmem:[%s285 + $0xf2] sm:$0xff]
      %v500 = vld [vmem:[%s285 + $0xfa] sm:$0xff]
      %v501 = vld [vmem:[%s285 + $0x10a] sm:$0xff]
      %v502 = vld [vmem:[%s285 + $0x112] sm:$0xff]
      %v503 = vld [vmem:[%s285 + $0x122] sm:$0xff]
      %v504 = vld [vmem:[%s285 + $0x12a] sm:$0xff]
      %v505 = vld [vmem:[%s285 + $0x13a] sm:$0xff]
      %v506 = vld [vmem:[%s285 + $0x142] sm:$0xff]
      %v507 = vld [vmem:[%s285 + $0x152] sm:$0xff]
      %v508 = vld [vmem:[%s285 + $0x15a] sm:$0xff]
      %v509 = vld [vmem:[%s285 + $0x16a] sm:$0xff]
      %v510 = vld [vmem:[%s285 + $0x172] sm:$0xff]
      %s511 = scalar_lea.vmem [#allocation2], 48
      %v512 = vld [vmem:[%s511] sm:$0xff]
      %v513 = vld [vmem:[%s511 + $0x8] sm:$0xff]
      %v514 = vld [vmem:[%s511 + $0x18] sm:$0xff]
      %v515 = vld [vmem:[%s511 + $0x20] sm:$0xff]
      %v516 = vld [vmem:[%s511 + $0x30] sm:$0xff]
      %v517 = vld [vmem:[%s511 + $0x38] sm:$0xff]
      %v518 = vld [vmem:[%s511 + $0x48] sm:$0xff]
      %v519 = vld [vmem:[%s511 + $0x50] sm:$0xff]
      %v520 = vld [vmem:[%s511 + $0x60] sm:$0xff]
      %v521 = vld [vmem:[%s511 + $0x68] sm:$0xff]
      %v522 = vld [vmem:[%s511 + $0x78] sm:$0xff]
      %v523 = vld [vmem:[%s511 + $0x80] sm:$0xff]
      %v524 = vld [vmem:[%s511 + $0x90] sm:$0xff]
      %v525 = vld [vmem:[%s511 + $0x98] sm:$0xff]
      %v526 = vld [vmem:[%s511 + $0xa8] sm:$0xff]
      %v527 = vld [vmem:[%s511 + $0xb0] sm:$0xff]
      %v528 = vld [vmem:[%s511 + $0xc0] sm:$0xff]
      %v529 = vld [vmem:[%s511 + $0xc8] sm:$0xff]
      %v530 = vld [vmem:[%s511 + $0xd8] sm:$0xff]
      %v531 = vld [vmem:[%s511 + $0xe0] sm:$0xff]
      %v532 = vld [vmem:[%s511 + $0xf0] sm:$0xff]
      %v533 = vld [vmem:[%s511 + $0xf8] sm:$0xff]
      %v534 = vld [vmem:[%s511 + $0x108] sm:$0xff]
      %v535 = vld [vmem:[%s511 + $0x110] sm:$0xff]
      %v536 = vld [vmem:[%s511 + $0x120] sm:$0xff]
      %v537 = vld [vmem:[%s511 + $0x128] sm:$0xff]
      %v538 = vld [vmem:[%s511 + $0x138] sm:$0xff]
      %v539 = vld [vmem:[%s511 + $0x140] sm:$0xff]
      %v540 = vld [vmem:[%s511 + $0x150] sm:$0xff]
      %v541 = vld [vmem:[%s511 + $0x158] sm:$0xff]
      %v542 = vld [vmem:[%s511 + $0x168] sm:$0xff]
      %v543 = vld [vmem:[%s511 + $0x170] sm:$0xff]
      %v544 = vld [vmem:[%s511 + $0x1] sm:$0xff]
      %v545 = vld [vmem:[%s511 + $0x9] sm:$0xff]
      %v546 = vld [vmem:[%s511 + $0x19] sm:$0xff]
      %v547 = vld [vmem:[%s511 + $0x21] sm:$0xff]
      %v548 = vld [vmem:[%s511 + $0x31] sm:$0xff]
      %v549 = vld [vmem:[%s511 + $0x39] sm:$0xff]
      %v550 = vld [vmem:[%s511 + $0x49] sm:$0xff]
      %v551 = vld [vmem:[%s511 + $0x51] sm:$0xff]
      %v552 = vld [vmem:[%s511 + $0x61] sm:$0xff]
      %v553 = vld [vmem:[%s511 + $0x69] sm:$0xff]
      %v554 = vld [vmem:[%s511 + $0x79] sm:$0xff]
      %v555 = vld [vmem:[%s511 + $0x81] sm:$0xff]
      %v556 = vld [vmem:[%s511 + $0x91] sm:$0xff]
      %v557 = vld [vmem:[%s511 + $0x99] sm:$0xff]
      %v558 = vld [vmem:[%s511 + $0xa9] sm:$0xff]
      %v559 = vld [vmem:[%s511 + $0xb1] sm:$0xff]
      %v560 = vld [vmem:[%s511 + $0xc1] sm:$0xff]
      %v561 = vld [vmem:[%s511 + $0xc9] sm:$0xff]
      %v562 = vld [vmem:[%s511 + $0xd9] sm:$0xff]
      %v563 = vld [vmem:[%s511 + $0xe1] sm:$0xff]
      %v564 = vld [vmem:[%s511 + $0xf1] sm:$0xff]
      %v565 = vld [vmem:[%s511 + $0xf9] sm:$0xff]
      %v566 = vld [vmem:[%s511 + $0x109] sm:$0xff]
      %v567 = vld [vmem:[%s511 + $0x111] sm:$0xff]
      %v568 = vld [vmem:[%s511 + $0x121] sm:$0xff]
      %v569 = vld [vmem:[%s511 + $0x129] sm:$0xff]
      %v570 = vld [vmem:[%s511 + $0x139] sm:$0xff]
      %v571 = vld [vmem:[%s511 + $0x141] sm:$0xff]
      %v572 = vld [vmem:[%s511 + $0x151] sm:$0xff]
      %v573 = vld [vmem:[%s511 + $0x159] sm:$0xff]
      %v574 = vld [vmem:[%s511 + $0x169] sm:$0xff]
      %v575 = vld [vmem:[%s511 + $0x171] sm:$0xff]
      %v576 = vld [vmem:[%s511 + $0x2] sm:$0xff]
      %v577 = vld [vmem:[%s511 + $0xa] sm:$0xff]
      %v578 = vld [vmem:[%s511 + $0x1a] sm:$0xff]
      %v579 = vld [vmem:[%s511 + $0x22] sm:$0xff]
      %v580 = vld [vmem:[%s511 + $0x32] sm:$0xff]
      %v581 = vld [vmem:[%s511 + $0x3a] sm:$0xff]
      %v582 = vld [vmem:[%s511 + $0x4a] sm:$0xff]
      %v583 = vld [vmem:[%s511 + $0x52] sm:$0xff]
      %v584 = vld [vmem:[%s511 + $0x62] sm:$0xff]
      %v585 = vld [vmem:[%s511 + $0x6a] sm:$0xff]
      %v586 = vld [vmem:[%s511 + $0x7a] sm:$0xff]
      %v587 = vld [vmem:[%s511 + $0x82] sm:$0xff]
      %v588 = vld [vmem:[%s511 + $0x92] sm:$0xff]
      %v589 = vld [vmem:[%s511 + $0x9a] sm:$0xff]
      %v590 = vld [vmem:[%s511 + $0xaa] sm:$0xff]
      %v591 = vld [vmem:[%s511 + $0xb2] sm:$0xff]
      %v592 = vld [vmem:[%s511 + $0xc2] sm:$0xff]
      %v593 = vld [vmem:[%s511 + $0xca] sm:$0xff]
      %v594 = vld [vmem:[%s511 + $0xda] sm:$0xff]
      %v595 = vld [vmem:[%s511 + $0xe2] sm:$0xff]
      %v596 = vld [vmem:[%s511 + $0xf2] sm:$0xff]
      %v597 = vld [vmem:[%s511 + $0xfa] sm:$0xff]
      %v598 = vld [vmem:[%s511 + $0x10a] sm:$0xff]
      %v599 = vld [vmem:[%s511 + $0x112] sm:$0xff]
      %v600 = vld [vmem:[%s511 + $0x122] sm:$0xff]
      %v601 = vld [vmem:[%s511 + $0x12a] sm:$0xff]
      %v602 = vld [vmem:[%s511 + $0x13a] sm:$0xff]
      %v603 = vld [vmem:[%s511 + $0x142] sm:$0xff]
      %v604 = vld [vmem:[%s511 + $0x152] sm:$0xff]
      %v605 = vld [vmem:[%s511 + $0x15a] sm:$0xff]
      %v606 = vld [vmem:[%s511 + $0x16a] sm:$0xff]
      %v607 = vld [vmem:[%s511 + $0x172] sm:$0xff]
      %v608 = vld [vmem:[%s1] sm:$0xff]
      %v609 = vld [vmem:[%s1 + $0x8] sm:$0xff]
      %v610 = vld [vmem:[%s1 + $0x10] sm:$0xff]
      %v611 = vld [vmem:[%s1 + $0x18] sm:$0xff]
      %v612 = vld [vmem:[%s1 + $0x20] sm:$0xff]
      %v613 = vld [vmem:[%s1 + $0x28] sm:$0xff]
      %v614 = vld [vmem:[%s1 + $0x30] sm:$0xff]
      %v615 = vld [vmem:[%s1 + $0x38] sm:$0xff]
      %v616 = vld [vmem:[%s1 + $0x40] sm:$0xff]
      %v617 = vld [vmem:[%s1 + $0x48] sm:$0xff]
      %v618 = vld [vmem:[%s1 + $0x50] sm:$0xff]
      %v619 = vld [vmem:[%s1 + $0x58] sm:$0xff]
      %v620 = vld [vmem:[%s1 + $0x60] sm:$0xff]
      %v621 = vld [vmem:[%s1 + $0x68] sm:$0xff]
      %v622 = vld [vmem:[%s1 + $0x70] sm:$0xff]
      %v623 = vld [vmem:[%s1 + $0x78] sm:$0xff]
      %v624 = vld [vmem:[%s1 + $0x80] sm:$0xff]
      %v625 = vld [vmem:[%s1 + $0x88] sm:$0xff]
      %v626 = vld [vmem:[%s1 + $0x90] sm:$0xff]
      %v627 = vld [vmem:[%s1 + $0x98] sm:$0xff]
      %v628 = vld [vmem:[%s1 + $0xa0] sm:$0xff]
      %v629 = vld [vmem:[%s1 + $0xa8] sm:$0xff]
      %v630 = vld [vmem:[%s1 + $0xb0] sm:$0xff]
      %v631 = vld [vmem:[%s1 + $0xb8] sm:$0xff]
      %v632 = vld [vmem:[%s1 + $0xc0] sm:$0xff]
      %v633 = vld [vmem:[%s1 + $0xc8] sm:$0xff]
      %v634 = vld [vmem:[%s1 + $0xd0] sm:$0xff]
      %v635 = vld [vmem:[%s1 + $0xd8] sm:$0xff]
      %v636 = vld [vmem:[%s1 + $0xe0] sm:$0xff]
      %v637 = vld [vmem:[%s1 + $0xe8] sm:$0xff]
      %v638 = vld [vmem:[%s1 + $0xf0] sm:$0xff]
      %v639 = vld [vmem:[%s1 + $0xf8] sm:$0xff]
      %v640 = vld [vmem:[%s1 + $0x100] sm:$0xff]
      %v641 = vld [vmem:[%s1 + $0x108] sm:$0xff]
      %v642 = vld [vmem:[%s1 + $0x110] sm:$0xff]
      %v643 = vld [vmem:[%s1 + $0x118] sm:$0xff]
      %v644 = vld [vmem:[%s1 + $0x120] sm:$0xff]
      %v645 = vld [vmem:[%s1 + $0x128] sm:$0xff]
      %v646 = vld [vmem:[%s1 + $0x130] sm:$0xff]
      %v647 = vld [vmem:[%s1 + $0x138] sm:$0xff]
      %v648 = vld [vmem:[%s1 + $0x140] sm:$0xff]
      %v649 = vld [vmem:[%s1 + $0x148] sm:$0xff]
      %v650 = vld [vmem:[%s1 + $0x150] sm:$0xff]
      %v651 = vld [vmem:[%s1 + $0x158] sm:$0xff]
      %v652 = vld [vmem:[%s1 + $0x160] sm:$0xff]
      %v653 = vld [vmem:[%s1 + $0x168] sm:$0xff]
      %v654 = vld [vmem:[%s1 + $0x170] sm:$0xff]
      %v655 = vld [vmem:[%s1 + $0x178] sm:$0xff]
      %v656 = vld [vmem:[%s1 + $0x180] sm:$0xff]
      %v657 = vld [vmem:[%s1 + $0x188] sm:$0xff]
      %v658 = vld [vmem:[%s1 + $0x190] sm:$0xff]
      %v659 = vld [vmem:[%s1 + $0x198] sm:$0xff]
      %v660 = vld [vmem:[%s1 + $0x1a0] sm:$0xff]
      %v661 = vld [vmem:[%s1 + $0x1a8] sm:$0xff]
      %v662 = vld [vmem:[%s1 + $0x1b0] sm:$0xff]
      %v663 = vld [vmem:[%s1 + $0x1b8] sm:$0xff]
      %v664 = vld [vmem:[%s1 + $0x1c0] sm:$0xff]
      %v665 = vld [vmem:[%s1 + $0x1c8] sm:$0xff]
      %v666 = vld [vmem:[%s1 + $0x1d0] sm:$0xff]
      %v667 = vld [vmem:[%s1 + $0x1d8] sm:$0xff]
      %v668 = vld [vmem:[%s1 + $0x1e0] sm:$0xff]
      %v669 = vld [vmem:[%s1 + $0x1e8] sm:$0xff]
      %v670 = vld [vmem:[%s1 + $0x1f0] sm:$0xff]
      %v671 = vld [vmem:[%s1 + $0x1f8] sm:$0xff]
      %v672 = vld [vmem:[%s1 + $0x200] sm:$0xff]
      %v673 = vld [vmem:[%s1 + $0x208] sm:$0xff]
      %v674 = vld [vmem:[%s1 + $0x210] sm:$0xff]
      %v675 = vld [vmem:[%s1 + $0x218] sm:$0xff]
      %v676 = vld [vmem:[%s1 + $0x220] sm:$0xff]
      %v677 = vld [vmem:[%s1 + $0x228] sm:$0xff]
      %v678 = vld [vmem:[%s1 + $0x230] sm:$0xff]
      %v679 = vld [vmem:[%s1 + $0x238] sm:$0xff]
      %v680 = vld [vmem:[%s1 + $0x240] sm:$0xff]
      %v681 = vld [vmem:[%s1 + $0x248] sm:$0xff]
      %v682 = vld [vmem:[%s1 + $0x250] sm:$0xff]
      %v683 = vld [vmem:[%s1 + $0x258] sm:$0xff]
      %v684 = vld [vmem:[%s1 + $0x260] sm:$0xff]
      %v685 = vld [vmem:[%s1 + $0x268] sm:$0xff]
      %v686 = vld [vmem:[%s1 + $0x270] sm:$0xff]
      %v687 = vld [vmem:[%s1 + $0x278] sm:$0xff]
      %v688 = vld [vmem:[%s1 + $0x280] sm:$0xff]
      %v689 = vld [vmem:[%s1 + $0x288] sm:$0xff]
      %v690 = vld [vmem:[%s1 + $0x290] sm:$0xff]
      %v691 = vld [vmem:[%s1 + $0x298] sm:$0xff]
      %v692 = vld [vmem:[%s1 + $0x2a0] sm:$0xff]
      %v693 = vld [vmem:[%s1 + $0x2a8] sm:$0xff]
      %v694 = vld [vmem:[%s1 + $0x2b0] sm:$0xff]
      %v695 = vld [vmem:[%s1 + $0x2b8] sm:$0xff]
      %v696 = vld [vmem:[%s1 + $0x2c0] sm:$0xff]
      %v697 = vld [vmem:[%s1 + $0x2c8] sm:$0xff]
      %v698 = vld [vmem:[%s1 + $0x2d0] sm:$0xff]
      %v699 = vld [vmem:[%s1 + $0x2d8] sm:$0xff]
      %v700 = vld [vmem:[%s1 + $0x2e0] sm:$0xff]
      %v701 = vld [vmem:[%s1 + $0x2e8] sm:$0xff]
      %v702 = vld [vmem:[%s1 + $0x2f0] sm:$0xff]
      %v703 = vld [vmem:[%s1 + $0x2f8] sm:$0xff]
      %v704 = vld [vmem:[%s1 + $0x300] sm:$0xff]
      %v705 = vld [vmem:[%s1 + $0x308] sm:$0xff]
      %v706 = vld [vmem:[%s1 + $0x310] sm:$0xff]
      %v707 = vld [vmem:[%s1 + $0x318] sm:$0xff]
      %v708 = vld [vmem:[%s1 + $0x320] sm:$0xff]
      %v709 = vld [vmem:[%s1 + $0x328] sm:$0xff]
      %v710 = vld [vmem:[%s1 + $0x330] sm:$0xff]
      %v711 = vld [vmem:[%s1 + $0x338] sm:$0xff]
      %v712 = vld [vmem:[%s1 + $0x340] sm:$0xff]
      %v713 = vld [vmem:[%s1 + $0x348] sm:$0xff]
      %v714 = vld [vmem:[%s1 + $0x350] sm:$0xff]
      %v715 = vld [vmem:[%s1 + $0x358] sm:$0xff]
      %v716 = vld [vmem:[%s1 + $0x360] sm:$0xff]
      %v717 = vld [vmem:[%s1 + $0x368] sm:$0xff]
      %v718 = vld [vmem:[%s1 + $0x370] sm:$0xff]
      %v719 = vld [vmem:[%s1 + $0x378] sm:$0xff]
      %v720 = vld [vmem:[%s1 + $0x380] sm:$0xff]
      %v721 = vld [vmem:[%s1 + $0x388] sm:$0xff]
      %v722 = vld [vmem:[%s1 + $0x390] sm:$0xff]
      %v723 = vld [vmem:[%s1 + $0x398] sm:$0xff]
      %v724 = vld [vmem:[%s1 + $0x3a0] sm:$0xff]
      %v725 = vld [vmem:[%s1 + $0x3a8] sm:$0xff]
      %v726 = vld [vmem:[%s1 + $0x3b0] sm:$0xff]
      %v727 = vld [vmem:[%s1 + $0x3b8] sm:$0xff]
      %v728 = vld [vmem:[%s1 + $0x3c0] sm:$0xff]
      %v729 = vld [vmem:[%s1 + $0x3c8] sm:$0xff]
      %v730 = vld [vmem:[%s1 + $0x3d0] sm:$0xff]
      %v731 = vld [vmem:[%s1 + $0x3d8] sm:$0xff]
      %v732 = vld [vmem:[%s1 + $0x3e0] sm:$0xff]
      %v733 = vld [vmem:[%s1 + $0x3e8] sm:$0xff]
      %v734 = vld [vmem:[%s1 + $0x3f0] sm:$0xff]
      %v735 = vld [vmem:[%s1 + $0x3f8] sm:$0xff]
      %v736 = vld [vmem:[%s1 + $0x400] sm:$0xff]
      %v737 = vld [vmem:[%s1 + $0x408] sm:$0xff]
      %v738 = vld [vmem:[%s1 + $0x410] sm:$0xff]
      %v739 = vld [vmem:[%s1 + $0x418] sm:$0xff]
      %v740 = vld [vmem:[%s1 + $0x420] sm:$0xff]
      %v741 = vld [vmem:[%s1 + $0x428] sm:$0xff]
      %v742 = vld [vmem:[%s1 + $0x430] sm:$0xff]
      %v743 = vld [vmem:[%s1 + $0x438] sm:$0xff]
      %v744 = vld [vmem:[%s1 + $0x440] sm:$0xff]
      %v745 = vld [vmem:[%s1 + $0x448] sm:$0xff]
      %v746 = vld [vmem:[%s1 + $0x450] sm:$0xff]
      %v747 = vld [vmem:[%s1 + $0x458] sm:$0xff]
      %v748 = vld [vmem:[%s1 + $0x460] sm:$0xff]
      %v749 = vld [vmem:[%s1 + $0x468] sm:$0xff]
      %v750 = vld [vmem:[%s1 + $0x470] sm:$0xff]
      %v751 = vld [vmem:[%s1 + $0x478] sm:$0xff]
      %752 = vmatprep.subr.mxu0 0.0
      %753 = vmatpush1.msra.mxu0 %v623
      %754 = vmatprep.subr.mxu0 0.0
      %755 = vmatpush1.msra.mxu0 %v622
      %756 = vmatprep.subr.mxu0 0.0
      %757 = vmatpush1.msra.mxu0 %v621
      %758 = vmatprep.subr.mxu0 0.0
      %759 = vmatpush1.msra.mxu0 %v620
      %760 = vmatprep.subr.mxu0 0.0
      %761 = vmatpush1.msra.mxu0 %v619
      %762 = vmatprep.subr.mxu0 0.0
      %763 = vmatpush1.msra.mxu0 %v618
      %764 = vmatprep.subr.mxu0 0.0
      %765 = vmatpush1.msra.mxu0 %v617
      %766 = vmatprep.subr.mxu0 0.0
      %767 = vmatpush1.msra.mxu0 %v616
      %768 = vmatprep.subr.mxu0 0.0
      %769 = vmatpush1.msra.mxu0 %v615
      %770 = vmatprep.subr.mxu0 0.0
      %771 = vmatpush1.msra.mxu0 %v614
      %772 = vmatprep.subr.mxu0 0.0
      %773 = vmatpush1.msra.mxu0 %v613
      %774 = vmatprep.subr.mxu0 0.0
      %775 = vmatpush1.msra.mxu0 %v612
      %776 = vmatprep.subr.mxu0 0.0
      %777 = vmatpush1.msra.mxu0 %v611
      %778 = vmatprep.subr.mxu0 0.0
      %779 = vmatpush1.msra.mxu0 %v610
      %780 = vmatprep.subr.mxu0 0.0
      %781 = vmatpush1.msra.mxu0 %v609
      %782 = vmatprep.subr.mxu0 0.0
      %783 = vmatpush1.msra.mxu0 %v608
      %784 = vmatprep.subr.mxu0 0.0
      %785 = vmatpush2.msra.mxu0 %v639
      %786 = vmatprep.subr.mxu0 0.0
      %787 = vmatpush2.msra.mxu0 %v638
      %788 = vmatprep.subr.mxu0 0.0
      %789 = vmatpush2.msra.mxu0 %v637
      %790 = vmatprep.subr.mxu0 0.0
      %791 = vmatpush2.msra.mxu0 %v636
      %792 = vmatprep.subr.mxu0 0.0
      %793 = vmatpush2.msra.mxu0 %v635
      %794 = vmatprep.subr.mxu0 0.0
      %795 = vmatpush2.msra.mxu0 %v634
      %796 = vmatprep.subr.mxu0 0.0
      %797 = vmatpush2.msra.mxu0 %v633
      %798 = vmatprep.subr.mxu0 0.0
      %799 = vmatpush2.msra.mxu0 %v632
      %800 = vmatprep.subr.mxu0 0.0
      %801 = vmatpush2.msra.mxu0 %v631
      %802 = vmatprep.subr.mxu0 0.0
      %803 = vmatpush2.msra.mxu0 %v630
      %804 = vmatprep.subr.mxu0 0.0
      %805 = vmatpush2.msra.mxu0 %v629
      %806 = vmatprep.subr.mxu0 0.0
      %807 = vmatpush2.msra.mxu0 %v628
      %808 = vmatprep.subr.mxu0 0.0
      %809 = vmatpush2.msra.mxu0 %v627
      %810 = vmatprep.subr.mxu0 0.0
      %811 = vmatpush2.msra.mxu0 %v626
      %812 = vmatprep.subr.mxu0 0.0
      %813 = vmatpush2.msra.mxu0 %v625
      %814 = vmatprep.subr.mxu0 0.0
      %815 = vmatpush2.msra.mxu0 %v624
      %816 = vmatprep.mubr.f32.mxu0 %v351
      %817 = vmatmul.mubr.f32.gmra.mxu0 %v319
      %v818 = vpop.f32.mrf.mxu0
      %v819 = vadd.f32 0.0, %v818
      %v820 = vpop.f32.mrf.mxu0
      %821 = vmatprep.mubr.f32.mxu0 %v352
      %822 = vmatmul.mubr.f32.gmra.mxu0 %v320
      %v823 = vpop.f32.mrf.mxu0
      %v824 = vadd.f32 0.0, %v823
      %v825 = vpop.f32.mrf.mxu0
      %826 = vmatprep.mubr.f32.mxu0 %v353
      %827 = vmatmul.mubr.f32.gmra.mxu0 %v321
      %v828 = vpop.f32.mrf.mxu0
      %v829 = vadd.f32 0.0, %v828
      %v830 = vpop.f32.mrf.mxu0
      %831 = vmatprep.mubr.f32.mxu0 %v354
      %832 = vmatmul.mubr.f32.gmra.mxu0 %v322
      %v833 = vpop.f32.mrf.mxu0
      %v834 = vadd.f32 0.0, %v833
      %v835 = vpop.f32.mrf.mxu0
      %836 = vmatprep.mubr.f32.mxu0 %v355
      %837 = vmatmul.mubr.f32.gmra.mxu0 %v323
      %v838 = vpop.f32.mrf.mxu0
      %v839 = vadd.f32 0.0, %v838
      %v840 = vpop.f32.mrf.mxu0
      %841 = vmatprep.mubr.f32.mxu0 %v356
      %842 = vmatmul.mubr.f32.gmra.mxu0 %v324
      %v843 = vpop.f32.mrf.mxu0
      %v844 = vadd.f32 0.0, %v843
      %v845 = vpop.f32.mrf.mxu0
      %846 = vmatprep.mubr.f32.mxu0 %v357
      %847 = vmatmul.mubr.f32.gmra.mxu0 %v325
      %v848 = vpop.f32.mrf.mxu0
      %v849 = vadd.f32 0.0, %v848
      %v850 = vpop.f32.mrf.mxu0
      %851 = vmatprep.mubr.f32.mxu0 %v358
      %852 = vmatmul.mubr.f32.gmra.mxu0 %v326
      %v853 = vpop.f32.mrf.mxu0
      %v854 = vadd.f32 0.0, %v853
      %v855 = vpop.f32.mrf.mxu0
      %856 = vmatprep.mubr.f32.mxu0 %v359
      %857 = vmatmul.mubr.f32.gmra.mxu0 %v327
      %v858 = vpop.f32.mrf.mxu0
      %v859 = vadd.f32 0.0, %v858
      %v860 = vpop.f32.mrf.mxu0
      %861 = vmatprep.mubr.f32.mxu0 %v360
      %862 = vmatmul.mubr.f32.gmra.mxu0 %v328
      %v863 = vpop.f32.mrf.mxu0
      %v864 = vadd.f32 0.0, %v863
      %v865 = vpop.f32.mrf.mxu0
      %866 = vmatprep.mubr.f32.mxu0 %v361
      %867 = vmatmul.mubr.f32.gmra.mxu0 %v329
      %v868 = vpop.f32.mrf.mxu0
      %v869 = vadd.f32 0.0, %v868
      %v870 = vpop.f32.mrf.mxu0
      %871 = vmatprep.mubr.f32.mxu0 %v362
      %872 = vmatmul.mubr.f32.gmra.mxu0 %v330
      %v873 = vpop.f32.mrf.mxu0
      %v874 = vadd.f32 0.0, %v873
      %v875 = vpop.f32.mrf.mxu0
      %876 = vmatprep.mubr.f32.mxu0 %v363
      %877 = vmatmul.mubr.f32.gmra.mxu0 %v331
      %v878 = vpop.f32.mrf.mxu0
      %v879 = vadd.f32 0.0, %v878
      %v880 = vpop.f32.mrf.mxu0
      %881 = vmatprep.mubr.f32.mxu0 %v364
      %882 = vmatmul.mubr.f32.gmra.mxu0 %v332
      %v883 = vpop.f32.mrf.mxu0
      %v884 = vadd.f32 0.0, %v883
      %v885 = vpop.f32.mrf.mxu0
      %886 = vmatprep.mubr.f32.mxu0 %v365
      %887 = vmatmul.mubr.f32.gmra.mxu0 %v333
      %v888 = vpop.f32.mrf.mxu0
      %v889 = vadd.f32 0.0, %v888
      %v890 = vpop.f32.mrf.mxu0
      %891 = vmatprep.mubr.f32.mxu0 %v366
      %892 = vmatmul.mubr.f32.gmra.mxu0 %v334
      %v893 = vpop.f32.mrf.mxu0
      %v894 = vadd.f32 0.0, %v893
      %v895 = vpop.f32.mrf.mxu0
      %896 = vmatprep.mubr.f32.mxu0 %v367
      %897 = vmatmul.mubr.f32.gmra.mxu0 %v335
      %v898 = vpop.f32.mrf.mxu0
      %v899 = vadd.f32 0.0, %v898
      %v900 = vpop.f32.mrf.mxu0
      %901 = vmatprep.mubr.f32.mxu0 %v368
      %902 = vmatmul.mubr.f32.gmra.mxu0 %v336
      %v903 = vpop.f32.mrf.mxu0
      %v904 = vadd.f32 0.0, %v903
      %v905 = vpop.f32.mrf.mxu0
      %906 = vmatprep.mubr.f32.mxu0 %v369
      %907 = vmatmul.mubr.f32.gmra.mxu0 %v337
      %v908 = vpop.f32.mrf.mxu0
      %v909 = vadd.f32 0.0, %v908
      %v910 = vpop.f32.mrf.mxu0
      %911 = vmatprep.mubr.f32.mxu0 %v370
      %912 = vmatmul.mubr.f32.gmra.mxu0 %v338
      %v913 = vpop.f32.mrf.mxu0
      %v914 = vadd.f32 0.0, %v913
      %v915 = vpop.f32.mrf.mxu0
      %916 = vmatprep.mubr.f32.mxu0 %v371
      %917 = vmatmul.mubr.f32.gmra.mxu0 %v339
      %v918 = vpop.f32.mrf.mxu0
      %v919 = vadd.f32 0.0, %v918
      %v920 = vpop.f32.mrf.mxu0
      %921 = vmatprep.mubr.f32.mxu0 %v372
      %922 = vmatmul.mubr.f32.gmra.mxu0 %v340
      %v923 = vpop.f32.mrf.mxu0
      %v924 = vadd.f32 0.0, %v923
      %v925 = vpop.f32.mrf.mxu0
      %926 = vmatprep.mubr.f32.mxu0 %v373
      %927 = vmatmul.mubr.f32.gmra.mxu0 %v341
      %v928 = vpop.f32.mrf.mxu0
      %v929 = vadd.f32 0.0, %v928
      %v930 = vpop.f32.mrf.mxu0
      %931 = vmatprep.mubr.f32.mxu0 %v374
      %932 = vmatmul.mubr.f32.gmra.mxu0 %v342
      %v933 = vpop.f32.mrf.mxu0
      %v934 = vadd.f32 0.0, %v933
      %v935 = vpop.f32.mrf.mxu0
      %936 = vmatprep.mubr.f32.mxu0 %v375
      %937 = vmatmul.mubr.f32.gmra.mxu0 %v343
      %v938 = vpop.f32.mrf.mxu0
      %v939 = vadd.f32 0.0, %v938
      %v940 = vpop.f32.mrf.mxu0
      %941 = vmatprep.mubr.f32.mxu0 %v376
      %942 = vmatmul.mubr.f32.gmra.mxu0 %v344
      %v943 = vpop.f32.mrf.mxu0
      %v944 = vadd.f32 0.0, %v943
      %v945 = vpop.f32.mrf.mxu0
      %946 = vmatprep.mubr.f32.mxu0 %v377
      %947 = vmatmul.mubr.f32.gmra.mxu0 %v345
      %v948 = vpop.f32.mrf.mxu0
      %v949 = vadd.f32 0.0, %v948
      %v950 = vpop.f32.mrf.mxu0
      %951 = vmatprep.mubr.f32.mxu0 %v378
      %952 = vmatmul.mubr.f32.gmra.mxu0 %v346
      %v953 = vpop.f32.mrf.mxu0
      %v954 = vadd.f32 0.0, %v953
      %v955 = vpop.f32.mrf.mxu0
      %956 = vmatprep.mubr.f32.mxu0 %v379
      %957 = vmatmul.mubr.f32.gmra.mxu0 %v347
      %v958 = vpop.f32.mrf.mxu0
      %v959 = vadd.f32 0.0, %v958
      %v960 = vpop.f32.mrf.mxu0
      %961 = vmatprep.mubr.f32.mxu0 %v380
      %962 = vmatmul.mubr.f32.gmra.mxu0 %v348
      %v963 = vpop.f32.mrf.mxu0
      %v964 = vadd.f32 0.0, %v963
      %v965 = vpop.f32.mrf.mxu0
      %966 = vmatprep.mubr.f32.mxu0 %v381
      %967 = vmatmul.mubr.f32.gmra.mxu0 %v349
      %v968 = vpop.f32.mrf.mxu0
      %v969 = vadd.f32 0.0, %v968
      %v970 = vpop.f32.mrf.mxu0
      %971 = vmatprep.mubr.f32.mxu0 %v382
      %972 = vmatmul.mubr.f32.gmra.mxu0 %v350
      %v973 = vpop.f32.mrf.mxu0
      %v974 = vadd.f32 0.0, %v973
      %v975 = vpop.f32.mrf.mxu0
      %976 = vdwg.mxu0
      %977 = vmatprep.subr.mxu0 0.0
      %978 = vmatpush1.msra.mxu0 %v655
      %979 = vmatprep.subr.mxu0 0.0
      %980 = vmatpush1.msra.mxu0 %v654
      %981 = vmatprep.subr.mxu0 0.0
      %982 = vmatpush1.msra.mxu0 %v653
      %983 = vmatprep.subr.mxu0 0.0
      %984 = vmatpush1.msra.mxu0 %v652
      %985 = vmatprep.subr.mxu0 0.0
      %986 = vmatpush1.msra.mxu0 %v651
      %987 = vmatprep.subr.mxu0 0.0
      %988 = vmatpush1.msra.mxu0 %v650
      %989 = vmatprep.subr.mxu0 0.0
      %990 = vmatpush1.msra.mxu0 %v649
      %991 = vmatprep.subr.mxu0 0.0
      %992 = vmatpush1.msra.mxu0 %v648
      %993 = vmatprep.subr.mxu0 0.0
      %994 = vmatpush1.msra.mxu0 %v647
      %995 = vmatprep.subr.mxu0 0.0
      %996 = vmatpush1.msra.mxu0 %v646
      %997 = vmatprep.subr.mxu0 0.0
      %998 = vmatpush1.msra.mxu0 %v645
      %999 = vmatprep.subr.mxu0 0.0
      %1000 = vmatpush1.msra.mxu0 %v644
      %1001 = vmatprep.subr.mxu0 0.0
      %1002 = vmatpush1.msra.mxu0 %v643
      %1003 = vmatprep.subr.mxu0 0.0
      %1004 = vmatpush1.msra.mxu0 %v642
      %1005 = vmatprep.subr.mxu0 0.0
      %1006 = vmatpush1.msra.mxu0 %v641
      %1007 = vmatprep.subr.mxu0 0.0
      %1008 = vmatpush1.msra.mxu0 %v640
      %1009 = vmatprep.subr.mxu0 0.0
      %1010 = vmatpush2.msra.mxu0 %v671
      %1011 = vmatprep.subr.mxu0 0.0
      %1012 = vmatpush2.msra.mxu0 %v670
      %1013 = vmatprep.subr.mxu0 0.0
      %1014 = vmatpush2.msra.mxu0 %v669
      %1015 = vmatprep.subr.mxu0 0.0
      %1016 = vmatpush2.msra.mxu0 %v668
      %1017 = vmatprep.subr.mxu0 0.0
      %1018 = vmatpush2.msra.mxu0 %v667
      %1019 = vmatprep.subr.mxu0 0.0
      %1020 = vmatpush2.msra.mxu0 %v666
      %1021 = vmatprep.subr.mxu0 0.0
      %1022 = vmatpush2.msra.mxu0 %v665
      %1023 = vmatprep.subr.mxu0 0.0
      %1024 = vmatpush2.msra.mxu0 %v664
      %1025 = vmatprep.subr.mxu0 0.0
      %1026 = vmatpush2.msra.mxu0 %v663
      %1027 = vmatprep.subr.mxu0 0.0
      %1028 = vmatpush2.msra.mxu0 %v662
      %1029 = vmatprep.subr.mxu0 0.0
      %1030 = vmatpush2.msra.mxu0 %v661
      %1031 = vmatprep.subr.mxu0 0.0
      %1032 = vmatpush2.msra.mxu0 %v660
      %1033 = vmatprep.subr.mxu0 0.0
      %1034 = vmatpush2.msra.mxu0 %v659
      %1035 = vmatprep.subr.mxu0 0.0
      %1036 = vmatpush2.msra.mxu0 %v658
      %1037 = vmatprep.subr.mxu0 0.0
      %1038 = vmatpush2.msra.mxu0 %v657
      %1039 = vmatprep.subr.mxu0 0.0
      %1040 = vmatpush2.msra.mxu0 %v656
      %1041 = vmatprep.mubr.f32.mxu0 %v415
      %1042 = vmatmul.mubr.f32.gmra.mxu0 %v383
      %v1043 = vpop.f32.mrf.mxu0
      %v1044 = vadd.f32 %v819, %v1043
      %v1045 = vpop.f32.mrf.mxu0
      %1046 = vmatprep.mubr.f32.mxu0 %v416
      %1047 = vmatmul.mubr.f32.gmra.mxu0 %v384
      %v1048 = vpop.f32.mrf.mxu0
      %v1049 = vadd.f32 %v824, %v1048
      %v1050 = vpop.f32.mrf.mxu0
      %1051 = vmatprep.mubr.f32.mxu0 %v417
      %1052 = vmatmul.mubr.f32.gmra.mxu0 %v385
      %v1053 = vpop.f32.mrf.mxu0
      %v1054 = vadd.f32 %v829, %v1053
      %v1055 = vpop.f32.mrf.mxu0
      %1056 = vmatprep.mubr.f32.mxu0 %v418
      %1057 = vmatmul.mubr.f32.gmra.mxu0 %v386
      %v1058 = vpop.f32.mrf.mxu0
      %v1059 = vadd.f32 %v834, %v1058
      %v1060 = vpop.f32.mrf.mxu0
      %1061 = vmatprep.mubr.f32.mxu0 %v419
      %1062 = vmatmul.mubr.f32.gmra.mxu0 %v387
      %v1063 = vpop.f32.mrf.mxu0
      %v1064 = vadd.f32 %v839, %v1063
      %v1065 = vpop.f32.mrf.mxu0
      %1066 = vmatprep.mubr.f32.mxu0 %v420
      %1067 = vmatmul.mubr.f32.gmra.mxu0 %v388
      %v1068 = vpop.f32.mrf.mxu0
      %v1069 = vadd.f32 %v844, %v1068
      %v1070 = vpop.f32.mrf.mxu0
      %1071 = vmatprep.mubr.f32.mxu0 %v421
      %1072 = vmatmul.mubr.f32.gmra.mxu0 %v389
      %v1073 = vpop.f32.mrf.mxu0
      %v1074 = vadd.f32 %v849, %v1073
      %v1075 = vpop.f32.mrf.mxu0
      %1076 = vmatprep.mubr.f32.mxu0 %v422
      %1077 = vmatmul.mubr.f32.gmra.mxu0 %v390
      %v1078 = vpop.f32.mrf.mxu0
      %v1079 = vadd.f32 %v854, %v1078
      %v1080 = vpop.f32.mrf.mxu0
      %1081 = vmatprep.mubr.f32.mxu0 %v423
      %1082 = vmatmul.mubr.f32.gmra.mxu0 %v391
      %v1083 = vpop.f32.mrf.mxu0
      %v1084 = vadd.f32 %v859, %v1083
      %v1085 = vpop.f32.mrf.mxu0
      %1086 = vmatprep.mubr.f32.mxu0 %v424
      %1087 = vmatmul.mubr.f32.gmra.mxu0 %v392
      %v1088 = vpop.f32.mrf.mxu0
      %v1089 = vadd.f32 %v864, %v1088
      %v1090 = vpop.f32.mrf.mxu0
      %1091 = vmatprep.mubr.f32.mxu0 %v425
      %1092 = vmatmul.mubr.f32.gmra.mxu0 %v393
      %v1093 = vpop.f32.mrf.mxu0
      %v1094 = vadd.f32 %v869, %v1093
      %v1095 = vpop.f32.mrf.mxu0
      %1096 = vmatprep.mubr.f32.mxu0 %v426
      %1097 = vmatmul.mubr.f32.gmra.mxu0 %v394
      %v1098 = vpop.f32.mrf.mxu0
      %v1099 = vadd.f32 %v874, %v1098
      %v1100 = vpop.f32.mrf.mxu0
      %1101 = vmatprep.mubr.f32.mxu0 %v427
      %1102 = vmatmul.mubr.f32.gmra.mxu0 %v395
      %v1103 = vpop.f32.mrf.mxu0
      %v1104 = vadd.f32 %v879, %v1103
      %v1105 = vpop.f32.mrf.mxu0
      %1106 = vmatprep.mubr.f32.mxu0 %v428
      %1107 = vmatmul.mubr.f32.gmra.mxu0 %v396
      %v1108 = vpop.f32.mrf.mxu0
      %v1109 = vadd.f32 %v884, %v1108
      %v1110 = vpop.f32.mrf.mxu0
      %1111 = vmatprep.mubr.f32.mxu0 %v429
      %1112 = vmatmul.mubr.f32.gmra.mxu0 %v397
      %v1113 = vpop.f32.mrf.mxu0
      %v1114 = vadd.f32 %v889, %v1113
      %v1115 = vpop.f32.mrf.mxu0
      %1116 = vmatprep.mubr.f32.mxu0 %v430
      %1117 = vmatmul.mubr.f32.gmra.mxu0 %v398
      %v1118 = vpop.f32.mrf.mxu0
      %v1119 = vadd.f32 %v894, %v1118
      %v1120 = vpop.f32.mrf.mxu0
      %1121 = vmatprep.mubr.f32.mxu0 %v431
      %1122 = vmatmul.mubr.f32.gmra.mxu0 %v399
      %v1123 = vpop.f32.mrf.mxu0
      %v1124 = vadd.f32 %v899, %v1123
      %v1125 = vpop.f32.mrf.mxu0
      %1126 = vmatprep.mubr.f32.mxu0 %v432
      %1127 = vmatmul.mubr.f32.gmra.mxu0 %v400
      %v1128 = vpop.f32.mrf.mxu0
      %v1129 = vadd.f32 %v904, %v1128
      %v1130 = vpop.f32.mrf.mxu0
      %1131 = vmatprep.mubr.f32.mxu0 %v433
      %1132 = vmatmul.mubr.f32.gmra.mxu0 %v401
      %v1133 = vpop.f32.mrf.mxu0
      %v1134 = vadd.f32 %v909, %v1133
      %v1135 = vpop.f32.mrf.mxu0
      %1136 = vmatprep.mubr.f32.mxu0 %v434
      %1137 = vmatmul.mubr.f32.gmra.mxu0 %v402
      %v1138 = vpop.f32.mrf.mxu0
      %v1139 = vadd.f32 %v914, %v1138
      %v1140 = vpop.f32.mrf.mxu0
      %1141 = vmatprep.mubr.f32.mxu0 %v435
      %1142 = vmatmul.mubr.f32.gmra.mxu0 %v403
      %v1143 = vpop.f32.mrf.mxu0
      %v1144 = vadd.f32 %v919, %v1143
      %v1145 = vpop.f32.mrf.mxu0
      %1146 = vmatprep.mubr.f32.mxu0 %v436
      %1147 = vmatmul.mubr.f32.gmra.mxu0 %v404
      %v1148 = vpop.f32.mrf.mxu0
      %v1149 = vadd.f32 %v924, %v1148
      %v1150 = vpop.f32.mrf.mxu0
      %1151 = vmatprep.mubr.f32.mxu0 %v437
      %1152 = vmatmul.mubr.f32.gmra.mxu0 %v405
      %v1153 = vpop.f32.mrf.mxu0
      %v1154 = vadd.f32 %v929, %v1153
      %v1155 = vpop.f32.mrf.mxu0
      %1156 = vmatprep.mubr.f32.mxu0 %v438
      %1157 = vmatmul.mubr.f32.gmra.mxu0 %v406
      %v1158 = vpop.f32.mrf.mxu0
      %v1159 = vadd.f32 %v934, %v1158
      %v1160 = vpop.f32.mrf.mxu0
      %1161 = vmatprep.mubr.f32.mxu0 %v439
      %1162 = vmatmul.mubr.f32.gmra.mxu0 %v407
      %v1163 = vpop.f32.mrf.mxu0
      %v1164 = vadd.f32 %v939, %v1163
      %v1165 = vpop.f32.mrf.mxu0
      %1166 = vmatprep.mubr.f32.mxu0 %v440
      %1167 = vmatmul.mubr.f32.gmra.mxu0 %v408
      %v1168 = vpop.f32.mrf.mxu0
      %v1169 = vadd.f32 %v944, %v1168
      %v1170 = vpop.f32.mrf.mxu0
      %1171 = vmatprep.mubr.f32.mxu0 %v441
      %1172 = vmatmul.mubr.f32.gmra.mxu0 %v409
      %v1173 = vpop.f32.mrf.mxu0
      %v1174 = vadd.f32 %v949, %v1173
      %v1175 = vpop.f32.mrf.mxu0
      %1176 = vmatprep.mubr.f32.mxu0 %v442
      %1177 = vmatmul.mubr.f32.gmra.mxu0 %v410
      %v1178 = vpop.f32.mrf.mxu0
      %v1179 = vadd.f32 %v954, %v1178
      %v1180 = vpop.f32.mrf.mxu0
      %1181 = vmatprep.mubr.f32.mxu0 %v443
      %1182 = vmatmul.mubr.f32.gmra.mxu0 %v411
      %v1183 = vpop.f32.mrf.mxu0
      %v1184 = vadd.f32 %v959, %v1183
      %v1185 = vpop.f32.mrf.mxu0
      %1186 = vmatprep.mubr.f32.mxu0 %v444
      %1187 = vmatmul.mubr.f32.gmra.mxu0 %v412
      %v1188 = vpop.f32.mrf.mxu0
      %v1189 = vadd.f32 %v964, %v1188
      %v1190 = vpop.f32.mrf.mxu0
      %1191 = vmatprep.mubr.f32.mxu0 %v445
      %1192 = vmatmul.mubr.f32.gmra.mxu0 %v413
      %v1193 = vpop.f32.mrf.mxu0
      %v1194 = vadd.f32 %v969, %v1193
      %v1195 = vpop.f32.mrf.mxu0
      %1196 = vmatprep.mubr.f32.mxu0 %v446
      %1197 = vmatmul.mubr.f32.gmra.mxu0 %v414
      %v1198 = vpop.f32.mrf.mxu0
      %v1199 = vadd.f32 %v974, %v1198
      %v1200 = vpop.f32.mrf.mxu0
      %1201 = vdwg.mxu0
      %1202 = vmatprep.subr.mxu0 0.0
      %1203 = vmatpush1.msra.mxu0 %v687
      %1204 = vmatprep.subr.mxu0 0.0
      %1205 = vmatpush1.msra.mxu0 %v686
      %1206 = vmatprep.subr.mxu0 0.0
      %1207 = vmatpush1.msra.mxu0 %v685
      %1208 = vmatprep.subr.mxu0 0.0
      %1209 = vmatpush1.msra.mxu0 %v684
      %1210 = vmatprep.subr.mxu0 0.0
      %1211 = vmatpush1.msra.mxu0 %v683
      %1212 = vmatprep.subr.mxu0 0.0
      %1213 = vmatpush1.msra.mxu0 %v682
      %1214 = vmatprep.subr.mxu0 0.0
      %1215 = vmatpush1.msra.mxu0 %v681
      %1216 = vmatprep.subr.mxu0 0.0
      %1217 = vmatpush1.msra.mxu0 %v680
      %1218 = vmatprep.subr.mxu0 0.0
      %1219 = vmatpush1.msra.mxu0 %v679
      %1220 = vmatprep.subr.mxu0 0.0
      %1221 = vmatpush1.msra.mxu0 %v678
      %1222 = vmatprep.subr.mxu0 0.0
      %1223 = vmatpush1.msra.mxu0 %v677
      %1224 = vmatprep.subr.mxu0 0.0
      %1225 = vmatpush1.msra.mxu0 %v676
      %1226 = vmatprep.subr.mxu0 0.0
      %1227 = vmatpush1.msra.mxu0 %v675
      %1228 = vmatprep.subr.mxu0 0.0
      %1229 = vmatpush1.msra.mxu0 %v674
      %1230 = vmatprep.subr.mxu0 0.0
      %1231 = vmatpush1.msra.mxu0 %v673
      %1232 = vmatprep.subr.mxu0 0.0
      %1233 = vmatpush1.msra.mxu0 %v672
      %1234 = vmatprep.subr.mxu0 0.0
      %1235 = vmatpush2.msra.mxu0 %v703
      %1236 = vmatprep.subr.mxu0 0.0
      %1237 = vmatpush2.msra.mxu0 %v702
      %1238 = vmatprep.subr.mxu0 0.0
      %1239 = vmatpush2.msra.mxu0 %v701
      %1240 = vmatprep.subr.mxu0 0.0
      %1241 = vmatpush2.msra.mxu0 %v700
      %1242 = vmatprep.subr.mxu0 0.0
      %1243 = vmatpush2.msra.mxu0 %v699
      %1244 = vmatprep.subr.mxu0 0.0
      %1245 = vmatpush2.msra.mxu0 %v698
      %1246 = vmatprep.subr.mxu0 0.0
      %1247 = vmatpush2.msra.mxu0 %v697
      %1248 = vmatprep.subr.mxu0 0.0
      %1249 = vmatpush2.msra.mxu0 %v696
      %1250 = vmatprep.subr.mxu0 0.0
      %1251 = vmatpush2.msra.mxu0 %v695
      %1252 = vmatprep.subr.mxu0 0.0
      %1253 = vmatpush2.msra.mxu0 %v694
      %1254 = vmatprep.subr.mxu0 0.0
      %1255 = vmatpush2.msra.mxu0 %v693
      %1256 = vmatprep.subr.mxu0 0.0
      %1257 = vmatpush2.msra.mxu0 %v692
      %1258 = vmatprep.subr.mxu0 0.0
      %1259 = vmatpush2.msra.mxu0 %v691
      %1260 = vmatprep.subr.mxu0 0.0
      %1261 = vmatpush2.msra.mxu0 %v690
      %1262 = vmatprep.subr.mxu0 0.0
      %1263 = vmatpush2.msra.mxu0 %v689
      %1264 = vmatprep.subr.mxu0 0.0
      %1265 = vmatpush2.msra.mxu0 %v688
      %1266 = vmatprep.mubr.f32.mxu0 %v479
      %1267 = vmatmul.mubr.f32.gmra.mxu0 %v447
      %v1268 = vpop.f32.mrf.mxu0
      %v1269 = vadd.f32 %v1044, %v1268
      %v1270 = vpop.f32.mrf.mxu0
      %1271 = vmatprep.mubr.f32.mxu0 %v480
      %1272 = vmatmul.mubr.f32.gmra.mxu0 %v448
      %v1273 = vpop.f32.mrf.mxu0
      %v1274 = vadd.f32 %v1049, %v1273
      %v1275 = vpop.f32.mrf.mxu0
      %1276 = vmatprep.mubr.f32.mxu0 %v481
      %1277 = vmatmul.mubr.f32.gmra.mxu0 %v449
      %v1278 = vpop.f32.mrf.mxu0
      %v1279 = vadd.f32 %v1054, %v1278
      %v1280 = vpop.f32.mrf.mxu0
      %1281 = vmatprep.mubr.f32.mxu0 %v482
      %1282 = vmatmul.mubr.f32.gmra.mxu0 %v450
      %v1283 = vpop.f32.mrf.mxu0
      %v1284 = vadd.f32 %v1059, %v1283
      %v1285 = vpop.f32.mrf.mxu0
      %1286 = vmatprep.mubr.f32.mxu0 %v483
      %1287 = vmatmul.mubr.f32.gmra.mxu0 %v451
      %v1288 = vpop.f32.mrf.mxu0
      %v1289 = vadd.f32 %v1064, %v1288
      %v1290 = vpop.f32.mrf.mxu0
      %1291 = vmatprep.mubr.f32.mxu0 %v484
      %1292 = vmatmul.mubr.f32.gmra.mxu0 %v452
      %v1293 = vpop.f32.mrf.mxu0
      %v1294 = vadd.f32 %v1069, %v1293
      %v1295 = vpop.f32.mrf.mxu0
      %1296 = vmatprep.mubr.f32.mxu0 %v485
      %1297 = vmatmul.mubr.f32.gmra.mxu0 %v453
      %v1298 = vpop.f32.mrf.mxu0
      %v1299 = vadd.f32 %v1074, %v1298
      %v1300 = vpop.f32.mrf.mxu0
      %1301 = vmatprep.mubr.f32.mxu0 %v486
      %1302 = vmatmul.mubr.f32.gmra.mxu0 %v454
      %v1303 = vpop.f32.mrf.mxu0
      %v1304 = vadd.f32 %v1079, %v1303
      %v1305 = vpop.f32.mrf.mxu0
      %1306 = vmatprep.mubr.f32.mxu0 %v487
      %1307 = vmatmul.mubr.f32.gmra.mxu0 %v455
      %v1308 = vpop.f32.mrf.mxu0
      %v1309 = vadd.f32 %v1084, %v1308
      %v1310 = vpop.f32.mrf.mxu0
      %1311 = vmatprep.mubr.f32.mxu0 %v488
      %1312 = vmatmul.mubr.f32.gmra.mxu0 %v456
      %v1313 = vpop.f32.mrf.mxu0
      %v1314 = vadd.f32 %v1089, %v1313
      %v1315 = vpop.f32.mrf.mxu0
      %1316 = vmatprep.mubr.f32.mxu0 %v489
      %1317 = vmatmul.mubr.f32.gmra.mxu0 %v457
      %v1318 = vpop.f32.mrf.mxu0
      %v1319 = vadd.f32 %v1094, %v1318
      %v1320 = vpop.f32.mrf.mxu0
      %1321 = vmatprep.mubr.f32.mxu0 %v490
      %1322 = vmatmul.mubr.f32.gmra.mxu0 %v458
      %v1323 = vpop.f32.mrf.mxu0
      %v1324 = vadd.f32 %v1099, %v1323
      %v1325 = vpop.f32.mrf.mxu0
      %1326 = vmatprep.mubr.f32.mxu0 %v491
      %1327 = vmatmul.mubr.f32.gmra.mxu0 %v459
      %v1328 = vpop.f32.mrf.mxu0
      %v1329 = vadd.f32 %v1104, %v1328
      %v1330 = vpop.f32.mrf.mxu0
      %1331 = vmatprep.mubr.f32.mxu0 %v492
      %1332 = vmatmul.mubr.f32.gmra.mxu0 %v460
      %v1333 = vpop.f32.mrf.mxu0
      %v1334 = vadd.f32 %v1109, %v1333
      %v1335 = vpop.f32.mrf.mxu0
      %1336 = vmatprep.mubr.f32.mxu0 %v493
      %1337 = vmatmul.mubr.f32.gmra.mxu0 %v461
      %v1338 = vpop.f32.mrf.mxu0
      %v1339 = vadd.f32 %v1114, %v1338
      %v1340 = vpop.f32.mrf.mxu0
      %1341 = vmatprep.mubr.f32.mxu0 %v494
      %1342 = vmatmul.mubr.f32.gmra.mxu0 %v462
      %v1343 = vpop.f32.mrf.mxu0
      %v1344 = vadd.f32 %v1119, %v1343
      %v1345 = vpop.f32.mrf.mxu0
      %1346 = vmatprep.mubr.f32.mxu0 %v495
      %1347 = vmatmul.mubr.f32.gmra.mxu0 %v463
      %v1348 = vpop.f32.mrf.mxu0
      %v1349 = vadd.f32 %v1124, %v1348
      %v1350 = vpop.f32.mrf.mxu0
      %1351 = vmatprep.mubr.f32.mxu0 %v496
      %1352 = vmatmul.mubr.f32.gmra.mxu0 %v464
      %v1353 = vpop.f32.mrf.mxu0
      %v1354 = vadd.f32 %v1129, %v1353
      %v1355 = vpop.f32.mrf.mxu0
      %1356 = vmatprep.mubr.f32.mxu0 %v497
      %1357 = vmatmul.mubr.f32.gmra.mxu0 %v465
      %v1358 = vpop.f32.mrf.mxu0
      %v1359 = vadd.f32 %v1134, %v1358
      %v1360 = vpop.f32.mrf.mxu0
      %1361 = vmatprep.mubr.f32.mxu0 %v498
      %1362 = vmatmul.mubr.f32.gmra.mxu0 %v466
      %v1363 = vpop.f32.mrf.mxu0
      %v1364 = vadd.f32 %v1139, %v1363
      %v1365 = vpop.f32.mrf.mxu0
      %1366 = vmatprep.mubr.f32.mxu0 %v499
      %1367 = vmatmul.mubr.f32.gmra.mxu0 %v467
      %v1368 = vpop.f32.mrf.mxu0
      %v1369 = vadd.f32 %v1144, %v1368
      %v1370 = vpop.f32.mrf.mxu0
      %1371 = vmatprep.mubr.f32.mxu0 %v500
      %1372 = vmatmul.mubr.f32.gmra.mxu0 %v468
      %v1373 = vpop.f32.mrf.mxu0
      %v1374 = vadd.f32 %v1149, %v1373
      %v1375 = vpop.f32.mrf.mxu0
      %1376 = vmatprep.mubr.f32.mxu0 %v501
      %1377 = vmatmul.mubr.f32.gmra.mxu0 %v469
      %v1378 = vpop.f32.mrf.mxu0
      %v1379 = vadd.f32 %v1154, %v1378
      %v1380 = vpop.f32.mrf.mxu0
      %1381 = vmatprep.mubr.f32.mxu0 %v502
      %1382 = vmatmul.mubr.f32.gmra.mxu0 %v470
      %v1383 = vpop.f32.mrf.mxu0
      %v1384 = vadd.f32 %v1159, %v1383
      %v1385 = vpop.f32.mrf.mxu0
      %1386 = vmatprep.mubr.f32.mxu0 %v503
      %1387 = vmatmul.mubr.f32.gmra.mxu0 %v471
      %v1388 = vpop.f32.mrf.mxu0
      %v1389 = vadd.f32 %v1164, %v1388
      %v1390 = vpop.f32.mrf.mxu0
      %1391 = vmatprep.mubr.f32.mxu0 %v504
      %1392 = vmatmul.mubr.f32.gmra.mxu0 %v472
      %v1393 = vpop.f32.mrf.mxu0
      %v1394 = vadd.f32 %v1169, %v1393
      %v1395 = vpop.f32.mrf.mxu0
      %1396 = vmatprep.mubr.f32.mxu0 %v505
      %1397 = vmatmul.mubr.f32.gmra.mxu0 %v473
      %v1398 = vpop.f32.mrf.mxu0
      %v1399 = vadd.f32 %v1174, %v1398
      %v1400 = vpop.f32.mrf.mxu0
      %1401 = vmatprep.mubr.f32.mxu0 %v506
      %1402 = vmatmul.mubr.f32.gmra.mxu0 %v474
      %v1403 = vpop.f32.mrf.mxu0
      %v1404 = vadd.f32 %v1179, %v1403
      %v1405 = vpop.f32.mrf.mxu0
      %1406 = vmatprep.mubr.f32.mxu0 %v507
      %1407 = vmatmul.mubr.f32.gmra.mxu0 %v475
      %v1408 = vpop.f32.mrf.mxu0
      %v1409 = vadd.f32 %v1184, %v1408
      %v1410 = vpop.f32.mrf.mxu0
      %1411 = vmatprep.mubr.f32.mxu0 %v508
      %1412 = vmatmul.mubr.f32.gmra.mxu0 %v476
      %v1413 = vpop.f32.mrf.mxu0
      %v1414 = vadd.f32 %v1189, %v1413
      %v1415 = vpop.f32.mrf.mxu0
      %1416 = vmatprep.mubr.f32.mxu0 %v509
      %1417 = vmatmul.mubr.f32.gmra.mxu0 %v477
      %v1418 = vpop.f32.mrf.mxu0
      %v1419 = vadd.f32 %v1194, %v1418
      %v1420 = vpop.f32.mrf.mxu0
      %1421 = vmatprep.mubr.f32.mxu0 %v510
      %1422 = vmatmul.mubr.f32.gmra.mxu0 %v478
      %v1423 = vpop.f32.mrf.mxu0
      %v1424 = vadd.f32 %v1199, %v1423
      %v1425 = vpop.f32.mrf.mxu0
      %1426 = vdwg.mxu0
      %1427 = vmatprep.subr.mxu0 0.0
      %1428 = vmatpush1.msra.mxu0 %v719
      %1429 = vmatprep.subr.mxu0 0.0
      %1430 = vmatpush1.msra.mxu0 %v718
      %1431 = vmatprep.subr.mxu0 0.0
      %1432 = vmatpush1.msra.mxu0 %v717
      %1433 = vmatprep.subr.mxu0 0.0
      %1434 = vmatpush1.msra.mxu0 %v716
      %1435 = vmatprep.subr.mxu0 0.0
      %1436 = vmatpush1.msra.mxu0 %v715
      %1437 = vmatprep.subr.mxu0 0.0
      %1438 = vmatpush1.msra.mxu0 %v714
      %1439 = vmatprep.subr.mxu0 0.0
      %1440 = vmatpush1.msra.mxu0 %v713
      %1441 = vmatprep.subr.mxu0 0.0
      %1442 = vmatpush1.msra.mxu0 %v712
      %1443 = vmatprep.subr.mxu0 0.0
      %1444 = vmatpush1.msra.mxu0 %v711
      %1445 = vmatprep.subr.mxu0 0.0
      %1446 = vmatpush1.msra.mxu0 %v710
      %1447 = vmatprep.subr.mxu0 0.0
      %1448 = vmatpush1.msra.mxu0 %v709
      %1449 = vmatprep.subr.mxu0 0.0
      %1450 = vmatpush1.msra.mxu0 %v708
      %1451 = vmatprep.subr.mxu0 0.0
      %1452 = vmatpush1.msra.mxu0 %v707
      %1453 = vmatprep.subr.mxu0 0.0
      %1454 = vmatpush1.msra.mxu0 %v706
      %1455 = vmatprep.subr.mxu0 0.0
      %1456 = vmatpush1.msra.mxu0 %v705
      %1457 = vmatprep.subr.mxu0 0.0
      %1458 = vmatpush1.msra.mxu0 %v704
      %1459 = vmatprep.subr.mxu0 0.0
      %1460 = vmatpush2.msra.mxu0 %v735
      %1461 = vmatprep.subr.mxu0 0.0
      %1462 = vmatpush2.msra.mxu0 %v734
      %1463 = vmatprep.subr.mxu0 0.0
      %1464 = vmatpush2.msra.mxu0 %v733
      %1465 = vmatprep.subr.mxu0 0.0
      %1466 = vmatpush2.msra.mxu0 %v732
      %1467 = vmatprep.subr.mxu0 0.0
      %1468 = vmatpush2.msra.mxu0 %v731
      %1469 = vmatprep.subr.mxu0 0.0
      %1470 = vmatpush2.msra.mxu0 %v730
      %1471 = vmatprep.subr.mxu0 0.0
      %1472 = vmatpush2.msra.mxu0 %v729
      %1473 = vmatprep.subr.mxu0 0.0
      %1474 = vmatpush2.msra.mxu0 %v728
      %1475 = vmatprep.subr.mxu0 0.0
      %1476 = vmatpush2.msra.mxu0 %v727
      %1477 = vmatprep.subr.mxu0 0.0
      %1478 = vmatpush2.msra.mxu0 %v726
      %1479 = vmatprep.subr.mxu0 0.0
      %1480 = vmatpush2.msra.mxu0 %v725
      %1481 = vmatprep.subr.mxu0 0.0
      %1482 = vmatpush2.msra.mxu0 %v724
      %1483 = vmatprep.subr.mxu0 0.0
      %1484 = vmatpush2.msra.mxu0 %v723
      %1485 = vmatprep.subr.mxu0 0.0
      %1486 = vmatpush2.msra.mxu0 %v722
      %1487 = vmatprep.subr.mxu0 0.0
      %1488 = vmatpush2.msra.mxu0 %v721
      %1489 = vmatprep.subr.mxu0 0.0
      %1490 = vmatpush2.msra.mxu0 %v720
      %1491 = vmatprep.mubr.f32.mxu0 %v544
      %1492 = vmatmul.mubr.f32.gmra.mxu0 %v512
      %v1493 = vpop.f32.mrf.mxu0
      %v1494 = vadd.f32 %v1269, %v1493
      %v1495 = vpop.f32.mrf.mxu0
      %1496 = vmatprep.mubr.f32.mxu0 %v545
      %1497 = vmatmul.mubr.f32.gmra.mxu0 %v513
      %v1498 = vpop.f32.mrf.mxu0
      %v1499 = vadd.f32 %v1274, %v1498
      %v1500 = vpop.f32.mrf.mxu0
      %1501 = vmatprep.mubr.f32.mxu0 %v546
      %1502 = vmatmul.mubr.f32.gmra.mxu0 %v514
      %v1503 = vpop.f32.mrf.mxu0
      %v1504 = vadd.f32 %v1279, %v1503
      %v1505 = vpop.f32.mrf.mxu0
      %1506 = vmatprep.mubr.f32.mxu0 %v547
      %1507 = vmatmul.mubr.f32.gmra.mxu0 %v515
      %v1508 = vpop.f32.mrf.mxu0
      %v1509 = vadd.f32 %v1284, %v1508
      %v1510 = vpop.f32.mrf.mxu0
      %1511 = vmatprep.mubr.f32.mxu0 %v548
      %1512 = vmatmul.mubr.f32.gmra.mxu0 %v516
      %v1513 = vpop.f32.mrf.mxu0
      %v1514 = vadd.f32 %v1289, %v1513
      %v1515 = vpop.f32.mrf.mxu0
      %1516 = vmatprep.mubr.f32.mxu0 %v549
      %1517 = vmatmul.mubr.f32.gmra.mxu0 %v517
      %v1518 = vpop.f32.mrf.mxu0
      %v1519 = vadd.f32 %v1294, %v1518
      %v1520 = vpop.f32.mrf.mxu0
      %1521 = vmatprep.mubr.f32.mxu0 %v550
      %1522 = vmatmul.mubr.f32.gmra.mxu0 %v518
      %v1523 = vpop.f32.mrf.mxu0
      %v1524 = vadd.f32 %v1299, %v1523
      %v1525 = vpop.f32.mrf.mxu0
      %1526 = vmatprep.mubr.f32.mxu0 %v551
      %1527 = vmatmul.mubr.f32.gmra.mxu0 %v519
      %v1528 = vpop.f32.mrf.mxu0
      %v1529 = vadd.f32 %v1304, %v1528
      %v1530 = vpop.f32.mrf.mxu0
      %1531 = vmatprep.mubr.f32.mxu0 %v552
      %1532 = vmatmul.mubr.f32.gmra.mxu0 %v520
      %v1533 = vpop.f32.mrf.mxu0
      %v1534 = vadd.f32 %v1309, %v1533
      %v1535 = vpop.f32.mrf.mxu0
      %1536 = vmatprep.mubr.f32.mxu0 %v553
      %1537 = vmatmul.mubr.f32.gmra.mxu0 %v521
      %v1538 = vpop.f32.mrf.mxu0
      %v1539 = vadd.f32 %v1314, %v1538
      %v1540 = vpop.f32.mrf.mxu0
      %1541 = vmatprep.mubr.f32.mxu0 %v554
      %1542 = vmatmul.mubr.f32.gmra.mxu0 %v522
      %v1543 = vpop.f32.mrf.mxu0
      %v1544 = vadd.f32 %v1319, %v1543
      %v1545 = vpop.f32.mrf.mxu0
      %1546 = vmatprep.mubr.f32.mxu0 %v555
      %1547 = vmatmul.mubr.f32.gmra.mxu0 %v523
      %v1548 = vpop.f32.mrf.mxu0
      %v1549 = vadd.f32 %v1324, %v1548
      %v1550 = vpop.f32.mrf.mxu0
      %1551 = vmatprep.mubr.f32.mxu0 %v556
      %1552 = vmatmul.mubr.f32.gmra.mxu0 %v524
      %v1553 = vpop.f32.mrf.mxu0
      %v1554 = vadd.f32 %v1329, %v1553
      %v1555 = vpop.f32.mrf.mxu0
      %1556 = vmatprep.mubr.f32.mxu0 %v557
      %1557 = vmatmul.mubr.f32.gmra.mxu0 %v525
      %v1558 = vpop.f32.mrf.mxu0
      %v1559 = vadd.f32 %v1334, %v1558
      %v1560 = vpop.f32.mrf.mxu0
      %1561 = vmatprep.mubr.f32.mxu0 %v558
      %1562 = vmatmul.mubr.f32.gmra.mxu0 %v526
      %v1563 = vpop.f32.mrf.mxu0
      %v1564 = vadd.f32 %v1339, %v1563
      %v1565 = vpop.f32.mrf.mxu0
      %1566 = vmatprep.mubr.f32.mxu0 %v559
      %1567 = vmatmul.mubr.f32.gmra.mxu0 %v527
      %v1568 = vpop.f32.mrf.mxu0
      %v1569 = vadd.f32 %v1344, %v1568
      %v1570 = vpop.f32.mrf.mxu0
      %1571 = vmatprep.mubr.f32.mxu0 %v560
      %1572 = vmatmul.mubr.f32.gmra.mxu0 %v528
      %v1573 = vpop.f32.mrf.mxu0
      %v1574 = vadd.f32 %v1349, %v1573
      %v1575 = vpop.f32.mrf.mxu0
      %1576 = vmatprep.mubr.f32.mxu0 %v561
      %1577 = vmatmul.mubr.f32.gmra.mxu0 %v529
      %v1578 = vpop.f32.mrf.mxu0
      %v1579 = vadd.f32 %v1354, %v1578
      %v1580 = vpop.f32.mrf.mxu0
      %1581 = vmatprep.mubr.f32.mxu0 %v562
      %1582 = vmatmul.mubr.f32.gmra.mxu0 %v530
      %v1583 = vpop.f32.mrf.mxu0
      %v1584 = vadd.f32 %v1359, %v1583
      %v1585 = vpop.f32.mrf.mxu0
      %1586 = vmatprep.mubr.f32.mxu0 %v563
      %1587 = vmatmul.mubr.f32.gmra.mxu0 %v531
      %v1588 = vpop.f32.mrf.mxu0
      %v1589 = vadd.f32 %v1364, %v1588
      %v1590 = vpop.f32.mrf.mxu0
      %1591 = vmatprep.mubr.f32.mxu0 %v564
      %1592 = vmatmul.mubr.f32.gmra.mxu0 %v532
      %v1593 = vpop.f32.mrf.mxu0
      %v1594 = vadd.f32 %v1369, %v1593
      %v1595 = vpop.f32.mrf.mxu0
      %1596 = vmatprep.mubr.f32.mxu0 %v565
      %1597 = vmatmul.mubr.f32.gmra.mxu0 %v533
      %v1598 = vpop.f32.mrf.mxu0
      %v1599 = vadd.f32 %v1374, %v1598
      %v1600 = vpop.f32.mrf.mxu0
      %1601 = vmatprep.mubr.f32.mxu0 %v566
      %1602 = vmatmul.mubr.f32.gmra.mxu0 %v534
      %v1603 = vpop.f32.mrf.mxu0
      %v1604 = vadd.f32 %v1379, %v1603
      %v1605 = vpop.f32.mrf.mxu0
      %1606 = vmatprep.mubr.f32.mxu0 %v567
      %1607 = vmatmul.mubr.f32.gmra.mxu0 %v535
      %v1608 = vpop.f32.mrf.mxu0
      %v1609 = vadd.f32 %v1384, %v1608
      %v1610 = vpop.f32.mrf.mxu0
      %1611 = vmatprep.mubr.f32.mxu0 %v568
      %1612 = vmatmul.mubr.f32.gmra.mxu0 %v536
      %v1613 = vpop.f32.mrf.mxu0
      %v1614 = vadd.f32 %v1389, %v1613
      %v1615 = vpop.f32.mrf.mxu0
      %1616 = vmatprep.mubr.f32.mxu0 %v569
      %1617 = vmatmul.mubr.f32.gmra.mxu0 %v537
      %v1618 = vpop.f32.mrf.mxu0
      %v1619 = vadd.f32 %v1394, %v1618
      %v1620 = vpop.f32.mrf.mxu0
      %1621 = vmatprep.mubr.f32.mxu0 %v570
      %1622 = vmatmul.mubr.f32.gmra.mxu0 %v538
      %v1623 = vpop.f32.mrf.mxu0
      %v1624 = vadd.f32 %v1399, %v1623
      %v1625 = vpop.f32.mrf.mxu0
      %1626 = vmatprep.mubr.f32.mxu0 %v571
      %1627 = vmatmul.mubr.f32.gmra.mxu0 %v539
      %v1628 = vpop.f32.mrf.mxu0
      %v1629 = vadd.f32 %v1404, %v1628
      %v1630 = vpop.f32.mrf.mxu0
      %1631 = vmatprep.mubr.f32.mxu0 %v572
      %1632 = vmatmul.mubr.f32.gmra.mxu0 %v540
      %v1633 = vpop.f32.mrf.mxu0
      %v1634 = vadd.f32 %v1409, %v1633
      %v1635 = vpop.f32.mrf.mxu0
      %1636 = vmatprep.mubr.f32.mxu0 %v573
      %1637 = vmatmul.mubr.f32.gmra.mxu0 %v541
      %v1638 = vpop.f32.mrf.mxu0
      %v1639 = vadd.f32 %v1414, %v1638
      %v1640 = vpop.f32.mrf.mxu0
      %1641 = vmatprep.mubr.f32.mxu0 %v574
      %1642 = vmatmul.mubr.f32.gmra.mxu0 %v542
      %v1643 = vpop.f32.mrf.mxu0
      %v1644 = vadd.f32 %v1419, %v1643
      %v1645 = vpop.f32.mrf.mxu0
      %1646 = vmatprep.mubr.f32.mxu0 %v575
      %1647 = vmatmul.mubr.f32.gmra.mxu0 %v543
      %v1648 = vpop.f32.mrf.mxu0
      %v1649 = vadd.f32 %v1424, %v1648
      %v1650 = vpop.f32.mrf.mxu0
      %1651 = vdwg.mxu0
      %1652 = vmatprep.subr.mxu0 0.0
      %1653 = vmatpush1.msra.mxu0 %v751
      %1654 = vmatprep.subr.mxu0 0.0
      %1655 = vmatpush1.msra.mxu0 %v750
      %1656 = vmatprep.subr.mxu0 0.0
      %1657 = vmatpush1.msra.mxu0 %v749
      %1658 = vmatprep.subr.mxu0 0.0
      %1659 = vmatpush1.msra.mxu0 %v748
      %1660 = vmatprep.subr.mxu0 0.0
      %1661 = vmatpush1.msra.mxu0 %v747
      %1662 = vmatprep.subr.mxu0 0.0
      %1663 = vmatpush1.msra.mxu0 %v746
      %1664 = vmatprep.subr.mxu0 0.0
      %1665 = vmatpush1.msra.mxu0 %v745
      %1666 = vmatprep.subr.mxu0 0.0
      %1667 = vmatpush1.msra.mxu0 %v744
      %1668 = vmatprep.subr.mxu0 0.0
      %1669 = vmatpush1.msra.mxu0 %v743
      %1670 = vmatprep.subr.mxu0 0.0
      %1671 = vmatpush1.msra.mxu0 %v742
      %1672 = vmatprep.subr.mxu0 0.0
      %1673 = vmatpush1.msra.mxu0 %v741
      %1674 = vmatprep.subr.mxu0 0.0
      %1675 = vmatpush1.msra.mxu0 %v740
      %1676 = vmatprep.subr.mxu0 0.0
      %1677 = vmatpush1.msra.mxu0 %v739
      %1678 = vmatprep.subr.mxu0 0.0
      %1679 = vmatpush1.msra.mxu0 %v738
      %1680 = vmatprep.subr.mxu0 0.0
      %1681 = vmatpush1.msra.mxu0 %v737
      %1682 = vmatprep.subr.mxu0 0.0
      %1683 = vmatpush1.msra.mxu0 %v736
      %1684 = vmatprep.subr.mxu0 0.0
      %1685 = vmatpush2.msra.mxu0 0.0
      %1686 = vmatprep.subr.mxu0 0.0
      %1687 = vmatpush2.msra.mxu0 0.0
      %1688 = vmatprep.subr.mxu0 0.0
      %1689 = vmatpush2.msra.mxu0 0.0
      %1690 = vmatprep.subr.mxu0 0.0
      %1691 = vmatpush2.msra.mxu0 0.0
      %1692 = vmatprep.subr.mxu0 0.0
      %1693 = vmatpush2.msra.mxu0 0.0
      %1694 = vmatprep.subr.mxu0 0.0
      %1695 = vmatpush2.msra.mxu0 0.0
      %1696 = vmatprep.subr.mxu0 0.0
      %1697 = vmatpush2.msra.mxu0 0.0
      %1698 = vmatprep.subr.mxu0 0.0
      %1699 = vmatpush2.msra.mxu0 0.0
      %1700 = vmatprep.subr.mxu0 0.0
      %1701 = vmatpush2.msra.mxu0 0.0
      %1702 = vmatprep.subr.mxu0 0.0
      %1703 = vmatpush2.msra.mxu0 0.0
      %1704 = vmatprep.subr.mxu0 0.0
      %1705 = vmatpush2.msra.mxu0 0.0
      %1706 = vmatprep.subr.mxu0 0.0
      %1707 = vmatpush2.msra.mxu0 0.0
      %1708 = vmatprep.subr.mxu0 0.0
      %1709 = vmatpush2.msra.mxu0 0.0
      %1710 = vmatprep.subr.mxu0 0.0
      %1711 = vmatpush2.msra.mxu0 0.0
      %1712 = vmatprep.subr.mxu0 0.0
      %1713 = vmatpush2.msra.mxu0 0.0
      %1714 = vmatprep.subr.mxu0 0.0
      %1715 = vmatpush2.msra.mxu0 0.0
      %1716 = vmatprep.mubr.f32.mxu0 0.0
      %1717 = vmatmul.mubr.f32.gmra.mxu0 %v576
      %v1718 = vpop.f32.mrf.mxu0
      %v1719 = vadd.f32 %v1494, %v1718
      %v1720 = vpop.f32.mrf.mxu0
      %1721 = vmatprep.mubr.f32.mxu0 0.0
      %1722 = vmatmul.mubr.f32.gmra.mxu0 %v577
      %v1723 = vpop.f32.mrf.mxu0
      %v1724 = vadd.f32 %v1499, %v1723
      %v1725 = vpop.f32.mrf.mxu0
      %1726 = vmatprep.mubr.f32.mxu0 0.0
      %1727 = vmatmul.mubr.f32.gmra.mxu0 %v578
      %v1728 = vpop.f32.mrf.mxu0
      %v1729 = vadd.f32 %v1504, %v1728
      %v1730 = vpop.f32.mrf.mxu0
      %1731 = vmatprep.mubr.f32.mxu0 0.0
      %1732 = vmatmul.mubr.f32.gmra.mxu0 %v579
      %v1733 = vpop.f32.mrf.mxu0
      %v1734 = vadd.f32 %v1509, %v1733
      %v1735 = vpop.f32.mrf.mxu0
      %1736 = vmatprep.mubr.f32.mxu0 0.0
      %1737 = vmatmul.mubr.f32.gmra.mxu0 %v580
      %v1738 = vpop.f32.mrf.mxu0
      %v1739 = vadd.f32 %v1514, %v1738
      %v1740 = vpop.f32.mrf.mxu0
      %1741 = vmatprep.mubr.f32.mxu0 0.0
      %1742 = vmatmul.mubr.f32.gmra.mxu0 %v581
      %v1743 = vpop.f32.mrf.mxu0
      %v1744 = vadd.f32 %v1519, %v1743
      %v1745 = vpop.f32.mrf.mxu0
      %1746 = vmatprep.mubr.f32.mxu0 0.0
      %1747 = vmatmul.mubr.f32.gmra.mxu0 %v582
      %v1748 = vpop.f32.mrf.mxu0
      %v1749 = vadd.f32 %v1524, %v1748
      %v1750 = vpop.f32.mrf.mxu0
      %1751 = vmatprep.mubr.f32.mxu0 0.0
      %1752 = vmatmul.mubr.f32.gmra.mxu0 %v583
      %v1753 = vpop.f32.mrf.mxu0
      %v1754 = vadd.f32 %v1529, %v1753
      %v1755 = vpop.f32.mrf.mxu0
      %1756 = vmatprep.mubr.f32.mxu0 0.0
      %1757 = vmatmul.mubr.f32.gmra.mxu0 %v584
      %v1758 = vpop.f32.mrf.mxu0
      %v1759 = vadd.f32 %v1534, %v1758
      %v1760 = vpop.f32.mrf.mxu0
      %1761 = vmatprep.mubr.f32.mxu0 0.0
      %1762 = vmatmul.mubr.f32.gmra.mxu0 %v585
      %v1763 = vpop.f32.mrf.mxu0
      %v1764 = vadd.f32 %v1539, %v1763
      %v1765 = vpop.f32.mrf.mxu0
      %1766 = vmatprep.mubr.f32.mxu0 0.0
      %1767 = vmatmul.mubr.f32.gmra.mxu0 %v586
      %v1768 = vpop.f32.mrf.mxu0
      %v1769 = vadd.f32 %v1544, %v1768
      %v1770 = vpop.f32.mrf.mxu0
      %1771 = vmatprep.mubr.f32.mxu0 0.0
      %1772 = vmatmul.mubr.f32.gmra.mxu0 %v587
      %v1773 = vpop.f32.mrf.mxu0
      %v1774 = vadd.f32 %v1549, %v1773
      %v1775 = vpop.f32.mrf.mxu0
      %1776 = vmatprep.mubr.f32.mxu0 0.0
      %1777 = vmatmul.mubr.f32.gmra.mxu0 %v588
      %v1778 = vpop.f32.mrf.mxu0
      %v1779 = vadd.f32 %v1554, %v1778
      %v1780 = vpop.f32.mrf.mxu0
      %1781 = vmatprep.mubr.f32.mxu0 0.0
      %1782 = vmatmul.mubr.f32.gmra.mxu0 %v589
      %v1783 = vpop.f32.mrf.mxu0
      %v1784 = vadd.f32 %v1559, %v1783
      %v1785 = vpop.f32.mrf.mxu0
      %1786 = vmatprep.mubr.f32.mxu0 0.0
      %1787 = vmatmul.mubr.f32.gmra.mxu0 %v590
      %v1788 = vpop.f32.mrf.mxu0
      %v1789 = vadd.f32 %v1564, %v1788
      %v1790 = vpop.f32.mrf.mxu0
      %1791 = vmatprep.mubr.f32.mxu0 0.0
      %1792 = vmatmul.mubr.f32.gmra.mxu0 %v591
      %v1793 = vpop.f32.mrf.mxu0
      %v1794 = vadd.f32 %v1569, %v1793
      %v1795 = vpop.f32.mrf.mxu0
      %1796 = vmatprep.mubr.f32.mxu0 0.0
      %1797 = vmatmul.mubr.f32.gmra.mxu0 %v592
      %v1798 = vpop.f32.mrf.mxu0
      %v1799 = vadd.f32 %v1574, %v1798
      %v1800 = vpop.f32.mrf.mxu0
      %1801 = vmatprep.mubr.f32.mxu0 0.0
      %1802 = vmatmul.mubr.f32.gmra.mxu0 %v593
      %v1803 = vpop.f32.mrf.mxu0
      %v1804 = vadd.f32 %v1579, %v1803
      %v1805 = vpop.f32.mrf.mxu0
      %1806 = vmatprep.mubr.f32.mxu0 0.0
      %1807 = vmatmul.mubr.f32.gmra.mxu0 %v594
      %v1808 = vpop.f32.mrf.mxu0
      %v1809 = vadd.f32 %v1584, %v1808
      %v1810 = vpop.f32.mrf.mxu0
      %1811 = vmatprep.mubr.f32.mxu0 0.0
      %1812 = vmatmul.mubr.f32.gmra.mxu0 %v595
      %v1813 = vpop.f32.mrf.mxu0
      %v1814 = vadd.f32 %v1589, %v1813
      %v1815 = vpop.f32.mrf.mxu0
      %1816 = vmatprep.mubr.f32.mxu0 0.0
      %1817 = vmatmul.mubr.f32.gmra.mxu0 %v596
      %v1818 = vpop.f32.mrf.mxu0
      %v1819 = vadd.f32 %v1594, %v1818
      %v1820 = vpop.f32.mrf.mxu0
      %1821 = vmatprep.mubr.f32.mxu0 0.0
      %1822 = vmatmul.mubr.f32.gmra.mxu0 %v597
      %v1823 = vpop.f32.mrf.mxu0
      %v1824 = vadd.f32 %v1599, %v1823
      %v1825 = vpop.f32.mrf.mxu0
      %1826 = vmatprep.mubr.f32.mxu0 0.0
      %1827 = vmatmul.mubr.f32.gmra.mxu0 %v598
      %v1828 = vpop.f32.mrf.mxu0
      %v1829 = vadd.f32 %v1604, %v1828
      %v1830 = vpop.f32.mrf.mxu0
      %1831 = vmatprep.mubr.f32.mxu0 0.0
      %1832 = vmatmul.mubr.f32.gmra.mxu0 %v599
      %v1833 = vpop.f32.mrf.mxu0
      %v1834 = vadd.f32 %v1609, %v1833
      %v1835 = vpop.f32.mrf.mxu0
      %1836 = vmatprep.mubr.f32.mxu0 0.0
      %1837 = vmatmul.mubr.f32.gmra.mxu0 %v600
      %v1838 = vpop.f32.mrf.mxu0
      %v1839 = vadd.f32 %v1614, %v1838
      %v1840 = vpop.f32.mrf.mxu0
      %1841 = vmatprep.mubr.f32.mxu0 0.0
      %1842 = vmatmul.mubr.f32.gmra.mxu0 %v601
      %v1843 = vpop.f32.mrf.mxu0
      %v1844 = vadd.f32 %v1619, %v1843
      %v1845 = vpop.f32.mrf.mxu0
      %1846 = vmatprep.mubr.f32.mxu0 0.0
      %1847 = vmatmul.mubr.f32.gmra.mxu0 %v602
      %v1848 = vpop.f32.mrf.mxu0
      %v1849 = vadd.f32 %v1624, %v1848
      %v1850 = vpop.f32.mrf.mxu0
      %1851 = vmatprep.mubr.f32.mxu0 0.0
      %1852 = vmatmul.mubr.f32.gmra.mxu0 %v603
      %v1853 = vpop.f32.mrf.mxu0
      %v1854 = vadd.f32 %v1629, %v1853
      %v1855 = vpop.f32.mrf.mxu0
      %1856 = vmatprep.mubr.f32.mxu0 0.0
      %1857 = vmatmul.mubr.f32.gmra.mxu0 %v604
      %v1858 = vpop.f32.mrf.mxu0
      %v1859 = vadd.f32 %v1634, %v1858
      %v1860 = vpop.f32.mrf.mxu0
      %1861 = vmatprep.mubr.f32.mxu0 0.0
      %1862 = vmatmul.mubr.f32.gmra.mxu0 %v605
      %v1863 = vpop.f32.mrf.mxu0
      %v1864 = vadd.f32 %v1639, %v1863
      %v1865 = vpop.f32.mrf.mxu0
      %1866 = vmatprep.mubr.f32.mxu0 0.0
      %1867 = vmatmul.mubr.f32.gmra.mxu0 %v606
      %v1868 = vpop.f32.mrf.mxu0
      %v1869 = vadd.f32 %v1644, %v1868
      %v1870 = vpop.f32.mrf.mxu0
      %1871 = vmatprep.mubr.f32.mxu0 0.0
      %1872 = vmatmul.mubr.f32.gmra.mxu0 %v607
      %v1873 = vpop.f32.mrf.mxu0
      %v1874 = vadd.f32 %v1649, %v1873
      %v1875 = vpop.f32.mrf.mxu0
      %1876 = vdwg.mxu0
      %1877 = vst [vmem:[%s192] sm:$0xff] %v1719
      %1878 = vst [vmem:[%s192 + $0x8] sm:$0xff] %v1724
      %1879 = vst [vmem:[%s192 + $0x10] sm:$0xff] %v1729
      %1880 = vst [vmem:[%s192 + $0x18] sm:$0xff] %v1734
      %1881 = vst [vmem:[%s192 + $0x20] sm:$0xff] %v1739
      %1882 = vst [vmem:[%s192 + $0x28] sm:$0xff] %v1744
      %1883 = vst [vmem:[%s192 + $0x30] sm:$0xff] %v1749
      %1884 = vst [vmem:[%s192 + $0x38] sm:$0xff] %v1754
      %1885 = vst [vmem:[%s192 + $0x40] sm:$0xff] %v1759
      %1886 = vst [vmem:[%s192 + $0x48] sm:$0xff] %v1764
      %1887 = vst [vmem:[%s192 + $0x50] sm:$0xff] %v1769
      %1888 = vst [vmem:[%s192 + $0x58] sm:$0xff] %v1774
      %1889 = vst [vmem:[%s192 + $0x60] sm:$0xff] %v1779
      %1890 = vst [vmem:[%s192 + $0x68] sm:$0xff] %v1784
      %1891 = vst [vmem:[%s192 + $0x70] sm:$0xff] %v1789
      %1892 = vst [vmem:[%s192 + $0x78] sm:$0xff] %v1794
      %1893 = vst [vmem:[%s192 + $0x80] sm:$0xff] %v1799
      %1894 = vst [vmem:[%s192 + $0x88] sm:$0xff] %v1804
      %1895 = vst [vmem:[%s192 + $0x90] sm:$0xff] %v1809
      %1896 = vst [vmem:[%s192 + $0x98] sm:$0xff] %v1814
      %1897 = vst [vmem:[%s192 + $0xa0] sm:$0xff] %v1819
      %1898 = vst [vmem:[%s192 + $0xa8] sm:$0xff] %v1824
      %1899 = vst [vmem:[%s192 + $0xb0] sm:$0xff] %v1829
      %1900 = vst [vmem:[%s192 + $0xb8] sm:$0xff] %v1834
      %1901 = vst [vmem:[%s192 + $0xc0] sm:$0xff] %v1839
      %1902 = vst [vmem:[%s192 + $0xc8] sm:$0xff] %v1844
      %1903 = vst [vmem:[%s192 + $0xd0] sm:$0xff] %v1849
      %1904 = vst [vmem:[%s192 + $0xd8] sm:$0xff] %v1854
      %1905 = vst [vmem:[%s192 + $0xe0] sm:$0xff] %v1859
      %1906 = vst [vmem:[%s192 + $0xe8] sm:$0xff] %v1864
      %1907 = vst [vmem:[%s192 + $0xf0] sm:$0xff] %v1869
      %1908 = vst [vmem:[%s192 + $0xf8] sm:$0xff] %v1874
      %v1909 = vld [vmem:[%s3] sm:$0x1]
      %v1910 = vadd.f32 %v1719, %v1724
      %v1911 = vadd.f32 %v1910, %v1729
      %v1912 = vadd.f32 %v1911, %v1734
      %v1913 = vadd.f32 %v1912, %v1739
      %v1914 = vadd.f32 %v1913, %v1744
      %v1915 = vadd.f32 %v1914, %v1749
      %v1916 = vadd.f32 %v1915, %v1754
      %v1917 = vadd.f32 %v1916, %v1759
      %v1918 = vadd.f32 %v1917, %v1764
      %v1919 = vadd.f32 %v1918, %v1769
      %v1920 = vadd.f32 %v1919, %v1774
      %v1921 = vadd.f32 %v1920, %v1779
      %v1922 = vadd.f32 %v1921, %v1784
      %v1923 = vadd.f32 %v1922, %v1789
      %v1924 = vadd.f32 %v1923, %v1794
      %v1925 = vadd.f32 %v1924, %v1799
      %v1926 = vadd.f32 %v1925, %v1804
      %v1927 = vadd.f32 %v1926, %v1809
      %v1928 = vadd.f32 %v1927, %v1814
      %v1929 = vadd.f32 %v1928, %v1819
      %v1930 = vadd.f32 %v1929, %v1824
      %v1931 = vadd.f32 %v1930, %v1829
      %v1932 = vadd.f32 %v1931, %v1834
      %v1933 = vadd.f32 %v1932, %v1839
      %v1934 = vadd.f32 %v1933, %v1844
      %v1935 = vadd.f32 %v1934, %v1849
      %v1936 = vadd.f32 %v1935, %v1854
      %v1937 = vadd.f32 %v1936, %v1859
      %v1938 = vadd.f32 %v1937, %v1864
      %v1939 = vadd.f32 %v1938, %v1869
      %v1940 = vadd.f32 %v1939, %v1874
      %v1941 = vrot.slane %v1940, 4
      %v1942 = vadd.f32 %v1940, %v1941
      %v1943 = vrot.slane %v1942, 2
      %v1944 = vadd.f32 %v1942, %v1943
      %v1945 = vrot.slane %v1944, 1
      %v1946 = vadd.f32 %v1944, %v1945
      %v1947 = vadd.f32 %v1909, %v1946
      %1948 = vst [vmem:[%s3] sm:$0x1] %v1947
      %v1949 = vld [vmem:[%s4] sm:$0x1]
      %v1950 = vmul.f32 %v1719, %v1719
      %v1951 = vmul.f32 %v1724, %v1724
      %v1952 = vmul.f32 %v1729, %v1729
      %v1953 = vmul.f32 %v1734, %v1734
      %v1954 = vmul.f32 %v1739, %v1739
      %v1955 = vmul.f32 %v1744, %v1744
      %v1956 = vmul.f32 %v1749, %v1749
      %v1957 = vmul.f32 %v1754, %v1754
      %v1958 = vmul.f32 %v1759, %v1759
      %v1959 = vmul.f32 %v1764, %v1764
      %v1960 = vmul.f32 %v1769, %v1769
      %v1961 = vmul.f32 %v1774, %v1774
      %v1962 = vmul.f32 %v1779, %v1779
      %v1963 = vmul.f32 %v1784, %v1784
      %v1964 = vmul.f32 %v1789, %v1789
      %v1965 = vmul.f32 %v1794, %v1794
      %v1966 = vmul.f32 %v1799, %v1799
      %v1967 = vmul.f32 %v1804, %v1804
      %v1968 = vmul.f32 %v1809, %v1809
      %v1969 = vmul.f32 %v1814, %v1814
      %v1970 = vmul.f32 %v1819, %v1819
      %v1971 = vmul.f32 %v1824, %v1824
      %v1972 = vmul.f32 %v1829, %v1829
      %v1973 = vmul.f32 %v1834, %v1834
      %v1974 = vmul.f32 %v1839, %v1839
      %v1975 = vmul.f32 %v1844, %v1844
      %v1976 = vmul.f32 %v1849, %v1849
      %v1977 = vmul.f32 %v1854, %v1854
      %v1978 = vmul.f32 %v1859, %v1859
      %v1979 = vmul.f32 %v1864, %v1864
      %v1980 = vmul.f32 %v1869, %v1869
      %v1981 = vmul.f32 %v1874, %v1874
      %v1982 = vadd.f32 %v1950, %v1951
      %v1983 = vadd.f32 %v1982, %v1952
      %v1984 = vadd.f32 %v1983, %v1953
      %v1985 = vadd.f32 %v1984, %v1954
      %v1986 = vadd.f32 %v1985, %v1955
      %v1987 = vadd.f32 %v1986, %v1956
      %v1988 = vadd.f32 %v1987, %v1957
      %v1989 = vadd.f32 %v1988, %v1958
      %v1990 = vadd.f32 %v1989, %v1959
      %v1991 = vadd.f32 %v1990, %v1960
      %v1992 = vadd.f32 %v1991, %v1961
      %v1993 = vadd.f32 %v1992, %v1962
      %v1994 = vadd.f32 %v1993, %v1963
      %v1995 = vadd.f32 %v1994, %v1964
      %v1996 = vadd.f32 %v1995, %v1965
      %v1997 = vadd.f32 %v1996, %v1966
      %v1998 = vadd.f32 %v1997, %v1967
      %v1999 = vadd.f32 %v1998, %v1968
      %v2000 = vadd.f32 %v1999, %v1969
      %v2001 = vadd.f32 %v2000, %v1970
      %v2002 = vadd.f32 %v2001, %v1971
      %v2003 = vadd.f32 %v2002, %v1972
      %v2004 = vadd.f32 %v2003, %v1973
      %v2005 = vadd.f32 %v2004, %v1974
      %v2006 = vadd.f32 %v2005, %v1975
      %v2007 = vadd.f32 %v2006, %v1976
      %v2008 = vadd.f32 %v2007, %v1977
      %v2009 = vadd.f32 %v2008, %v1978
      %v2010 = vadd.f32 %v2009, %v1979
      %v2011 = vadd.f32 %v2010, %v1980
      %v2012 = vadd.f32 %v2011, %v1981
      %v2013 = vrot.slane %v2012, 4
      %v2014 = vadd.f32 %v2012, %v2013
      %v2015 = vrot.slane %v2014, 2
      %v2016 = vadd.f32 %v2014, %v2015
      %v2017 = vrot.slane %v2016, 1
      %v2018 = vadd.f32 %v2016, %v2017
      %v2019 = vadd.f32 %v1949, %v2018
      %2020 = vst [vmem:[%s4] sm:$0x1] %v2019
      %p2021 = scmp.lt.s32.totalorder %s16, 1
      %s2022 = scalar_select %p2021, %s16, 1
      %s2023 = smul.addr %s2022, 32
      %s2024 = smul.addr %s2023, 8
      %s2025 = scalar_lea.vmem %s2, %s2024
      // Predicated region
      $region33: #{double_conv_pallas.3} parent=27 // pred_check
        %p2026 = pneg %p81
      $region34: #{double_conv_pallas.3} parent=27 // pred_check_branch
        %2028 = sbr.rel (%p2026) target = $region36
      $region35: #{double_conv_pallas.3} parent=27 // pred_region
        _
      $region36: #{double_conv_pallas.3} parent=27 // pred_fallthru
        _
      // Predicated region
      $region37: #{double_conv_pallas.3} parent=27 // pred_check
        %p2029 = pneg %p102
      $region38: #{double_conv_pallas.3} parent=27 // pred_check_branch
        %2031 = sbr.rel (%p2029) target = $region40
      $region39: #{double_conv_pallas.3} parent=27 // pred_region
        _
      $region40: #{double_conv_pallas.3} parent=27 // pred_fallthru
        _
      // Predicated region
      $region41: #{double_conv_pallas.3} parent=27 // pred_check
        %p2032 = pneg %p123
      $region42: #{double_conv_pallas.3} parent=27 // pred_check_branch
        %2034 = sbr.rel (%p2032) target = $region44
      $region43: #{double_conv_pallas.3} parent=27 // pred_region
        _
      $region44: #{double_conv_pallas.3} parent=27 // pred_fallthru
        _
      // Predicated region
      $region45: #{double_conv_pallas.3} parent=27 // pred_check
        %p2035 = pneg %p102
      $region46: #{double_conv_pallas.3} parent=27 // pred_check_branch
        %2037 = sbr.rel (%p2035) target = $region48
      $region47: #{double_conv_pallas.3} parent=27 // pred_region
        _
      $region48: #{double_conv_pallas.3} parent=27 // pred_fallthru
        _
      // Predicated region
      $region49: #{double_conv_pallas.3} parent=27 // pred_check
        %p2038 = pneg %p123
      $region50: #{double_conv_pallas.3} parent=27 // pred_check_branch
        %2040 = sbr.rel (%p2038) target = $region52
      $region51: #{double_conv_pallas.3} parent=27 // pred_region
        _
      $region52: #{double_conv_pallas.3} parent=27 // pred_fallthru
        _
    $region28: #{double_conv_pallas.3} parent=5 // pred_fallthru
      _
    %p2041 = scmp.le.s32.totalorder 2, %s11
    // Predicated region
    $region53: #{double_conv_pallas.3} parent=5 // pred_check
      %p2042 = pneg %p2041
    $region54: #{double_conv_pallas.3} parent=5 // pred_check_branch
      %2044 = sbr.rel (%p2042) target = $region56
    $region55: #{double_conv_pallas.3} parent=5 // pred_region
      %s2045 = ssub.s32 %s11, 2
      // Predicated region
      $region57: #{double_conv_pallas.3} parent=55 // pred_check
        %p2046 = pneg %p87
      $region58: #{double_conv_pallas.3} parent=55 // pred_check_branch
        %2048 = sbr.rel (%p2046) target = $region60
      $region59: #{double_conv_pallas.3} parent=55 // pred_region
        %p2049 = scmp.lt.s32.totalorder %s17, 1
        %s2050 = scalar_select %p2049, %s17, 1
        %s2051 = smul.addr %s2050, 32
        %s2052 = smul.addr %s2051, 8
        %s2053 = scalar_lea.vmem %s2, %s2052
      $region60: #{double_conv_pallas.3} parent=55 // pred_fallthru
        _
    $region56: #{double_conv_pallas.3} parent=5 // pred_fallthru
      _
  $region6: #{double_conv_pallas.3} parent=0 // loop_footer
    %s15 = sadd.s32 1, %s11
  $region7: #{double_conv_pallas.3} parent=0 // loop_footer_branch
    %10 = sbr.rel target = $region3
  $region8: #{double_conv_pallas.3} parent=0 // loop_exit
    _

// kernel: double_conv_pallas.4
$region0: #{double_conv_pallas.4}
  #allocation0 [shape = 'u32[]', space=smem, size = 0x4, offset = 0x4, fixed_abs, tag = 'smem constant byte address 0x4 - core index']
  #allocation1 [shape = 'u32[144,128]{1,0:T(1,128)}', space=vmem, size = 0x12000, scoped, tag = 'internal scratch']
  #allocation2 [shape = 'f32[18,18,128]{2,1,0:T(8,128)}', space=vmem, size = 0x36000, scoped, tag = 'scratch operand']
  %s0 = inlined_call_operand.vmem [shape: f32[2,16,16,128], index: 0, kind: input, shape index: {}]
  %s1 = inlined_call_operand.vmem [shape: f32[1,128], index: 1, kind: input, shape index: {}]
  %s2 = inlined_call_operand.vmem [shape: f32[1,128], index: 2, kind: input, shape index: {}]
  %s3 = inlined_call_operand.vmem [shape: f32[1152,128], index: 3, kind: input, shape index: {}]
  %s4 = inlined_call_operand.vmem [shape: f32[2,16,16,128], index: 4, kind: output, shape index: {0}]
  %s5 = inlined_call_operand.vmem [shape: f32[1,128], index: 5, kind: output, shape index: {1}]
  %s6 = inlined_call_operand.vmem [shape: f32[1,128], index: 6, kind: output, shape index: {2}]
  %7 = xla_tuple %s4, %s5, %s6
  %s8 = sld [smem:[#allocation0]]
  $region69: #{double_conv_pallas.4} parent=0
    _
  %s10 = ssub.s32 1, %s8
  %s11 = scalar_select 0, %s10, %s8
  loop: start=0, step=1, limit=4
  $region2: #{double_conv_pallas.4} parent=0 // loop_pre_header
    _
  $region3: #{double_conv_pallas.4} parent=0 // loop_header
    %s13 = sphi 0, %s17
    %p14 = scmp.ge.s32.totalorder %s13, 4
    %s23 = sphi 0, %s25
    %s26 = sphi 0, %s23
    %s27 = sphi 0, %s26
    %s43 = sphi 0, %s27
    %s47 = sphi 0, %s47
    %s49 = sphi 0, %s47
    %s50 = sphi 0, %s49
    %s64 = sphi 0, %s50
    %s68 = sphi 0, %s68
    %s70 = sphi 0, %s68
    %s71 = sphi 0, %s70
    %s85 = sphi 0, %s71
    %s89 = sphi 0, %s89
    %s91 = sphi 0, %s89
    %s92 = sphi 0, %s91
    %s106 = sphi 0, %s92
    %s112 = sphi 0, %s114
    %s115 = sphi 0, %s112
    %s116 = sphi 0, %s115
    %s132 = sphi 0, %s116
    %s136 = sphi 0, %s136
    %s138 = sphi 0, %s136
    %s139 = sphi 0, %s138
    %s153 = sphi 0, %s139
    %s157 = sphi 0, %s157
    %s159 = sphi 0, %s157
    %s160 = sphi 0, %s159
    %s174 = sphi 0, %s160
  $region4: #{double_conv_pallas.4} parent=0 // loop_header_branch
    %16 = sbr.rel (%p14) target = $region8
  $region5: #{double_conv_pallas.4} parent=0 // loop_body
    %s18 = ssub.s32 %s13, 1
    %s19 = ssub.s32 %s13, 2
    %s20 = sadd.s32 %s13, 1
    %s21 = ssub.s32 %s13, %s20
    %p22 = scmp.eq.s32.totalorder %s21, 0
    %s24 = sadd.s32 %s23, 1
    %s25 = scalar_select %p22, %s23, %s24
    %p28 = pneg %p22
    %p29 = scmp.eq.s32.totalorder %s13, 1
    %p30 = por %p28, %p29
    %p31 = scmp.ne.s32.totalorder %s23, %s26
    %p32 = scmp.eq.s32.totalorder %s13, 0
    %p33 = por %p31, %p32
    %p34 = scmp.ne.s32.totalorder %s23, %s26
    %p35 = scmp.eq.s32.totalorder %s18, 1
    %p36 = por %p34, %p35
    %p37 = scmp.ne.s32.totalorder %s26, %s27
    %p38 = scmp.eq.s32.totalorder %s18, 0
    %p39 = por %p37, %p38
    %p40 = scmp.ne.s32.totalorder %s26, %s27
    %p41 = scmp.eq.s32.totalorder %s19, 1
    %p42 = por %p40, %p41
    %p44 = scmp.ne.s32.totalorder %s27, %s43
    %p45 = scmp.eq.s32.totalorder %s19, 0
    %p46 = por %p44, %p45
    %s48 = sadd.s32 %s47, 1
    %p51 = scmp.eq.s32.totalorder %s13, 1
    %p52 = scmp.ne.s32.totalorder %s47, %s49
    %p53 = scmp.eq.s32.totalorder %s13, 0
    %p54 = por %p52, %p53
    %p55 = scmp.ne.s32.totalorder %s47, %s49
    %p56 = scmp.eq.s32.totalorder %s18, 1
    %p57 = por %p55, %p56
    %p58 = scmp.ne.s32.totalorder %s49, %s50
    %p59 = scmp.eq.s32.totalorder %s18, 0
    %p60 = por %p58, %p59
    %p61 = scmp.ne.s32.totalorder %s49, %s50
    %p62 = scmp.eq.s32.totalorder %s19, 1
    %p63 = por %p61, %p62
    %p65 = scmp.ne.s32.totalorder %s50, %s64
    %p66 = scmp.eq.s32.totalorder %s19, 0
    %p67 = por %p65, %p66
    %s69 = sadd.s32 %s68, 1
    %p72 = scmp.eq.s32.totalorder %s13, 1
    %p73 = scmp.ne.s32.totalorder %s68, %s70
    %p74 = scmp.eq.s32.totalorder %s13, 0
    %p75 = por %p73, %p74
    %p76 = scmp.ne.s32.totalorder %s68, %s70
    %p77 = scmp.eq.s32.totalorder %s18, 1
    %p78 = por %p76, %p77
    %p79 = scmp.ne.s32.totalorder %s70, %s71
    %p80 = scmp.eq.s32.totalorder %s18, 0
    %p81 = por %p79, %p80
    %p82 = scmp.ne.s32.totalorder %s70, %s71
    %p83 = scmp.eq.s32.totalorder %s19, 1
    %p84 = por %p82, %p83
    %p86 = scmp.ne.s32.totalorder %s71, %s85
    %p87 = scmp.eq.s32.totalorder %s19, 0
    %p88 = por %p86, %p87
    %s90 = sadd.s32 %s89, 1
    %p93 = scmp.eq.s32.totalorder %s13, 1
    %p94 = scmp.ne.s32.totalorder %s89, %s91
    %p95 = scmp.eq.s32.totalorder %s13, 0
    %p96 = por %p94, %p95
    %p97 = scmp.ne.s32.totalorder %s89, %s91
    %p98 = scmp.eq.s32.totalorder %s18, 1
    %p99 = por %p97, %p98
    %p100 = scmp.ne.s32.totalorder %s91, %s92
    %p101 = scmp.eq.s32.totalorder %s18, 0
    %p102 = por %p100, %p101
    %p103 = scmp.ne.s32.totalorder %s91, %s92
    %p104 = scmp.eq.s32.totalorder %s19, 1
    %p105 = por %p103, %p104
    %p107 = scmp.ne.s32.totalorder %s92, %s106
    %p108 = scmp.eq.s32.totalorder %s19, 0
    %p109 = por %p107, %p108
    %s110 = ssub.s32 %s13, %s20
    %p111 = scmp.eq.s32.totalorder %s110, 0
    %s113 = sadd.s32 %s112, 1
    %s114 = scalar_select %p111, %s112, %s113
    %p117 = pneg %p111
    %p118 = scmp.eq.s32.totalorder %s13, 1
    %p119 = por %p117, %p118
    %p120 = scmp.ne.s32.totalorder %s112, %s115
    %p121 = scmp.eq.s32.totalorder %s13, 0
    %p122 = por %p120, %p121
    %p123 = scmp.ne.s32.totalorder %s112, %s115
    %p124 = scmp.eq.s32.totalorder %s18, 1
    %p125 = por %p123, %p124
    %p126 = scmp.ne.s32.totalorder %s115, %s116
    %p127 = scmp.eq.s32.totalorder %s18, 0
    %p128 = por %p126, %p127
    %p129 = scmp.ne.s32.totalorder %s115, %s116
    %p130 = scmp.eq.s32.totalorder %s19, 1
    %p131 = por %p129, %p130
    %p133 = scmp.ne.s32.totalorder %s116, %s132
    %p134 = scmp.eq.s32.totalorder %s19, 0
    %p135 = por %p133, %p134
    %s137 = sadd.s32 %s136, 1
    %p140 = scmp.eq.s32.totalorder %s13, 1
    %p141 = scmp.ne.s32.totalorder %s136, %s138
    %p142 = scmp.eq.s32.totalorder %s13, 0
    %p143 = por %p141, %p142
    %p144 = scmp.ne.s32.totalorder %s136, %s138
    %p145 = scmp.eq.s32.totalorder %s18, 1
    %p146 = por %p144, %p145
    %p147 = scmp.ne.s32.totalorder %s138, %s139
    %p148 = scmp.eq.s32.totalorder %s18, 0
    %p149 = por %p147, %p148
    %p150 = scmp.ne.s32.totalorder %s138, %s139
    %p151 = scmp.eq.s32.totalorder %s19, 1
    %p152 = por %p150, %p151
    %p154 = scmp.ne.s32.totalorder %s139, %s153
    %p155 = scmp.eq.s32.totalorder %s19, 0
    %p156 = por %p154, %p155
    %s158 = sadd.s32 %s157, 1
    %p161 = scmp.eq.s32.totalorder %s13, 1
    %p162 = scmp.ne.s32.totalorder %s157, %s159
    %p163 = scmp.eq.s32.totalorder %s13, 0
    %p164 = por %p162, %p163
    %p165 = scmp.ne.s32.totalorder %s157, %s159
    %p166 = scmp.eq.s32.totalorder %s18, 1
    %p167 = por %p165, %p166
    %p168 = scmp.ne.s32.totalorder %s159, %s160
    %p169 = scmp.eq.s32.totalorder %s18, 0
    %p170 = por %p168, %p169
    %p171 = scmp.ne.s32.totalorder %s159, %s160
    %p172 = scmp.eq.s32.totalorder %s19, 1
    %p173 = por %p171, %p172
    %p175 = scmp.ne.s32.totalorder %s160, %s174
    %p176 = scmp.eq.s32.totalorder %s19, 0
    %p177 = por %p175, %p176
    %p178 = scmp.le.s32.totalorder 1, %s13
    %p179 = scmp.lt.s32.totalorder %s13, 3
    %p180 = pnand %p178, %p179
    %p181 = pneg %p180
    // Predicated region
    $region9: #{double_conv_pallas.4} parent=5 // pred_check
      _
    $region10: #{double_conv_pallas.4} parent=5 // pred_check_branch
      %183 = sbr.rel (%p180) target = $region12
    $region11: #{double_conv_pallas.4} parent=5 // pred_region
      %s184 = ssub.s32 %s13, 1
      // Predicated region
      $region13: #{double_conv_pallas.4} parent=11 // pred_check
        %p185 = pneg %p60
      $region14: #{double_conv_pallas.4} parent=11 // pred_check_branch
        %187 = sbr.rel (%p185) target = $region16
      $region15: #{double_conv_pallas.4} parent=11 // pred_region
        _
      $region16: #{double_conv_pallas.4} parent=11 // pred_fallthru
        _
      // Predicated region
      $region17: #{double_conv_pallas.4} parent=11 // pred_check
        %p188 = pneg %p81
      $region18: #{double_conv_pallas.4} parent=11 // pred_check_branch
        %190 = sbr.rel (%p188) target = $region20
      $region19: #{double_conv_pallas.4} parent=11 // pred_region
        _
      $region20: #{double_conv_pallas.4} parent=11 // pred_fallthru
        _
      // Predicated region
      $region21: #{double_conv_pallas.4} parent=11 // pred_check
        %p191 = pneg %p102
      $region22: #{double_conv_pallas.4} parent=11 // pred_check_branch
        %193 = sbr.rel (%p191) target = $region24
      $region23: #{double_conv_pallas.4} parent=11 // pred_region
        _
      $region24: #{double_conv_pallas.4} parent=11 // pred_fallthru
        _
    $region12: #{double_conv_pallas.4} parent=5 // pred_fallthru
      _
    %p194 = scmp.lt.s32.totalorder %s13, 2
    // Predicated region
    $region25: #{double_conv_pallas.4} parent=5 // pred_check
      %p195 = pneg %p194
    $region26: #{double_conv_pallas.4} parent=5 // pred_check_branch
      %197 = sbr.rel (%p195) target = $region28
    $region27: #{double_conv_pallas.4} parent=5 // pred_region
      // Predicated region
      $region29: #{double_conv_pallas.4} parent=27 // pred_check
        %p198 = pneg %p33
      $region30: #{double_conv_pallas.4} parent=27 // pred_check_branch
        %200 = sbr.rel (%p198) target = $region32
      $region31: #{double_conv_pallas.4} parent=27 // pred_region
        %p201 = scmp.lt.s32.totalorder %s13, 1
        %s202 = scalar_select %p201, %s13, 1
        %s203 = smul.addr %s202, 32
        %s204 = smul.addr %s203, 8
        %s205 = scalar_lea.vmem %s0, %s204
      $region32: #{double_conv_pallas.4} parent=27 // pred_fallthru
        _
    $region28: #{double_conv_pallas.4} parent=5 // pred_fallthru
      _
    %p206 = scmp.le.s32.totalorder 1, %s13
    %p207 = scmp.lt.s32.totalorder %s13, 3
    %p208 = pnand %p206, %p207
    %p209 = pneg %p208
    // Predicated region
    $region33: #{double_conv_pallas.4} parent=5 // pred_check
      _
    $region34: #{double_conv_pallas.4} parent=5 // pred_check_branch
      %211 = sbr.rel (%p208) target = $region36
    $region35: #{double_conv_pallas.4} parent=5 // pred_region
      %s212 = ssub.s32 %s13, 1
      %p213 = scmp.lt.s32.totalorder %s18, 1
      %s214 = scalar_select %p213, %s18, 1
      %s215 = smul.addr %s214, 32
      %s216 = smul.addr %s215, 8
      %s217 = scalar_lea.vmem %s0, %s216
      %p218 = pneg %p39
      %p219 = pneg %p36
      %p220 = pneg %p60
      %p221 = pneg %p57
      %p222 = pneg %p81
      %p223 = pneg %p78
      %p224 = pneg %p102
      %p225 = pneg %p99
      %p226 = pneg %p128
      %p227 = pneg %p125
      %p228 = scmp.lt.s32.totalorder %s18, 1
      %s229 = scalar_select %p228, %s18, 1
      %s230 = smul.addr %s229, 32
      %s231 = smul.addr %s230, 8
      %s232 = scalar_lea.vmem %s4, %s231
      %p233 = pneg %p149
      %p234 = pneg %p146
      %p235 = pneg %p170
      %p236 = pneg %p167
      %p237 = scmp.lt.s32.totalorder %s18, 1
      %s238 = scalar_select %p237, %s18, 1
      %s239 = smul.addr %s238, 32
      %s240 = smul.addr %s239, 8
      %s241 = scalar_lea.vmem %s0, %s240
      %p242 = scmp.lt.s32.totalorder %s18, 1
      %s243 = scalar_select %p242, %s18, 1
      %s244 = smul.addr %s243, 32
      %s245 = smul.addr %s244, 8
      %s246 = scalar_lea.vmem %s4, %s245
      %p247 = scmp.eq.s32.totalorder %s18, 0
      // Predicated region
      $region37: #{double_conv_pallas.4} parent=35 // pred_check
        %p248 = pneg %p247
      $region38: #{double_conv_pallas.4} parent=35 // pred_check_branch
        %250 = sbr.rel (%p248) target = $region40
      $region39: #{double_conv_pallas.4} parent=35 // pred_region
        %251 = vst [vmem:[#allocation2] sm:$0xff] 0.0
        %252 = vst [vmem:[#allocation2 + $0x8] sm:$0xff] 0.0
        %253 = vst [vmem:[#allocation2 + $0x10] sm:$0x3] 0.0
        %254 = vst [vmem:[#allocation2 + $0x18] sm:$0xff] 0.0
        %255 = vst [vmem:[#allocation2 + $0x20] sm:$0xff] 0.0
        %256 = vst [vmem:[#allocation2 + $0x28] sm:$0x3] 0.0
        %257 = vst [vmem:[#allocation2 + $0x30] sm:$0xff] 0.0
        %258 = vst [vmem:[#allocation2 + $0x38] sm:$0xff] 0.0
        %259 = vst [vmem:[#allocation2 + $0x40] sm:$0x3] 0.0
        %260 = vst [vmem:[#allocation2 + $0x48] sm:$0xff] 0.0
        %261 = vst [vmem:[#allocation2 + $0x50] sm:$0xff] 0.0
        %262 = vst [vmem:[#allocation2 + $0x58] sm:$0x3] 0.0
        %263 = vst [vmem:[#allocation2 + $0x60] sm:$0xff] 0.0
        %264 = vst [vmem:[#allocation2 + $0x68] sm:$0xff] 0.0
        %265 = vst [vmem:[#allocation2 + $0x70] sm:$0x3] 0.0
        %266 = vst [vmem:[#allocation2 + $0x78] sm:$0xff] 0.0
        %267 = vst [vmem:[#allocation2 + $0x80] sm:$0xff] 0.0
        %268 = vst [vmem:[#allocation2 + $0x88] sm:$0x3] 0.0
        %269 = vst [vmem:[#allocation2 + $0x90] sm:$0xff] 0.0
        %270 = vst [vmem:[#allocation2 + $0x98] sm:$0xff] 0.0
        %271 = vst [vmem:[#allocation2 + $0xa0] sm:$0x3] 0.0
        %272 = vst [vmem:[#allocation2 + $0xa8] sm:$0xff] 0.0
        %273 = vst [vmem:[#allocation2 + $0xb0] sm:$0xff] 0.0
        %274 = vst [vmem:[#allocation2 + $0xb8] sm:$0x3] 0.0
        %275 = vst [vmem:[#allocation2 + $0xc0] sm:$0xff] 0.0
        %276 = vst [vmem:[#allocation2 + $0xc8] sm:$0xff] 0.0
        %277 = vst [vmem:[#allocation2 + $0xd0] sm:$0x3] 0.0
        %278 = vst [vmem:[#allocation2 + $0xd8] sm:$0xff] 0.0
        %279 = vst [vmem:[#allocation2 + $0xe0] sm:$0xff] 0.0
        %280 = vst [vmem:[#allocation2 + $0xe8] sm:$0x3] 0.0
        %281 = vst [vmem:[#allocation2 + $0xf0] sm:$0xff] 0.0
        %282 = vst [vmem:[#allocation2 + $0xf8] sm:$0xff] 0.0
        %283 = vst [vmem:[#allocation2 + $0x100] sm:$0x3] 0.0
        %284 = vst [vmem:[#allocation2 + $0x108] sm:$0xff] 0.0
        %285 = vst [vmem:[#allocation2 + $0x110] sm:$0xff] 0.0
        %286 = vst [vmem:[#allocation2 + $0x118] sm:$0x3] 0.0
        %287 = vst [vmem:[#allocation2 + $0x120] sm:$0xff] 0.0
        %288 = vst [vmem:[#allocation2 + $0x128] sm:$0xff] 0.0
        %289 = vst [vmem:[#allocation2 + $0x130] sm:$0x3] 0.0
        %290 = vst [vmem:[#allocation2 + $0x138] sm:$0xff] 0.0
        %291 = vst [vmem:[#allocation2 + $0x140] sm:$0xff] 0.0
        %292 = vst [vmem:[#allocation2 + $0x148] sm:$0x3] 0.0
        %293 = vst [vmem:[#allocation2 + $0x150] sm:$0xff] 0.0
        %294 = vst [vmem:[#allocation2 + $0x158] sm:$0xff] 0.0
        %295 = vst [vmem:[#allocation2 + $0x160] sm:$0x3] 0.0
        %296 = vst [vmem:[#allocation2 + $0x168] sm:$0xff] 0.0
        %297 = vst [vmem:[#allocation2 + $0x170] sm:$0xff] 0.0
        %298 = vst [vmem:[#allocation2 + $0x178] sm:$0x3] 0.0
        %299 = vst [vmem:[#allocation2 + $0x180] sm:$0xff] 0.0
        %300 = vst [vmem:[#allocation2 + $0x188] sm:$0xff] 0.0
        %301 = vst [vmem:[#allocation2 + $0x190] sm:$0x3] 0.0
        %302 = vst [vmem:[#allocation2 + $0x198] sm:$0xff] 0.0
        %303 = vst [vmem:[#allocation2 + $0x1a0] sm:$0xff] 0.0
        %304 = vst [vmem:[#allocation2 + $0x1a8] sm:$0x3] 0.0
        %305 = vst [vmem:[%s5] sm:$0x1] 0.0
        %306 = vst [vmem:[%s6] sm:$0x1] 0.0
      $region40: #{double_conv_pallas.4} parent=35 // pred_fallthru
        _
      %v307 = vld [vmem:[%s241] sm:$0xff]
      %v308 = vld [vmem:[%s241 + $0x8] sm:$0xff]
      %v309 = vld [vmem:[%s241 + $0x10] sm:$0xff]
      %v310 = vld [vmem:[%s241 + $0x18] sm:$0xff]
      %v311 = vld [vmem:[%s241 + $0x20] sm:$0xff]
      %v312 = vld [vmem:[%s241 + $0x28] sm:$0xff]
      %v313 = vld [vmem:[%s241 + $0x30] sm:$0xff]
      %v314 = vld [vmem:[%s241 + $0x38] sm:$0xff]
      %v315 = vld [vmem:[%s241 + $0x40] sm:$0xff]
      %v316 = vld [vmem:[%s241 + $0x48] sm:$0xff]
      %v317 = vld [vmem:[%s241 + $0x50] sm:$0xff]
      %v318 = vld [vmem:[%s241 + $0x58] sm:$0xff]
      %v319 = vld [vmem:[%s241 + $0x60] sm:$0xff]
      %v320 = vld [vmem:[%s241 + $0x68] sm:$0xff]
      %v321 = vld [vmem:[%s241 + $0x70] sm:$0xff]
      %v322 = vld [vmem:[%s241 + $0x78] sm:$0xff]
      %v323 = vld [vmem:[%s241 + $0x80] sm:$0xff]
      %v324 = vld [vmem:[%s241 + $0x88] sm:$0xff]
      %v325 = vld [vmem:[%s241 + $0x90] sm:$0xff]
      %v326 = vld [vmem:[%s241 + $0x98] sm:$0xff]
      %v327 = vld [vmem:[%s241 + $0xa0] sm:$0xff]
      %v328 = vld [vmem:[%s241 + $0xa8] sm:$0xff]
      %v329 = vld [vmem:[%s241 + $0xb0] sm:$0xff]
      %v330 = vld [vmem:[%s241 + $0xb8] sm:$0xff]
      %v331 = vld [vmem:[%s241 + $0xc0] sm:$0xff]
      %v332 = vld [vmem:[%s241 + $0xc8] sm:$0xff]
      %v333 = vld [vmem:[%s241 + $0xd0] sm:$0xff]
      %v334 = vld [vmem:[%s241 + $0xd8] sm:$0xff]
      %v335 = vld [vmem:[%s241 + $0xe0] sm:$0xff]
      %v336 = vld [vmem:[%s241 + $0xe8] sm:$0xff]
      %v337 = vld [vmem:[%s241 + $0xf0] sm:$0xff]
      %v338 = vld [vmem:[%s241 + $0xf8] sm:$0xff]
      %v339 = vld [vmem:[%s1] sm:$0x1]
      %v341 = vlaneseq
      %v342 = vshrl.u32 %v341, 7
      %v343 = vsub.s32 0, %v342
      %v344 = vrot.slane %v339, %v343
      %v346 = vmul.f32 %v307, %v344
      %v347 = vmul.f32 %v308, %v344
      %v348 = vmul.f32 %v309, %v344
      %v349 = vmul.f32 %v310, %v344
      %v350 = vmul.f32 %v311, %v344
      %v351 = vmul.f32 %v312, %v344
      %v352 = vmul.f32 %v313, %v344
      %v353 = vmul.f32 %v314, %v344
      %v354 = vmul.f32 %v315, %v344
      %v355 = vmul.f32 %v316, %v344
      %v356 = vmul.f32 %v317, %v344
      %v357 = vmul.f32 %v318, %v344
      %v358 = vmul.f32 %v319, %v344
      %v359 = vmul.f32 %v320, %v344
      %v360 = vmul.f32 %v321, %v344
      %v361 = vmul.f32 %v322, %v344
      %v362 = vmul.f32 %v323, %v344
      %v363 = vmul.f32 %v324, %v344
      %v364 = vmul.f32 %v325, %v344
      %v365 = vmul.f32 %v326, %v344
      %v366 = vmul.f32 %v327, %v344
      %v367 = vmul.f32 %v328, %v344
      %v368 = vmul.f32 %v329, %v344
      %v369 = vmul.f32 %v330, %v344
      %v370 = vmul.f32 %v331, %v344
      %v371 = vmul.f32 %v332, %v344
      %v372 = vmul.f32 %v333, %v344
      %v373 = vmul.f32 %v334, %v344
      %v374 = vmul.f32 %v335, %v344
      %v375 = vmul.f32 %v336, %v344
      %v376 = vmul.f32 %v337, %v344
      %v377 = vmul.f32 %v338, %v344
      %v378 = vld [vmem:[%s2] sm:$0x1]
      %v380 = vlaneseq
      %v381 = vshrl.u32 %v380, 7
      %v382 = vsub.s32 0, %v381
      %v383 = vrot.slane %v378, %v382
      %v385 = vadd.f32 %v346, %v383
      %v386 = vadd.f32 %v347, %v383
      %v387 = vadd.f32 %v348, %v383
      %v388 = vadd.f32 %v349, %v383
      %v389 = vadd.f32 %v350, %v383
      %v390 = vadd.f32 %v351, %v383
      %v391 = vadd.f32 %v352, %v383
      %v392 = vadd.f32 %v353, %v383
      %v393 = vadd.f32 %v354, %v383
      %v394 = vadd.f32 %v355, %v383
      %v395 = vadd.f32 %v356, %v383
      %v396 = vadd.f32 %v357, %v383
      %v397 = vadd.f32 %v358, %v383
      %v398 = vadd.f32 %v359, %v383
      %v399 = vadd.f32 %v360, %v383
      %v400 = vadd.f32 %v361, %v383
      %v401 = vadd.f32 %v362, %v383
      %v402 = vadd.f32 %v363, %v383
      %v403 = vadd.f32 %v364, %v383
      %v404 = vadd.f32 %v365, %v383
      %v405 = vadd.f32 %v366, %v383
      %v406 = vadd.f32 %v367, %v383
      %v407 = vadd.f32 %v368, %v383
      %v408 = vadd.f32 %v369, %v383
      %v409 = vadd.f32 %v370, %v383
      %v410 = vadd.f32 %v371, %v383
      %v411 = vadd.f32 %v372, %v383
      %v412 = vadd.f32 %v373, %v383
      %v413 = vadd.f32 %v374, %v383
      %v414 = vadd.f32 %v375, %v383
      %v415 = vadd.f32 %v376, %v383
      %v416 = vadd.f32 %v377, %v383
      %v417 = vmax.f32 %v385, 0.0
      %v418 = vmax.f32 %v386, 0.0
      %v419 = vmax.f32 %v387, 0.0
      %v420 = vmax.f32 %v388, 0.0
      %v421 = vmax.f32 %v389, 0.0
      %v422 = vmax.f32 %v390, 0.0
      %v423 = vmax.f32 %v391, 0.0
      %v424 = vmax.f32 %v392, 0.0
      %v425 = vmax.f32 %v393, 0.0
      %v426 = vmax.f32 %v394, 0.0
      %v427 = vmax.f32 %v395, 0.0
      %v428 = vmax.f32 %v396, 0.0
      %v429 = vmax.f32 %v397, 0.0
      %v430 = vmax.f32 %v398, 0.0
      %v431 = vmax.f32 %v399, 0.0
      %v432 = vmax.f32 %v400, 0.0
      %v433 = vmax.f32 %v401, 0.0
      %v434 = vmax.f32 %v402, 0.0
      %v435 = vmax.f32 %v403, 0.0
      %v436 = vmax.f32 %v404, 0.0
      %v437 = vmax.f32 %v405, 0.0
      %v438 = vmax.f32 %v406, 0.0
      %v439 = vmax.f32 %v407, 0.0
      %v440 = vmax.f32 %v408, 0.0
      %v441 = vmax.f32 %v409, 0.0
      %v442 = vmax.f32 %v410, 0.0
      %v443 = vmax.f32 %v411, 0.0
      %v444 = vmax.f32 %v412, 0.0
      %v445 = vmax.f32 %v413, 0.0
      %v446 = vmax.f32 %v414, 0.0
      %v447 = vmax.f32 %v415, 0.0
      %v448 = vmax.f32 %v416, 0.0
      %s449 = scalar_lea.vmem [#allocation2], 24
      %450 = vst [vmem:[%s449 + $0x1] sm:$0xff] %v417
      %451 = vst [vmem:[%s449 + $0x9] sm:$0xff] %v418
      %452 = vst [vmem:[%s449 + $0x19] sm:$0xff] %v419
      %453 = vst [vmem:[%s449 + $0x21] sm:$0xff] %v420
      %454 = vst [vmem:[%s449 + $0x31] sm:$0xff] %v421
      %455 = vst [vmem:[%s449 + $0x39] sm:$0xff] %v422
      %456 = vst [vmem:[%s449 + $0x49] sm:$0xff] %v423
      %457 = vst [vmem:[%s449 + $0x51] sm:$0xff] %v424
      %458 = vst [vmem:[%s449 + $0x61] sm:$0xff] %v425
      %459 = vst [vmem:[%s449 + $0x69] sm:$0xff] %v426
      %460 = vst [vmem:[%s449 + $0x79] sm:$0xff] %v427
      %461 = vst [vmem:[%s449 + $0x81] sm:$0xff] %v428
      %462 = vst [vmem:[%s449 + $0x91] sm:$0xff] %v429
      %463 = vst [vmem:[%s449 + $0x99] sm:$0xff] %v430
      %464 = vst [vmem:[%s449 + $0xa9] sm:$0xff] %v431
      %465 = vst [vmem:[%s449 + $0xb1] sm:$0xff] %v432
      %466 = vst [vmem:[%s449 + $0xc1] sm:$0xff] %v433
      %467 = vst [vmem:[%s449 + $0xc9] sm:$0xff] %v434
      %468 = vst [vmem:[%s449 + $0xd9] sm:$0xff] %v435
      %469 = vst [vmem:[%s449 + $0xe1] sm:$0xff] %v436
      %470 = vst [vmem:[%s449 + $0xf1] sm:$0xff] %v437
      %471 = vst [vmem:[%s449 + $0xf9] sm:$0xff] %v438
      %472 = vst [vmem:[%s449 + $0x109] sm:$0xff] %v439
      %473 = vst [vmem:[%s449 + $0x111] sm:$0xff] %v440
      %474 = vst [vmem:[%s449 + $0x121] sm:$0xff] %v441
      %475 = vst [vmem:[%s449 + $0x129] sm:$0xff] %v442
      %476 = vst [vmem:[%s449 + $0x139] sm:$0xff] %v443
      %477 = vst [vmem:[%s449 + $0x141] sm:$0xff] %v444
      %478 = vst [vmem:[%s449 + $0x151] sm:$0xff] %v445
      %479 = vst [vmem:[%s449 + $0x159] sm:$0xff] %v446
      %480 = vst [vmem:[%s449 + $0x169] sm:$0xff] %v447
      %481 = vst [vmem:[%s449 + $0x171] sm:$0xff] %v448
      %v482 = vld [vmem:[#allocation2] sm:$0xff]
      %v483 = vld [vmem:[#allocation2 + $0x8] sm:$0xff]
      %v484 = vld [vmem:[#allocation2 + $0x18] sm:$0xff]
      %v485 = vld [vmem:[#allocation2 + $0x20] sm:$0xff]
      %v486 = vld [vmem:[#allocation2 + $0x30] sm:$0xff]
      %v487 = vld [vmem:[#allocation2 + $0x38] sm:$0xff]
      %v488 = vld [vmem:[#allocation2 + $0x48] sm:$0xff]
      %v489 = vld [vmem:[#allocation2 + $0x50] sm:$0xff]
      %v490 = vld [vmem:[#allocation2 + $0x60] sm:$0xff]
      %v491 = vld [vmem:[#allocation2 + $0x68] sm:$0xff]
      %v492 = vld [vmem:[#allocation2 + $0x78] sm:$0xff]
      %v493 = vld [vmem:[#allocation2 + $0x80] sm:$0xff]
      %v494 = vld [vmem:[#allocation2 + $0x90] sm:$0xff]
      %v495 = vld [vmem:[#allocation2 + $0x98] sm:$0xff]
      %v496 = vld [vmem:[#allocation2 + $0xa8] sm:$0xff]
      %v497 = vld [vmem:[#allocation2 + $0xb0] sm:$0xff]
      %v498 = vld [vmem:[#allocation2 + $0xc0] sm:$0xff]
      %v499 = vld [vmem:[#allocation2 + $0xc8] sm:$0xff]
      %v500 = vld [vmem:[#allocation2 + $0xd8] sm:$0xff]
      %v501 = vld [vmem:[#allocation2 + $0xe0] sm:$0xff]
      %v502 = vld [vmem:[#allocation2 + $0xf0] sm:$0xff]
      %v503 = vld [vmem:[#allocation2 + $0xf8] sm:$0xff]
      %v504 = vld [vmem:[#allocation2 + $0x108] sm:$0xff]
      %v505 = vld [vmem:[#allocation2 + $0x110] sm:$0xff]
      %v506 = vld [vmem:[#allocation2 + $0x120] sm:$0xff]
      %v507 = vld [vmem:[#allocation2 + $0x128] sm:$0xff]
      %v508 = vld [vmem:[#allocation2 + $0x138] sm:$0xff]
      %v509 = vld [vmem:[#allocation2 + $0x140] sm:$0xff]
      %v510 = vld [vmem:[#allocation2 + $0x150] sm:$0xff]
      %v511 = vld [vmem:[#allocation2 + $0x158] sm:$0xff]
      %v512 = vld [vmem:[#allocation2 + $0x168] sm:$0xff]
      %v513 = vld [vmem:[#allocation2 + $0x170] sm:$0xff]
      %v514 = vld [vmem:[#allocation2 + $0x1] sm:$0xff]
      %v515 = vld [vmem:[#allocation2 + $0x9] sm:$0xff]
      %v516 = vld [vmem:[#allocation2 + $0x19] sm:$0xff]
      %v517 = vld [vmem:[#allocation2 + $0x21] sm:$0xff]
      %v518 = vld [vmem:[#allocation2 + $0x31] sm:$0xff]
      %v519 = vld [vmem:[#allocation2 + $0x39] sm:$0xff]
      %v520 = vld [vmem:[#allocation2 + $0x49] sm:$0xff]
      %v521 = vld [vmem:[#allocation2 + $0x51] sm:$0xff]
      %v522 = vld [vmem:[#allocation2 + $0x61] sm:$0xff]
      %v523 = vld [vmem:[#allocation2 + $0x69] sm:$0xff]
      %v524 = vld [vmem:[#allocation2 + $0x79] sm:$0xff]
      %v525 = vld [vmem:[#allocation2 + $0x81] sm:$0xff]
      %v526 = vld [vmem:[#allocation2 + $0x91] sm:$0xff]
      %v527 = vld [vmem:[#allocation2 + $0x99] sm:$0xff]
      %v528 = vld [vmem:[#allocation2 + $0xa9] sm:$0xff]
      %v529 = vld [vmem:[#allocation2 + $0xb1] sm:$0xff]
      %v530 = vld [vmem:[#allocation2 + $0xc1] sm:$0xff]
      %v531 = vld [vmem:[#allocation2 + $0xc9] sm:$0xff]
      %v532 = vld [vmem:[#allocation2 + $0xd9] sm:$0xff]
      %v533 = vld [vmem:[#allocation2 + $0xe1] sm:$0xff]
      %v534 = vld [vmem:[#allocation2 + $0xf1] sm:$0xff]
      %v535 = vld [vmem:[#allocation2 + $0xf9] sm:$0xff]
      %v536 = vld [vmem:[#allocation2 + $0x109] sm:$0xff]
      %v537 = vld [vmem:[#allocation2 + $0x111] sm:$0xff]
      %v538 = vld [vmem:[#allocation2 + $0x121] sm:$0xff]
      %v539 = vld [vmem:[#allocation2 + $0x129] sm:$0xff]
      %v540 = vld [vmem:[#allocation2 + $0x139] sm:$0xff]
      %v541 = vld [vmem:[#allocation2 + $0x141] sm:$0xff]
      %v542 = vld [vmem:[#allocation2 + $0x151] sm:$0xff]
      %v543 = vld [vmem:[#allocation2 + $0x159] sm:$0xff]
      %v544 = vld [vmem:[#allocation2 + $0x169] sm:$0xff]
      %v545 = vld [vmem:[#allocation2 + $0x171] sm:$0xff]
      %v546 = vld [vmem:[#allocation2 + $0x2] sm:$0xff]
      %v547 = vld [vmem:[#allocation2 + $0xa] sm:$0xff]
      %v548 = vld [vmem:[#allocation2 + $0x1a] sm:$0xff]
      %v549 = vld [vmem:[#allocation2 + $0x22] sm:$0xff]
      %v550 = vld [vmem:[#allocation2 + $0x32] sm:$0xff]
      %v551 = vld [vmem:[#allocation2 + $0x3a] sm:$0xff]
      %v552 = vld [vmem:[#allocation2 + $0x4a] sm:$0xff]
      %v553 = vld [vmem:[#allocation2 + $0x52] sm:$0xff]
      %v554 = vld [vmem:[#allocation2 + $0x62] sm:$0xff]
      %v555 = vld [vmem:[#allocation2 + $0x6a] sm:$0xff]
      %v556 = vld [vmem:[#allocation2 + $0x7a] sm:$0xff]
      %v557 = vld [vmem:[#allocation2 + $0x82] sm:$0xff]
      %v558 = vld [vmem:[#allocation2 + $0x92] sm:$0xff]
      %v559 = vld [vmem:[#allocation2 + $0x9a] sm:$0xff]
      %v560 = vld [vmem:[#allocation2 + $0xaa] sm:$0xff]
      %v561 = vld [vmem:[#allocation2 + $0xb2] sm:$0xff]
      %v562 = vld [vmem:[#allocation2 + $0xc2] sm:$0xff]
      %v563 = vld [vmem:[#allocation2 + $0xca] sm:$0xff]
      %v564 = vld [vmem:[#allocation2 + $0xda] sm:$0xff]
      %v565 = vld [vmem:[#allocation2 + $0xe2] sm:$0xff]
      %v566 = vld [vmem:[#allocation2 + $0xf2] sm:$0xff]
      %v567 = vld [vmem:[#allocation2 + $0xfa] sm:$0xff]
      %v568 = vld [vmem:[#allocation2 + $0x10a] sm:$0xff]
      %v569 = vld [vmem:[#allocation2 + $0x112] sm:$0xff]
      %v570 = vld [vmem:[#allocation2 + $0x122] sm:$0xff]
      %v571 = vld [vmem:[#allocation2 + $0x12a] sm:$0xff]
      %v572 = vld [vmem:[#allocation2 + $0x13a] sm:$0xff]
      %v573 = vld [vmem:[#allocation2 + $0x142] sm:$0xff]
      %v574 = vld [vmem:[#allocation2 + $0x152] sm:$0xff]
      %v575 = vld [vmem:[#allocation2 + $0x15a] sm:$0xff]
      %v576 = vld [vmem:[#allocation2 + $0x16a] sm:$0xff]
      %v577 = vld [vmem:[#allocation2 + $0x172] sm:$0xff]
      %v578 = vld [vmem:[%s449] sm:$0xff]
      %v579 = vld [vmem:[%s449 + $0x8] sm:$0xff]
      %v580 = vld [vmem:[%s449 + $0x18] sm:$0xff]
      %v581 = vld [vmem:[%s449 + $0x20] sm:$0xff]
      %v582 = vld [vmem:[%s449 + $0x30] sm:$0xff]
      %v583 = vld [vmem:[%s449 + $0x38] sm:$0xff]
      %v584 = vld [vmem:[%s449 + $0x48] sm:$0xff]
      %v585 = vld [vmem:[%s449 + $0x50] sm:$0xff]
      %v586 = vld [vmem:[%s449 + $0x60] sm:$0xff]
      %v587 = vld [vmem:[%s449 + $0x68] sm:$0xff]
      %v588 = vld [vmem:[%s449 + $0x78] sm:$0xff]
      %v589 = vld [vmem:[%s449 + $0x80] sm:$0xff]
      %v590 = vld [vmem:[%s449 + $0x90] sm:$0xff]
      %v591 = vld [vmem:[%s449 + $0x98] sm:$0xff]
      %v592 = vld [vmem:[%s449 + $0xa8] sm:$0xff]
      %v593 = vld [vmem:[%s449 + $0xb0] sm:$0xff]
      %v594 = vld [vmem:[%s449 + $0xc0] sm:$0xff]
      %v595 = vld [vmem:[%s449 + $0xc8] sm:$0xff]
      %v596 = vld [vmem:[%s449 + $0xd8] sm:$0xff]
      %v597 = vld [vmem:[%s449 + $0xe0] sm:$0xff]
      %v598 = vld [vmem:[%s449 + $0xf0] sm:$0xff]
      %v599 = vld [vmem:[%s449 + $0xf8] sm:$0xff]
      %v600 = vld [vmem:[%s449 + $0x108] sm:$0xff]
      %v601 = vld [vmem:[%s449 + $0x110] sm:$0xff]
      %v602 = vld [vmem:[%s449 + $0x120] sm:$0xff]
      %v603 = vld [vmem:[%s449 + $0x128] sm:$0xff]
      %v604 = vld [vmem:[%s449 + $0x138] sm:$0xff]
      %v605 = vld [vmem:[%s449 + $0x140] sm:$0xff]
      %v606 = vld [vmem:[%s449 + $0x150] sm:$0xff]
      %v607 = vld [vmem:[%s449 + $0x158] sm:$0xff]
      %v608 = vld [vmem:[%s449 + $0x168] sm:$0xff]
      %v609 = vld [vmem:[%s449 + $0x170] sm:$0xff]
      %v610 = vld [vmem:[%s449 + $0x1] sm:$0xff]
      %v611 = vld [vmem:[%s449 + $0x9] sm:$0xff]
      %v612 = vld [vmem:[%s449 + $0x19] sm:$0xff]
      %v613 = vld [vmem:[%s449 + $0x21] sm:$0xff]
      %v614 = vld [vmem:[%s449 + $0x31] sm:$0xff]
      %v615 = vld [vmem:[%s449 + $0x39] sm:$0xff]
      %v616 = vld [vmem:[%s449 + $0x49] sm:$0xff]
      %v617 = vld [vmem:[%s449 + $0x51] sm:$0xff]
      %v618 = vld [vmem:[%s449 + $0x61] sm:$0xff]
      %v619 = vld [vmem:[%s449 + $0x69] sm:$0xff]
      %v620 = vld [vmem:[%s449 + $0x79] sm:$0xff]
      %v621 = vld [vmem:[%s449 + $0x81] sm:$0xff]
      %v622 = vld [vmem:[%s449 + $0x91] sm:$0xff]
      %v623 = vld [vmem:[%s449 + $0x99] sm:$0xff]
      %v624 = vld [vmem:[%s449 + $0xa9] sm:$0xff]
      %v625 = vld [vmem:[%s449 + $0xb1] sm:$0xff]
      %v626 = vld [vmem:[%s449 + $0xc1] sm:$0xff]
      %v627 = vld [vmem:[%s449 + $0xc9] sm:$0xff]
      %v628 = vld [vmem:[%s449 + $0xd9] sm:$0xff]
      %v629 = vld [vmem:[%s449 + $0xe1] sm:$0xff]
      %v630 = vld [vmem:[%s449 + $0xf1] sm:$0xff]
      %v631 = vld [vmem:[%s449 + $0xf9] sm:$0xff]
      %v632 = vld [vmem:[%s449 + $0x109] sm:$0xff]
      %v633 = vld [vmem:[%s449 + $0x111] sm:$0xff]
      %v634 = vld [vmem:[%s449 + $0x121] sm:$0xff]
      %v635 = vld [vmem:[%s449 + $0x129] sm:$0xff]
      %v636 = vld [vmem:[%s449 + $0x139] sm:$0xff]
      %v637 = vld [vmem:[%s449 + $0x141] sm:$0xff]
      %v638 = vld [vmem:[%s449 + $0x151] sm:$0xff]
      %v639 = vld [vmem:[%s449 + $0x159] sm:$0xff]
      %v640 = vld [vmem:[%s449 + $0x169] sm:$0xff]
      %v641 = vld [vmem:[%s449 + $0x171] sm:$0xff]
      %v642 = vld [vmem:[%s449 + $0x2] sm:$0xff]
      %v643 = vld [vmem:[%s449 + $0xa] sm:$0xff]
      %v644 = vld [vmem:[%s449 + $0x1a] sm:$0xff]
      %v645 = vld [vmem:[%s449 + $0x22] sm:$0xff]
      %v646 = vld [vmem:[%s449 + $0x32] sm:$0xff]
      %v647 = vld [vmem:[%s449 + $0x3a] sm:$0xff]
      %v648 = vld [vmem:[%s449 + $0x4a] sm:$0xff]
      %v649 = vld [vmem:[%s449 + $0x52] sm:$0xff]
      %v650 = vld [vmem:[%s449 + $0x62] sm:$0xff]
      %v651 = vld [vmem:[%s449 + $0x6a] sm:$0xff]
      %v652 = vld [vmem:[%s449 + $0x7a] sm:$0xff]
      %v653 = vld [vmem:[%s449 + $0x82] sm:$0xff]
      %v654 = vld [vmem:[%s449 + $0x92] sm:$0xff]
      %v655 = vld [vmem:[%s449 + $0x9a] sm:$0xff]
      %v656 = vld [vmem:[%s449 + $0xaa] sm:$0xff]
      %v657 = vld [vmem:[%s449 + $0xb2] sm:$0xff]
      %v658 = vld [vmem:[%s449 + $0xc2] sm:$0xff]
      %v659 = vld [vmem:[%s449 + $0xca] sm:$0xff]
      %v660 = vld [vmem:[%s449 + $0xda] sm:$0xff]
      %v661 = vld [vmem:[%s449 + $0xe2] sm:$0xff]
      %v662 = vld [vmem:[%s449 + $0xf2] sm:$0xff]
      %v663 = vld [vmem:[%s449 + $0xfa] sm:$0xff]
      %v664 = vld [vmem:[%s449 + $0x10a] sm:$0xff]
      %v665 = vld [vmem:[%s449 + $0x112] sm:$0xff]
      %v666 = vld [vmem:[%s449 + $0x122] sm:$0xff]
      %v667 = vld [vmem:[%s449 + $0x12a] sm:$0xff]
      %v668 = vld [vmem:[%s449 + $0x13a] sm:$0xff]
      %v669 = vld [vmem:[%s449 + $0x142] sm:$0xff]
      %v670 = vld [vmem:[%s449 + $0x152] sm:$0xff]
      %v671 = vld [vmem:[%s449 + $0x15a] sm:$0xff]
      %v672 = vld [vmem:[%s449 + $0x16a] sm:$0xff]
      %v673 = vld [vmem:[%s449 + $0x172] sm:$0xff]
      %s674 = scalar_lea.vmem [#allocation2], 48
      %v675 = vld [vmem:[%s674] sm:$0xff]
      %v676 = vld [vmem:[%s674 + $0x8] sm:$0xff]
      %v677 = vld [vmem:[%s674 + $0x18] sm:$0xff]
      %v678 = vld [vmem:[%s674 + $0x20] sm:$0xff]
      %v679 = vld [vmem:[%s674 + $0x30] sm:$0xff]
      %v680 = vld [vmem:[%s674 + $0x38] sm:$0xff]
      %v681 = vld [vmem:[%s674 + $0x48] sm:$0xff]
      %v682 = vld [vmem:[%s674 + $0x50] sm:$0xff]
      %v683 = vld [vmem:[%s674 + $0x60] sm:$0xff]
      %v684 = vld [vmem:[%s674 + $0x68] sm:$0xff]
      %v685 = vld [vmem:[%s674 + $0x78] sm:$0xff]
      %v686 = vld [vmem:[%s674 + $0x80] sm:$0xff]
      %v687 = vld [vmem:[%s674 + $0x90] sm:$0xff]
      %v688 = vld [vmem:[%s674 + $0x98] sm:$0xff]
      %v689 = vld [vmem:[%s674 + $0xa8] sm:$0xff]
      %v690 = vld [vmem:[%s674 + $0xb0] sm:$0xff]
      %v691 = vld [vmem:[%s674 + $0xc0] sm:$0xff]
      %v692 = vld [vmem:[%s674 + $0xc8] sm:$0xff]
      %v693 = vld [vmem:[%s674 + $0xd8] sm:$0xff]
      %v694 = vld [vmem:[%s674 + $0xe0] sm:$0xff]
      %v695 = vld [vmem:[%s674 + $0xf0] sm:$0xff]
      %v696 = vld [vmem:[%s674 + $0xf8] sm:$0xff]
      %v697 = vld [vmem:[%s674 + $0x108] sm:$0xff]
      %v698 = vld [vmem:[%s674 + $0x110] sm:$0xff]
      %v699 = vld [vmem:[%s674 + $0x120] sm:$0xff]
      %v700 = vld [vmem:[%s674 + $0x128] sm:$0xff]
      %v701 = vld [vmem:[%s674 + $0x138] sm:$0xff]
      %v702 = vld [vmem:[%s674 + $0x140] sm:$0xff]
      %v703 = vld [vmem:[%s674 + $0x150] sm:$0xff]
      %v704 = vld [vmem:[%s674 + $0x158] sm:$0xff]
      %v705 = vld [vmem:[%s674 + $0x168] sm:$0xff]
      %v706 = vld [vmem:[%s674 + $0x170] sm:$0xff]
      %v707 = vld [vmem:[%s674 + $0x1] sm:$0xff]
      %v708 = vld [vmem:[%s674 + $0x9] sm:$0xff]
      %v709 = vld [vmem:[%s674 + $0x19] sm:$0xff]
      %v710 = vld [vmem:[%s674 + $0x21] sm:$0xff]
      %v711 = vld [vmem:[%s674 + $0x31] sm:$0xff]
      %v712 = vld [vmem:[%s674 + $0x39] sm:$0xff]
      %v713 = vld [vmem:[%s674 + $0x49] sm:$0xff]
      %v714 = vld [vmem:[%s674 + $0x51] sm:$0xff]
      %v715 = vld [vmem:[%s674 + $0x61] sm:$0xff]
      %v716 = vld [vmem:[%s674 + $0x69] sm:$0xff]
      %v717 = vld [vmem:[%s674 + $0x79] sm:$0xff]
      %v718 = vld [vmem:[%s674 + $0x81] sm:$0xff]
      %v719 = vld [vmem:[%s674 + $0x91] sm:$0xff]
      %v720 = vld [vmem:[%s674 + $0x99] sm:$0xff]
      %v721 = vld [vmem:[%s674 + $0xa9] sm:$0xff]
      %v722 = vld [vmem:[%s674 + $0xb1] sm:$0xff]
      %v723 = vld [vmem:[%s674 + $0xc1] sm:$0xff]
      %v724 = vld [vmem:[%s674 + $0xc9] sm:$0xff]
      %v725 = vld [vmem:[%s674 + $0xd9] sm:$0xff]
      %v726 = vld [vmem:[%s674 + $0xe1] sm:$0xff]
      %v727 = vld [vmem:[%s674 + $0xf1] sm:$0xff]
      %v728 = vld [vmem:[%s674 + $0xf9] sm:$0xff]
      %v729 = vld [vmem:[%s674 + $0x109] sm:$0xff]
      %v730 = vld [vmem:[%s674 + $0x111] sm:$0xff]
      %v731 = vld [vmem:[%s674 + $0x121] sm:$0xff]
      %v732 = vld [vmem:[%s674 + $0x129] sm:$0xff]
      %v733 = vld [vmem:[%s674 + $0x139] sm:$0xff]
      %v734 = vld [vmem:[%s674 + $0x141] sm:$0xff]
      %v735 = vld [vmem:[%s674 + $0x151] sm:$0xff]
      %v736 = vld [vmem:[%s674 + $0x159] sm:$0xff]
      %v737 = vld [vmem:[%s674 + $0x169] sm:$0xff]
      %v738 = vld [vmem:[%s674 + $0x171] sm:$0xff]
      %v739 = vld [vmem:[%s674 + $0x2] sm:$0xff]
      %v740 = vld [vmem:[%s674 + $0xa] sm:$0xff]
      %v741 = vld [vmem:[%s674 + $0x1a] sm:$0xff]
      %v742 = vld [vmem:[%s674 + $0x22] sm:$0xff]
      %v743 = vld [vmem:[%s674 + $0x32] sm:$0xff]
      %v744 = vld [vmem:[%s674 + $0x3a] sm:$0xff]
      %v745 = vld [vmem:[%s674 + $0x4a] sm:$0xff]
      %v746 = vld [vmem:[%s674 + $0x52] sm:$0xff]
      %v747 = vld [vmem:[%s674 + $0x62] sm:$0xff]
      %v748 = vld [vmem:[%s674 + $0x6a] sm:$0xff]
      %v749 = vld [vmem:[%s674 + $0x7a] sm:$0xff]
      %v750 = vld [vmem:[%s674 + $0x82] sm:$0xff]
      %v751 = vld [vmem:[%s674 + $0x92] sm:$0xff]
      %v752 = vld [vmem:[%s674 + $0x9a] sm:$0xff]
      %v753 = vld [vmem:[%s674 + $0xaa] sm:$0xff]
      %v754 = vld [vmem:[%s674 + $0xb2] sm:$0xff]
      %v755 = vld [vmem:[%s674 + $0xc2] sm:$0xff]
      %v756 = vld [vmem:[%s674 + $0xca] sm:$0xff]
      %v757 = vld [vmem:[%s674 + $0xda] sm:$0xff]
      %v758 = vld [vmem:[%s674 + $0xe2] sm:$0xff]
      %v759 = vld [vmem:[%s674 + $0xf2] sm:$0xff]
      %v760 = vld [vmem:[%s674 + $0xfa] sm:$0xff]
      %v761 = vld [vmem:[%s674 + $0x10a] sm:$0xff]
      %v762 = vld [vmem:[%s674 + $0x112] sm:$0xff]
      %v763 = vld [vmem:[%s674 + $0x122] sm:$0xff]
      %v764 = vld [vmem:[%s674 + $0x12a] sm:$0xff]
      %v765 = vld [vmem:[%s674 + $0x13a] sm:$0xff]
      %v766 = vld [vmem:[%s674 + $0x142] sm:$0xff]
      %v767 = vld [vmem:[%s674 + $0x152] sm:$0xff]
      %v768 = vld [vmem:[%s674 + $0x15a] sm:$0xff]
      %v769 = vld [vmem:[%s674 + $0x16a] sm:$0xff]
      %v770 = vld [vmem:[%s674 + $0x172] sm:$0xff]
      %v771 = vld [vmem:[%s3] sm:$0xff]
      %v772 = vld [vmem:[%s3 + $0x8] sm:$0xff]
      %v773 = vld [vmem:[%s3 + $0x10] sm:$0xff]
      %v774 = vld [vmem:[%s3 + $0x18] sm:$0xff]
      %v775 = vld [vmem:[%s3 + $0x20] sm:$0xff]
      %v776 = vld [vmem:[%s3 + $0x28] sm:$0xff]
      %v777 = vld [vmem:[%s3 + $0x30] sm:$0xff]
      %v778 = vld [vmem:[%s3 + $0x38] sm:$0xff]
      %v779 = vld [vmem:[%s3 + $0x40] sm:$0xff]
      %v780 = vld [vmem:[%s3 + $0x48] sm:$0xff]
      %v781 = vld [vmem:[%s3 + $0x50] sm:$0xff]
      %v782 = vld [vmem:[%s3 + $0x58] sm:$0xff]
      %v783 = vld [vmem:[%s3 + $0x60] sm:$0xff]
      %v784 = vld [vmem:[%s3 + $0x68] sm:$0xff]
      %v785 = vld [vmem:[%s3 + $0x70] sm:$0xff]
      %v786 = vld [vmem:[%s3 + $0x78] sm:$0xff]
      %v787 = vld [vmem:[%s3 + $0x80] sm:$0xff]
      %v788 = vld [vmem:[%s3 + $0x88] sm:$0xff]
      %v789 = vld [vmem:[%s3 + $0x90] sm:$0xff]
      %v790 = vld [vmem:[%s3 + $0x98] sm:$0xff]
      %v791 = vld [vmem:[%s3 + $0xa0] sm:$0xff]
      %v792 = vld [vmem:[%s3 + $0xa8] sm:$0xff]
      %v793 = vld [vmem:[%s3 + $0xb0] sm:$0xff]
      %v794 = vld [vmem:[%s3 + $0xb8] sm:$0xff]
      %v795 = vld [vmem:[%s3 + $0xc0] sm:$0xff]
      %v796 = vld [vmem:[%s3 + $0xc8] sm:$0xff]
      %v797 = vld [vmem:[%s3 + $0xd0] sm:$0xff]
      %v798 = vld [vmem:[%s3 + $0xd8] sm:$0xff]
      %v799 = vld [vmem:[%s3 + $0xe0] sm:$0xff]
      %v800 = vld [vmem:[%s3 + $0xe8] sm:$0xff]
      %v801 = vld [vmem:[%s3 + $0xf0] sm:$0xff]
      %v802 = vld [vmem:[%s3 + $0xf8] sm:$0xff]
      %v803 = vld [vmem:[%s3 + $0x100] sm:$0xff]
      %v804 = vld [vmem:[%s3 + $0x108] sm:$0xff]
      %v805 = vld [vmem:[%s3 + $0x110] sm:$0xff]
      %v806 = vld [vmem:[%s3 + $0x118] sm:$0xff]
      %v807 = vld [vmem:[%s3 + $0x120] sm:$0xff]
      %v808 = vld [vmem:[%s3 + $0x128] sm:$0xff]
      %v809 = vld [vmem:[%s3 + $0x130] sm:$0xff]
      %v810 = vld [vmem:[%s3 + $0x138] sm:$0xff]
      %v811 = vld [vmem:[%s3 + $0x140] sm:$0xff]
      %v812 = vld [vmem:[%s3 + $0x148] sm:$0xff]
      %v813 = vld [vmem:[%s3 + $0x150] sm:$0xff]
      %v814 = vld [vmem:[%s3 + $0x158] sm:$0xff]
      %v815 = vld [vmem:[%s3 + $0x160] sm:$0xff]
      %v816 = vld [vmem:[%s3 + $0x168] sm:$0xff]
      %v817 = vld [vmem:[%s3 + $0x170] sm:$0xff]
      %v818 = vld [vmem:[%s3 + $0x178] sm:$0xff]
      %v819 = vld [vmem:[%s3 + $0x180] sm:$0xff]
      %v820 = vld [vmem:[%s3 + $0x188] sm:$0xff]
      %v821 = vld [vmem:[%s3 + $0x190] sm:$0xff]
      %v822 = vld [vmem:[%s3 + $0x198] sm:$0xff]
      %v823 = vld [vmem:[%s3 + $0x1a0] sm:$0xff]
      %v824 = vld [vmem:[%s3 + $0x1a8] sm:$0xff]
      %v825 = vld [vmem:[%s3 + $0x1b0] sm:$0xff]
      %v826 = vld [vmem:[%s3 + $0x1b8] sm:$0xff]
      %v827 = vld [vmem:[%s3 + $0x1c0] sm:$0xff]
      %v828 = vld [vmem:[%s3 + $0x1c8] sm:$0xff]
      %v829 = vld [vmem:[%s3 + $0x1d0] sm:$0xff]
      %v830 = vld [vmem:[%s3 + $0x1d8] sm:$0xff]
      %v831 = vld [vmem:[%s3 + $0x1e0] sm:$0xff]
      %v832 = vld [vmem:[%s3 + $0x1e8] sm:$0xff]
      %v833 = vld [vmem:[%s3 + $0x1f0] sm:$0xff]
      %v834 = vld [vmem:[%s3 + $0x1f8] sm:$0xff]
      %v835 = vld [vmem:[%s3 + $0x200] sm:$0xff]
      %v836 = vld [vmem:[%s3 + $0x208] sm:$0xff]
      %v837 = vld [vmem:[%s3 + $0x210] sm:$0xff]
      %v838 = vld [vmem:[%s3 + $0x218] sm:$0xff]
      %v839 = vld [vmem:[%s3 + $0x220] sm:$0xff]
      %v840 = vld [vmem:[%s3 + $0x228] sm:$0xff]
      %v841 = vld [vmem:[%s3 + $0x230] sm:$0xff]
      %v842 = vld [vmem:[%s3 + $0x238] sm:$0xff]
      %v843 = vld [vmem:[%s3 + $0x240] sm:$0xff]
      %v844 = vld [vmem:[%s3 + $0x248] sm:$0xff]
      %v845 = vld [vmem:[%s3 + $0x250] sm:$0xff]
      %v846 = vld [vmem:[%s3 + $0x258] sm:$0xff]
      %v847 = vld [vmem:[%s3 + $0x260] sm:$0xff]
      %v848 = vld [vmem:[%s3 + $0x268] sm:$0xff]
      %v849 = vld [vmem:[%s3 + $0x270] sm:$0xff]
      %v850 = vld [vmem:[%s3 + $0x278] sm:$0xff]
      %v851 = vld [vmem:[%s3 + $0x280] sm:$0xff]
      %v852 = vld [vmem:[%s3 + $0x288] sm:$0xff]
      %v853 = vld [vmem:[%s3 + $0x290] sm:$0xff]
      %v854 = vld [vmem:[%s3 + $0x298] sm:$0xff]
      %v855 = vld [vmem:[%s3 + $0x2a0] sm:$0xff]
      %v856 = vld [vmem:[%s3 + $0x2a8] sm:$0xff]
      %v857 = vld [vmem:[%s3 + $0x2b0] sm:$0xff]
      %v858 = vld [vmem:[%s3 + $0x2b8] sm:$0xff]
      %v859 = vld [vmem:[%s3 + $0x2c0] sm:$0xff]
      %v860 = vld [vmem:[%s3 + $0x2c8] sm:$0xff]
      %v861 = vld [vmem:[%s3 + $0x2d0] sm:$0xff]
      %v862 = vld [vmem:[%s3 + $0x2d8] sm:$0xff]
      %v863 = vld [vmem:[%s3 + $0x2e0] sm:$0xff]
      %v864 = vld [vmem:[%s3 + $0x2e8] sm:$0xff]
      %v865 = vld [vmem:[%s3 + $0x2f0] sm:$0xff]
      %v866 = vld [vmem:[%s3 + $0x2f8] sm:$0xff]
      %v867 = vld [vmem:[%s3 + $0x300] sm:$0xff]
      %v868 = vld [vmem:[%s3 + $0x308] sm:$0xff]
      %v869 = vld [vmem:[%s3 + $0x310] sm:$0xff]
      %v870 = vld [vmem:[%s3 + $0x318] sm:$0xff]
      %v871 = vld [vmem:[%s3 + $0x320] sm:$0xff]
      %v872 = vld [vmem:[%s3 + $0x328] sm:$0xff]
      %v873 = vld [vmem:[%s3 + $0x330] sm:$0xff]
      %v874 = vld [vmem:[%s3 + $0x338] sm:$0xff]
      %v875 = vld [vmem:[%s3 + $0x340] sm:$0xff]
      %v876 = vld [vmem:[%s3 + $0x348] sm:$0xff]
      %v877 = vld [vmem:[%s3 + $0x350] sm:$0xff]
      %v878 = vld [vmem:[%s3 + $0x358] sm:$0xff]
      %v879 = vld [vmem:[%s3 + $0x360] sm:$0xff]
      %v880 = vld [vmem:[%s3 + $0x368] sm:$0xff]
      %v881 = vld [vmem:[%s3 + $0x370] sm:$0xff]
      %v882 = vld [vmem:[%s3 + $0x378] sm:$0xff]
      %v883 = vld [vmem:[%s3 + $0x380] sm:$0xff]
      %v884 = vld [vmem:[%s3 + $0x388] sm:$0xff]
      %v885 = vld [vmem:[%s3 + $0x390] sm:$0xff]
      %v886 = vld [vmem:[%s3 + $0x398] sm:$0xff]
      %v887 = vld [vmem:[%s3 + $0x3a0] sm:$0xff]
      %v888 = vld [vmem:[%s3 + $0x3a8] sm:$0xff]
      %v889 = vld [vmem:[%s3 + $0x3b0] sm:$0xff]
      %v890 = vld [vmem:[%s3 + $0x3b8] sm:$0xff]
      %v891 = vld [vmem:[%s3 + $0x3c0] sm:$0xff]
      %v892 = vld [vmem:[%s3 + $0x3c8] sm:$0xff]
      %v893 = vld [vmem:[%s3 + $0x3d0] sm:$0xff]
      %v894 = vld [vmem:[%s3 + $0x3d8] sm:$0xff]
      %v895 = vld [vmem:[%s3 + $0x3e0] sm:$0xff]
      %v896 = vld [vmem:[%s3 + $0x3e8] sm:$0xff]
      %v897 = vld [vmem:[%s3 + $0x3f0] sm:$0xff]
      %v898 = vld [vmem:[%s3 + $0x3f8] sm:$0xff]
      %v899 = vld [vmem:[%s3 + $0x400] sm:$0xff]
      %v900 = vld [vmem:[%s3 + $0x408] sm:$0xff]
      %v901 = vld [vmem:[%s3 + $0x410] sm:$0xff]
      %v902 = vld [vmem:[%s3 + $0x418] sm:$0xff]
      %v903 = vld [vmem:[%s3 + $0x420] sm:$0xff]
      %v904 = vld [vmem:[%s3 + $0x428] sm:$0xff]
      %v905 = vld [vmem:[%s3 + $0x430] sm:$0xff]
      %v906 = vld [vmem:[%s3 + $0x438] sm:$0xff]
      %v907 = vld [vmem:[%s3 + $0x440] sm:$0xff]
      %v908 = vld [vmem:[%s3 + $0x448] sm:$0xff]
      %v909 = vld [vmem:[%s3 + $0x450] sm:$0xff]
      %v910 = vld [vmem:[%s3 + $0x458] sm:$0xff]
      %v911 = vld [vmem:[%s3 + $0x460] sm:$0xff]
      %v912 = vld [vmem:[%s3 + $0x468] sm:$0xff]
      %v913 = vld [vmem:[%s3 + $0x470] sm:$0xff]
      %v914 = vld [vmem:[%s3 + $0x478] sm:$0xff]
      %915 = vmatprep.subr.mxu0 0.0
      %916 = vmatpush1.msra.mxu0 %v786
      %917 = vmatprep.subr.mxu0 0.0
      %918 = vmatpush1.msra.mxu0 %v785
      %919 = vmatprep.subr.mxu0 0.0
      %920 = vmatpush1.msra.mxu0 %v784
      %921 = vmatprep.subr.mxu0 0.0
      %922 = vmatpush1.msra.mxu0 %v783
      %923 = vmatprep.subr.mxu0 0.0
      %924 = vmatpush1.msra.mxu0 %v782
      %925 = vmatprep.subr.mxu0 0.0
      %926 = vmatpush1.msra.mxu0 %v781
      %927 = vmatprep.subr.mxu0 0.0
      %928 = vmatpush1.msra.mxu0 %v780
      %929 = vmatprep.subr.mxu0 0.0
      %930 = vmatpush1.msra.mxu0 %v779
      %931 = vmatprep.subr.mxu0 0.0
      %932 = vmatpush1.msra.mxu0 %v778
      %933 = vmatprep.subr.mxu0 0.0
      %934 = vmatpush1.msra.mxu0 %v777
      %935 = vmatprep.subr.mxu0 0.0
      %936 = vmatpush1.msra.mxu0 %v776
      %937 = vmatprep.subr.mxu0 0.0
      %938 = vmatpush1.msra.mxu0 %v775
      %939 = vmatprep.subr.mxu0 0.0
      %940 = vmatpush1.msra.mxu0 %v774
      %941 = vmatprep.subr.mxu0 0.0
      %942 = vmatpush1.msra.mxu0 %v773
      %943 = vmatprep.subr.mxu0 0.0
      %944 = vmatpush1.msra.mxu0 %v772
      %945 = vmatprep.subr.mxu0 0.0
      %946 = vmatpush1.msra.mxu0 %v771
      %947 = vmatprep.subr.mxu0 0.0
      %948 = vmatpush2.msra.mxu0 %v802
      %949 = vmatprep.subr.mxu0 0.0
      %950 = vmatpush2.msra.mxu0 %v801
      %951 = vmatprep.subr.mxu0 0.0
      %952 = vmatpush2.msra.mxu0 %v800
      %953 = vmatprep.subr.mxu0 0.0
      %954 = vmatpush2.msra.mxu0 %v799
      %955 = vmatprep.subr.mxu0 0.0
      %956 = vmatpush2.msra.mxu0 %v798
      %957 = vmatprep.subr.mxu0 0.0
      %958 = vmatpush2.msra.mxu0 %v797
      %959 = vmatprep.subr.mxu0 0.0
      %960 = vmatpush2.msra.mxu0 %v796
      %961 = vmatprep.subr.mxu0 0.0
      %962 = vmatpush2.msra.mxu0 %v795
      %963 = vmatprep.subr.mxu0 0.0
      %964 = vmatpush2.msra.mxu0 %v794
      %965 = vmatprep.subr.mxu0 0.0
      %966 = vmatpush2.msra.mxu0 %v793
      %967 = vmatprep.subr.mxu0 0.0
      %968 = vmatpush2.msra.mxu0 %v792
      %969 = vmatprep.subr.mxu0 0.0
      %970 = vmatpush2.msra.mxu0 %v791
      %971 = vmatprep.subr.mxu0 0.0
      %972 = vmatpush2.msra.mxu0 %v790
      %973 = vmatprep.subr.mxu0 0.0
      %974 = vmatpush2.msra.mxu0 %v789
      %975 = vmatprep.subr.mxu0 0.0
      %976 = vmatpush2.msra.mxu0 %v788
      %977 = vmatprep.subr.mxu0 0.0
      %978 = vmatpush2.msra.mxu0 %v787
      %979 = vmatprep.mubr.f32.mxu0 %v514
      %980 = vmatmul.mubr.f32.gmra.mxu0 %v482
      %v981 = vpop.f32.mrf.mxu0
      %v982 = vadd.f32 0.0, %v981
      %v983 = vpop.f32.mrf.mxu0
      %984 = vmatprep.mubr.f32.mxu0 %v515
      %985 = vmatmul.mubr.f32.gmra.mxu0 %v483
      %v986 = vpop.f32.mrf.mxu0
      %v987 = vadd.f32 0.0, %v986
      %v988 = vpop.f32.mrf.mxu0
      %989 = vmatprep.mubr.f32.mxu0 %v516
      %990 = vmatmul.mubr.f32.gmra.mxu0 %v484
      %v991 = vpop.f32.mrf.mxu0
      %v992 = vadd.f32 0.0, %v991
      %v993 = vpop.f32.mrf.mxu0
      %994 = vmatprep.mubr.f32.mxu0 %v517
      %995 = vmatmul.mubr.f32.gmra.mxu0 %v485
      %v996 = vpop.f32.mrf.mxu0
      %v997 = vadd.f32 0.0, %v996
      %v998 = vpop.f32.mrf.mxu0
      %999 = vmatprep.mubr.f32.mxu0 %v518
      %1000 = vmatmul.mubr.f32.gmra.mxu0 %v486
      %v1001 = vpop.f32.mrf.mxu0
      %v1002 = vadd.f32 0.0, %v1001
      %v1003 = vpop.f32.mrf.mxu0
      %1004 = vmatprep.mubr.f32.mxu0 %v519
      %1005 = vmatmul.mubr.f32.gmra.mxu0 %v487
      %v1006 = vpop.f32.mrf.mxu0
      %v1007 = vadd.f32 0.0, %v1006
      %v1008 = vpop.f32.mrf.mxu0
      %1009 = vmatprep.mubr.f32.mxu0 %v520
      %1010 = vmatmul.mubr.f32.gmra.mxu0 %v488
      %v1011 = vpop.f32.mrf.mxu0
      %v1012 = vadd.f32 0.0, %v1011
      %v1013 = vpop.f32.mrf.mxu0
      %1014 = vmatprep.mubr.f32.mxu0 %v521
      %1015 = vmatmul.mubr.f32.gmra.mxu0 %v489
      %v1016 = vpop.f32.mrf.mxu0
      %v1017 = vadd.f32 0.0, %v1016
      %v1018 = vpop.f32.mrf.mxu0
      %1019 = vmatprep.mubr.f32.mxu0 %v522
      %1020 = vmatmul.mubr.f32.gmra.mxu0 %v490
      %v1021 = vpop.f32.mrf.mxu0
      %v1022 = vadd.f32 0.0, %v1021
      %v1023 = vpop.f32.mrf.mxu0
      %1024 = vmatprep.mubr.f32.mxu0 %v523
      %1025 = vmatmul.mubr.f32.gmra.mxu0 %v491
      %v1026 = vpop.f32.mrf.mxu0
      %v1027 = vadd.f32 0.0, %v1026
      %v1028 = vpop.f32.mrf.mxu0
      %1029 = vmatprep.mubr.f32.mxu0 %v524
      %1030 = vmatmul.mubr.f32.gmra.mxu0 %v492
      %v1031 = vpop.f32.mrf.mxu0
      %v1032 = vadd.f32 0.0, %v1031
      %v1033 = vpop.f32.mrf.mxu0
      %1034 = vmatprep.mubr.f32.mxu0 %v525
      %1035 = vmatmul.mubr.f32.gmra.mxu0 %v493
      %v1036 = vpop.f32.mrf.mxu0
      %v1037 = vadd.f32 0.0, %v1036
      %v1038 = vpop.f32.mrf.mxu0
      %1039 = vmatprep.mubr.f32.mxu0 %v526
      %1040 = vmatmul.mubr.f32.gmra.mxu0 %v494
      %v1041 = vpop.f32.mrf.mxu0
      %v1042 = vadd.f32 0.0, %v1041
      %v1043 = vpop.f32.mrf.mxu0
      %1044 = vmatprep.mubr.f32.mxu0 %v527
      %1045 = vmatmul.mubr.f32.gmra.mxu0 %v495
      %v1046 = vpop.f32.mrf.mxu0
      %v1047 = vadd.f32 0.0, %v1046
      %v1048 = vpop.f32.mrf.mxu0
      %1049 = vmatprep.mubr.f32.mxu0 %v528
      %1050 = vmatmul.mubr.f32.gmra.mxu0 %v496
      %v1051 = vpop.f32.mrf.mxu0
      %v1052 = vadd.f32 0.0, %v1051
      %v1053 = vpop.f32.mrf.mxu0
      %1054 = vmatprep.mubr.f32.mxu0 %v529
      %1055 = vmatmul.mubr.f32.gmra.mxu0 %v497
      %v1056 = vpop.f32.mrf.mxu0
      %v1057 = vadd.f32 0.0, %v1056
      %v1058 = vpop.f32.mrf.mxu0
      %1059 = vmatprep.mubr.f32.mxu0 %v530
      %1060 = vmatmul.mubr.f32.gmra.mxu0 %v498
      %v1061 = vpop.f32.mrf.mxu0
      %v1062 = vadd.f32 0.0, %v1061
      %v1063 = vpop.f32.mrf.mxu0
      %1064 = vmatprep.mubr.f32.mxu0 %v531
      %1065 = vmatmul.mubr.f32.gmra.mxu0 %v499
      %v1066 = vpop.f32.mrf.mxu0
      %v1067 = vadd.f32 0.0, %v1066
      %v1068 = vpop.f32.mrf.mxu0
      %1069 = vmatprep.mubr.f32.mxu0 %v532
      %1070 = vmatmul.mubr.f32.gmra.mxu0 %v500
      %v1071 = vpop.f32.mrf.mxu0
      %v1072 = vadd.f32 0.0, %v1071
      %v1073 = vpop.f32.mrf.mxu0
      %1074 = vmatprep.mubr.f32.mxu0 %v533
      %1075 = vmatmul.mubr.f32.gmra.mxu0 %v501
      %v1076 = vpop.f32.mrf.mxu0
      %v1077 = vadd.f32 0.0, %v1076
      %v1078 = vpop.f32.mrf.mxu0
      %1079 = vmatprep.mubr.f32.mxu0 %v534
      %1080 = vmatmul.mubr.f32.gmra.mxu0 %v502
      %v1081 = vpop.f32.mrf.mxu0
      %v1082 = vadd.f32 0.0, %v1081
      %v1083 = vpop.f32.mrf.mxu0
      %1084 = vmatprep.mubr.f32.mxu0 %v535
      %1085 = vmatmul.mubr.f32.gmra.mxu0 %v503
      %v1086 = vpop.f32.mrf.mxu0
      %v1087 = vadd.f32 0.0, %v1086
      %v1088 = vpop.f32.mrf.mxu0
      %1089 = vmatprep.mubr.f32.mxu0 %v536
      %1090 = vmatmul.mubr.f32.gmra.mxu0 %v504
      %v1091 = vpop.f32.mrf.mxu0
      %v1092 = vadd.f32 0.0, %v1091
      %v1093 = vpop.f32.mrf.mxu0
      %1094 = vmatprep.mubr.f32.mxu0 %v537
      %1095 = vmatmul.mubr.f32.gmra.mxu0 %v505
      %v1096 = vpop.f32.mrf.mxu0
      %v1097 = vadd.f32 0.0, %v1096
      %v1098 = vpop.f32.mrf.mxu0
      %1099 = vmatprep.mubr.f32.mxu0 %v538
      %1100 = vmatmul.mubr.f32.gmra.mxu0 %v506
      %v1101 = vpop.f32.mrf.mxu0
      %v1102 = vadd.f32 0.0, %v1101
      %v1103 = vpop.f32.mrf.mxu0
      %1104 = vmatprep.mubr.f32.mxu0 %v539
      %1105 = vmatmul.mubr.f32.gmra.mxu0 %v507
      %v1106 = vpop.f32.mrf.mxu0
      %v1107 = vadd.f32 0.0, %v1106
      %v1108 = vpop.f32.mrf.mxu0
      %1109 = vmatprep.mubr.f32.mxu0 %v540
      %1110 = vmatmul.mubr.f32.gmra.mxu0 %v508
      %v1111 = vpop.f32.mrf.mxu0
      %v1112 = vadd.f32 0.0, %v1111
      %v1113 = vpop.f32.mrf.mxu0
      %1114 = vmatprep.mubr.f32.mxu0 %v541
      %1115 = vmatmul.mubr.f32.gmra.mxu0 %v509
      %v1116 = vpop.f32.mrf.mxu0
      %v1117 = vadd.f32 0.0, %v1116
      %v1118 = vpop.f32.mrf.mxu0
      %1119 = vmatprep.mubr.f32.mxu0 %v542
      %1120 = vmatmul.mubr.f32.gmra.mxu0 %v510
      %v1121 = vpop.f32.mrf.mxu0
      %v1122 = vadd.f32 0.0, %v1121
      %v1123 = vpop.f32.mrf.mxu0
      %1124 = vmatprep.mubr.f32.mxu0 %v543
      %1125 = vmatmul.mubr.f32.gmra.mxu0 %v511
      %v1126 = vpop.f32.mrf.mxu0
      %v1127 = vadd.f32 0.0, %v1126
      %v1128 = vpop.f32.mrf.mxu0
      %1129 = vmatprep.mubr.f32.mxu0 %v544
      %1130 = vmatmul.mubr.f32.gmra.mxu0 %v512
      %v1131 = vpop.f32.mrf.mxu0
      %v1132 = vadd.f32 0.0, %v1131
      %v1133 = vpop.f32.mrf.mxu0
      %1134 = vmatprep.mubr.f32.mxu0 %v545
      %1135 = vmatmul.mubr.f32.gmra.mxu0 %v513
      %v1136 = vpop.f32.mrf.mxu0
      %v1137 = vadd.f32 0.0, %v1136
      %v1138 = vpop.f32.mrf.mxu0
      %1139 = vdwg.mxu0
      %1140 = vmatprep.subr.mxu0 0.0
      %1141 = vmatpush1.msra.mxu0 %v818
      %1142 = vmatprep.subr.mxu0 0.0
      %1143 = vmatpush1.msra.mxu0 %v817
      %1144 = vmatprep.subr.mxu0 0.0
      %1145 = vmatpush1.msra.mxu0 %v816
      %1146 = vmatprep.subr.mxu0 0.0
      %1147 = vmatpush1.msra.mxu0 %v815
      %1148 = vmatprep.subr.mxu0 0.0
      %1149 = vmatpush1.msra.mxu0 %v814
      %1150 = vmatprep.subr.mxu0 0.0
      %1151 = vmatpush1.msra.mxu0 %v813
      %1152 = vmatprep.subr.mxu0 0.0
      %1153 = vmatpush1.msra.mxu0 %v812
      %1154 = vmatprep.subr.mxu0 0.0
      %1155 = vmatpush1.msra.mxu0 %v811
      %1156 = vmatprep.subr.mxu0 0.0
      %1157 = vmatpush1.msra.mxu0 %v810
      %1158 = vmatprep.subr.mxu0 0.0
      %1159 = vmatpush1.msra.mxu0 %v809
      %1160 = vmatprep.subr.mxu0 0.0
      %1161 = vmatpush1.msra.mxu0 %v808
      %1162 = vmatprep.subr.mxu0 0.0
      %1163 = vmatpush1.msra.mxu0 %v807
      %1164 = vmatprep.subr.mxu0 0.0
      %1165 = vmatpush1.msra.mxu0 %v806
      %1166 = vmatprep.subr.mxu0 0.0
      %1167 = vmatpush1.msra.mxu0 %v805
      %1168 = vmatprep.subr.mxu0 0.0
      %1169 = vmatpush1.msra.mxu0 %v804
      %1170 = vmatprep.subr.mxu0 0.0
      %1171 = vmatpush1.msra.mxu0 %v803
      %1172 = vmatprep.subr.mxu0 0.0
      %1173 = vmatpush2.msra.mxu0 %v834
      %1174 = vmatprep.subr.mxu0 0.0
      %1175 = vmatpush2.msra.mxu0 %v833
      %1176 = vmatprep.subr.mxu0 0.0
      %1177 = vmatpush2.msra.mxu0 %v832
      %1178 = vmatprep.subr.mxu0 0.0
      %1179 = vmatpush2.msra.mxu0 %v831
      %1180 = vmatprep.subr.mxu0 0.0
      %1181 = vmatpush2.msra.mxu0 %v830
      %1182 = vmatprep.subr.mxu0 0.0
      %1183 = vmatpush2.msra.mxu0 %v829
      %1184 = vmatprep.subr.mxu0 0.0
      %1185 = vmatpush2.msra.mxu0 %v828
      %1186 = vmatprep.subr.mxu0 0.0
      %1187 = vmatpush2.msra.mxu0 %v827
      %1188 = vmatprep.subr.mxu0 0.0
      %1189 = vmatpush2.msra.mxu0 %v826
      %1190 = vmatprep.subr.mxu0 0.0
      %1191 = vmatpush2.msra.mxu0 %v825
      %1192 = vmatprep.subr.mxu0 0.0
      %1193 = vmatpush2.msra.mxu0 %v824
      %1194 = vmatprep.subr.mxu0 0.0
      %1195 = vmatpush2.msra.mxu0 %v823
      %1196 = vmatprep.subr.mxu0 0.0
      %1197 = vmatpush2.msra.mxu0 %v822
      %1198 = vmatprep.subr.mxu0 0.0
      %1199 = vmatpush2.msra.mxu0 %v821
      %1200 = vmatprep.subr.mxu0 0.0
      %1201 = vmatpush2.msra.mxu0 %v820
      %1202 = vmatprep.subr.mxu0 0.0
      %1203 = vmatpush2.msra.mxu0 %v819
      %1204 = vmatprep.mubr.f32.mxu0 %v578
      %1205 = vmatmul.mubr.f32.gmra.mxu0 %v546
      %v1206 = vpop.f32.mrf.mxu0
      %v1207 = vadd.f32 %v982, %v1206
      %v1208 = vpop.f32.mrf.mxu0
      %1209 = vmatprep.mubr.f32.mxu0 %v579
      %1210 = vmatmul.mubr.f32.gmra.mxu0 %v547
      %v1211 = vpop.f32.mrf.mxu0
      %v1212 = vadd.f32 %v987, %v1211
      %v1213 = vpop.f32.mrf.mxu0
      %1214 = vmatprep.mubr.f32.mxu0 %v580
      %1215 = vmatmul.mubr.f32.gmra.mxu0 %v548
      %v1216 = vpop.f32.mrf.mxu0
      %v1217 = vadd.f32 %v992, %v1216
      %v1218 = vpop.f32.mrf.mxu0
      %1219 = vmatprep.mubr.f32.mxu0 %v581
      %1220 = vmatmul.mubr.f32.gmra.mxu0 %v549
      %v1221 = vpop.f32.mrf.mxu0
      %v1222 = vadd.f32 %v997, %v1221
      %v1223 = vpop.f32.mrf.mxu0
      %1224 = vmatprep.mubr.f32.mxu0 %v582
      %1225 = vmatmul.mubr.f32.gmra.mxu0 %v550
      %v1226 = vpop.f32.mrf.mxu0
      %v1227 = vadd.f32 %v1002, %v1226
      %v1228 = vpop.f32.mrf.mxu0
      %1229 = vmatprep.mubr.f32.mxu0 %v583
      %1230 = vmatmul.mubr.f32.gmra.mxu0 %v551
      %v1231 = vpop.f32.mrf.mxu0
      %v1232 = vadd.f32 %v1007, %v1231
      %v1233 = vpop.f32.mrf.mxu0
      %1234 = vmatprep.mubr.f32.mxu0 %v584
      %1235 = vmatmul.mubr.f32.gmra.mxu0 %v552
      %v1236 = vpop.f32.mrf.mxu0
      %v1237 = vadd.f32 %v1012, %v1236
      %v1238 = vpop.f32.mrf.mxu0
      %1239 = vmatprep.mubr.f32.mxu0 %v585
      %1240 = vmatmul.mubr.f32.gmra.mxu0 %v553
      %v1241 = vpop.f32.mrf.mxu0
      %v1242 = vadd.f32 %v1017, %v1241
      %v1243 = vpop.f32.mrf.mxu0
      %1244 = vmatprep.mubr.f32.mxu0 %v586
      %1245 = vmatmul.mubr.f32.gmra.mxu0 %v554
      %v1246 = vpop.f32.mrf.mxu0
      %v1247 = vadd.f32 %v1022, %v1246
      %v1248 = vpop.f32.mrf.mxu0
      %1249 = vmatprep.mubr.f32.mxu0 %v587
      %1250 = vmatmul.mubr.f32.gmra.mxu0 %v555
      %v1251 = vpop.f32.mrf.mxu0
      %v1252 = vadd.f32 %v1027, %v1251
      %v1253 = vpop.f32.mrf.mxu0
      %1254 = vmatprep.mubr.f32.mxu0 %v588
      %1255 = vmatmul.mubr.f32.gmra.mxu0 %v556
      %v1256 = vpop.f32.mrf.mxu0
      %v1257 = vadd.f32 %v1032, %v1256
      %v1258 = vpop.f32.mrf.mxu0
      %1259 = vmatprep.mubr.f32.mxu0 %v589
      %1260 = vmatmul.mubr.f32.gmra.mxu0 %v557
      %v1261 = vpop.f32.mrf.mxu0
      %v1262 = vadd.f32 %v1037, %v1261
      %v1263 = vpop.f32.mrf.mxu0
      %1264 = vmatprep.mubr.f32.mxu0 %v590
      %1265 = vmatmul.mubr.f32.gmra.mxu0 %v558
      %v1266 = vpop.f32.mrf.mxu0
      %v1267 = vadd.f32 %v1042, %v1266
      %v1268 = vpop.f32.mrf.mxu0
      %1269 = vmatprep.mubr.f32.mxu0 %v591
      %1270 = vmatmul.mubr.f32.gmra.mxu0 %v559
      %v1271 = vpop.f32.mrf.mxu0
      %v1272 = vadd.f32 %v1047, %v1271
      %v1273 = vpop.f32.mrf.mxu0
      %1274 = vmatprep.mubr.f32.mxu0 %v592
      %1275 = vmatmul.mubr.f32.gmra.mxu0 %v560
      %v1276 = vpop.f32.mrf.mxu0
      %v1277 = vadd.f32 %v1052, %v1276
      %v1278 = vpop.f32.mrf.mxu0
      %1279 = vmatprep.mubr.f32.mxu0 %v593
      %1280 = vmatmul.mubr.f32.gmra.mxu0 %v561
      %v1281 = vpop.f32.mrf.mxu0
      %v1282 = vadd.f32 %v1057, %v1281
      %v1283 = vpop.f32.mrf.mxu0
      %1284 = vmatprep.mubr.f32.mxu0 %v594
      %1285 = vmatmul.mubr.f32.gmra.mxu0 %v562
      %v1286 = vpop.f32.mrf.mxu0
      %v1287 = vadd.f32 %v1062, %v1286
      %v1288 = vpop.f32.mrf.mxu0
      %1289 = vmatprep.mubr.f32.mxu0 %v595
      %1290 = vmatmul.mubr.f32.gmra.mxu0 %v563
      %v1291 = vpop.f32.mrf.mxu0
      %v1292 = vadd.f32 %v1067, %v1291
      %v1293 = vpop.f32.mrf.mxu0
      %1294 = vmatprep.mubr.f32.mxu0 %v596
      %1295 = vmatmul.mubr.f32.gmra.mxu0 %v564
      %v1296 = vpop.f32.mrf.mxu0
      %v1297 = vadd.f32 %v1072, %v1296
      %v1298 = vpop.f32.mrf.mxu0
      %1299 = vmatprep.mubr.f32.mxu0 %v597
      %1300 = vmatmul.mubr.f32.gmra.mxu0 %v565
      %v1301 = vpop.f32.mrf.mxu0
      %v1302 = vadd.f32 %v1077, %v1301
      %v1303 = vpop.f32.mrf.mxu0
      %1304 = vmatprep.mubr.f32.mxu0 %v598
      %1305 = vmatmul.mubr.f32.gmra.mxu0 %v566
      %v1306 = vpop.f32.mrf.mxu0
      %v1307 = vadd.f32 %v1082, %v1306
      %v1308 = vpop.f32.mrf.mxu0
      %1309 = vmatprep.mubr.f32.mxu0 %v599
      %1310 = vmatmul.mubr.f32.gmra.mxu0 %v567
      %v1311 = vpop.f32.mrf.mxu0
      %v1312 = vadd.f32 %v1087, %v1311
      %v1313 = vpop.f32.mrf.mxu0
      %1314 = vmatprep.mubr.f32.mxu0 %v600
      %1315 = vmatmul.mubr.f32.gmra.mxu0 %v568
      %v1316 = vpop.f32.mrf.mxu0
      %v1317 = vadd.f32 %v1092, %v1316
      %v1318 = vpop.f32.mrf.mxu0
      %1319 = vmatprep.mubr.f32.mxu0 %v601
      %1320 = vmatmul.mubr.f32.gmra.mxu0 %v569
      %v1321 = vpop.f32.mrf.mxu0
      %v1322 = vadd.f32 %v1097, %v1321
      %v1323 = vpop.f32.mrf.mxu0
      %1324 = vmatprep.mubr.f32.mxu0 %v602
      %1325 = vmatmul.mubr.f32.gmra.mxu0 %v570
      %v1326 = vpop.f32.mrf.mxu0
      %v1327 = vadd.f32 %v1102, %v1326
      %v1328 = vpop.f32.mrf.mxu0
      %1329 = vmatprep.mubr.f32.mxu0 %v603
      %1330 = vmatmul.mubr.f32.gmra.mxu0 %v571
      %v1331 = vpop.f32.mrf.mxu0
      %v1332 = vadd.f32 %v1107, %v1331
      %v1333 = vpop.f32.mrf.mxu0
      %1334 = vmatprep.mubr.f32.mxu0 %v604
      %1335 = vmatmul.mubr.f32.gmra.mxu0 %v572
      %v1336 = vpop.f32.mrf.mxu0
      %v1337 = vadd.f32 %v1112, %v1336
      %v1338 = vpop.f32.mrf.mxu0
      %1339 = vmatprep.mubr.f32.mxu0 %v605
      %1340 = vmatmul.mubr.f32.gmra.mxu0 %v573
      %v1341 = vpop.f32.mrf.mxu0
      %v1342 = vadd.f32 %v1117, %v1341
      %v1343 = vpop.f32.mrf.mxu0
      %1344 = vmatprep.mubr.f32.mxu0 %v606
      %1345 = vmatmul.mubr.f32.gmra.mxu0 %v574
      %v1346 = vpop.f32.mrf.mxu0
      %v1347 = vadd.f32 %v1122, %v1346
      %v1348 = vpop.f32.mrf.mxu0
      %1349 = vmatprep.mubr.f32.mxu0 %v607
      %1350 = vmatmul.mubr.f32.gmra.mxu0 %v575
      %v1351 = vpop.f32.mrf.mxu0
      %v1352 = vadd.f32 %v1127, %v1351
      %v1353 = vpop.f32.mrf.mxu0
      %1354 = vmatprep.mubr.f32.mxu0 %v608
      %1355 = vmatmul.mubr.f32.gmra.mxu0 %v576
      %v1356 = vpop.f32.mrf.mxu0
      %v1357 = vadd.f32 %v1132, %v1356
      %v1358 = vpop.f32.mrf.mxu0
      %1359 = vmatprep.mubr.f32.mxu0 %v609
      %1360 = vmatmul.mubr.f32.gmra.mxu0 %v577
      %v1361 = vpop.f32.mrf.mxu0
      %v1362 = vadd.f32 %v1137, %v1361
      %v1363 = vpop.f32.mrf.mxu0
      %1364 = vdwg.mxu0
      %1365 = vmatprep.subr.mxu0 0.0
      %1366 = vmatpush1.msra.mxu0 %v850
      %1367 = vmatprep.subr.mxu0 0.0
      %1368 = vmatpush1.msra.mxu0 %v849
      %1369 = vmatprep.subr.mxu0 0.0
      %1370 = vmatpush1.msra.mxu0 %v848
      %1371 = vmatprep.subr.mxu0 0.0
      %1372 = vmatpush1.msra.mxu0 %v847
      %1373 = vmatprep.subr.mxu0 0.0
      %1374 = vmatpush1.msra.mxu0 %v846
      %1375 = vmatprep.subr.mxu0 0.0
      %1376 = vmatpush1.msra.mxu0 %v845
      %1377 = vmatprep.subr.mxu0 0.0
      %1378 = vmatpush1.msra.mxu0 %v844
      %1379 = vmatprep.subr.mxu0 0.0
      %1380 = vmatpush1.msra.mxu0 %v843
      %1381 = vmatprep.subr.mxu0 0.0
      %1382 = vmatpush1.msra.mxu0 %v842
      %1383 = vmatprep.subr.mxu0 0.0
      %1384 = vmatpush1.msra.mxu0 %v841
      %1385 = vmatprep.subr.mxu0 0.0
      %1386 = vmatpush1.msra.mxu0 %v840
      %1387 = vmatprep.subr.mxu0 0.0
      %1388 = vmatpush1.msra.mxu0 %v839
      %1389 = vmatprep.subr.mxu0 0.0
      %1390 = vmatpush1.msra.mxu0 %v838
      %1391 = vmatprep.subr.mxu0 0.0
      %1392 = vmatpush1.msra.mxu0 %v837
      %1393 = vmatprep.subr.mxu0 0.0
      %1394 = vmatpush1.msra.mxu0 %v836
      %1395 = vmatprep.subr.mxu0 0.0
      %1396 = vmatpush1.msra.mxu0 %v835
      %1397 = vmatprep.subr.mxu0 0.0
      %1398 = vmatpush2.msra.mxu0 %v866
      %1399 = vmatprep.subr.mxu0 0.0
      %1400 = vmatpush2.msra.mxu0 %v865
      %1401 = vmatprep.subr.mxu0 0.0
      %1402 = vmatpush2.msra.mxu0 %v864
      %1403 = vmatprep.subr.mxu0 0.0
      %1404 = vmatpush2.msra.mxu0 %v863
      %1405 = vmatprep.subr.mxu0 0.0
      %1406 = vmatpush2.msra.mxu0 %v862
      %1407 = vmatprep.subr.mxu0 0.0
      %1408 = vmatpush2.msra.mxu0 %v861
      %1409 = vmatprep.subr.mxu0 0.0
      %1410 = vmatpush2.msra.mxu0 %v860
      %1411 = vmatprep.subr.mxu0 0.0
      %1412 = vmatpush2.msra.mxu0 %v859
      %1413 = vmatprep.subr.mxu0 0.0
      %1414 = vmatpush2.msra.mxu0 %v858
      %1415 = vmatprep.subr.mxu0 0.0
      %1416 = vmatpush2.msra.mxu0 %v857
      %1417 = vmatprep.subr.mxu0 0.0
      %1418 = vmatpush2.msra.mxu0 %v856
      %1419 = vmatprep.subr.mxu0 0.0
      %1420 = vmatpush2.msra.mxu0 %v855
      %1421 = vmatprep.subr.mxu0 0.0
      %1422 = vmatpush2.msra.mxu0 %v854
      %1423 = vmatprep.subr.mxu0 0.0
      %1424 = vmatpush2.msra.mxu0 %v853
      %1425 = vmatprep.subr.mxu0 0.0
      %1426 = vmatpush2.msra.mxu0 %v852
      %1427 = vmatprep.subr.mxu0 0.0
      %1428 = vmatpush2.msra.mxu0 %v851
      %1429 = vmatprep.mubr.f32.mxu0 %v642
      %1430 = vmatmul.mubr.f32.gmra.mxu0 %v610
      %v1431 = vpop.f32.mrf.mxu0
      %v1432 = vadd.f32 %v1207, %v1431
      %v1433 = vpop.f32.mrf.mxu0
      %1434 = vmatprep.mubr.f32.mxu0 %v643
      %1435 = vmatmul.mubr.f32.gmra.mxu0 %v611
      %v1436 = vpop.f32.mrf.mxu0
      %v1437 = vadd.f32 %v1212, %v1436
      %v1438 = vpop.f32.mrf.mxu0
      %1439 = vmatprep.mubr.f32.mxu0 %v644
      %1440 = vmatmul.mubr.f32.gmra.mxu0 %v612
      %v1441 = vpop.f32.mrf.mxu0
      %v1442 = vadd.f32 %v1217, %v1441
      %v1443 = vpop.f32.mrf.mxu0
      %1444 = vmatprep.mubr.f32.mxu0 %v645
      %1445 = vmatmul.mubr.f32.gmra.mxu0 %v613
      %v1446 = vpop.f32.mrf.mxu0
      %v1447 = vadd.f32 %v1222, %v1446
      %v1448 = vpop.f32.mrf.mxu0
      %1449 = vmatprep.mubr.f32.mxu0 %v646
      %1450 = vmatmul.mubr.f32.gmra.mxu0 %v614
      %v1451 = vpop.f32.mrf.mxu0
      %v1452 = vadd.f32 %v1227, %v1451
      %v1453 = vpop.f32.mrf.mxu0
      %1454 = vmatprep.mubr.f32.mxu0 %v647
      %1455 = vmatmul.mubr.f32.gmra.mxu0 %v615
      %v1456 = vpop.f32.mrf.mxu0
      %v1457 = vadd.f32 %v1232, %v1456
      %v1458 = vpop.f32.mrf.mxu0
      %1459 = vmatprep.mubr.f32.mxu0 %v648
      %1460 = vmatmul.mubr.f32.gmra.mxu0 %v616
      %v1461 = vpop.f32.mrf.mxu0
      %v1462 = vadd.f32 %v1237, %v1461
      %v1463 = vpop.f32.mrf.mxu0
      %1464 = vmatprep.mubr.f32.mxu0 %v649
      %1465 = vmatmul.mubr.f32.gmra.mxu0 %v617
      %v1466 = vpop.f32.mrf.mxu0
      %v1467 = vadd.f32 %v1242, %v1466
      %v1468 = vpop.f32.mrf.mxu0
      %1469 = vmatprep.mubr.f32.mxu0 %v650
      %1470 = vmatmul.mubr.f32.gmra.mxu0 %v618
      %v1471 = vpop.f32.mrf.mxu0
      %v1472 = vadd.f32 %v1247, %v1471
      %v1473 = vpop.f32.mrf.mxu0
      %1474 = vmatprep.mubr.f32.mxu0 %v651
      %1475 = vmatmul.mubr.f32.gmra.mxu0 %v619
      %v1476 = vpop.f32.mrf.mxu0
      %v1477 = vadd.f32 %v1252, %v1476
      %v1478 = vpop.f32.mrf.mxu0
      %1479 = vmatprep.mubr.f32.mxu0 %v652
      %1480 = vmatmul.mubr.f32.gmra.mxu0 %v620
      %v1481 = vpop.f32.mrf.mxu0
      %v1482 = vadd.f32 %v1257, %v1481
      %v1483 = vpop.f32.mrf.mxu0
      %1484 = vmatprep.mubr.f32.mxu0 %v653
      %1485 = vmatmul.mubr.f32.gmra.mxu0 %v621
      %v1486 = vpop.f32.mrf.mxu0
      %v1487 = vadd.f32 %v1262, %v1486
      %v1488 = vpop.f32.mrf.mxu0
      %1489 = vmatprep.mubr.f32.mxu0 %v654
      %1490 = vmatmul.mubr.f32.gmra.mxu0 %v622
      %v1491 = vpop.f32.mrf.mxu0
      %v1492 = vadd.f32 %v1267, %v1491
      %v1493 = vpop.f32.mrf.mxu0
      %1494 = vmatprep.mubr.f32.mxu0 %v655
      %1495 = vmatmul.mubr.f32.gmra.mxu0 %v623
      %v1496 = vpop.f32.mrf.mxu0
      %v1497 = vadd.f32 %v1272, %v1496
      %v1498 = vpop.f32.mrf.mxu0
      %1499 = vmatprep.mubr.f32.mxu0 %v656
      %1500 = vmatmul.mubr.f32.gmra.mxu0 %v624
      %v1501 = vpop.f32.mrf.mxu0
      %v1502 = vadd.f32 %v1277, %v1501
      %v1503 = vpop.f32.mrf.mxu0
      %1504 = vmatprep.mubr.f32.mxu0 %v657
      %1505 = vmatmul.mubr.f32.gmra.mxu0 %v625
      %v1506 = vpop.f32.mrf.mxu0
      %v1507 = vadd.f32 %v1282, %v1506
      %v1508 = vpop.f32.mrf.mxu0
      %1509 = vmatprep.mubr.f32.mxu0 %v658
      %1510 = vmatmul.mubr.f32.gmra.mxu0 %v626
      %v1511 = vpop.f32.mrf.mxu0
      %v1512 = vadd.f32 %v1287, %v1511
      %v1513 = vpop.f32.mrf.mxu0
      %1514 = vmatprep.mubr.f32.mxu0 %v659
      %1515 = vmatmul.mubr.f32.gmra.mxu0 %v627
      %v1516 = vpop.f32.mrf.mxu0
      %v1517 = vadd.f32 %v1292, %v1516
      %v1518 = vpop.f32.mrf.mxu0
      %1519 = vmatprep.mubr.f32.mxu0 %v660
      %1520 = vmatmul.mubr.f32.gmra.mxu0 %v628
      %v1521 = vpop.f32.mrf.mxu0
      %v1522 = vadd.f32 %v1297, %v1521
      %v1523 = vpop.f32.mrf.mxu0
      %1524 = vmatprep.mubr.f32.mxu0 %v661
      %1525 = vmatmul.mubr.f32.gmra.mxu0 %v629
      %v1526 = vpop.f32.mrf.mxu0
      %v1527 = vadd.f32 %v1302, %v1526
      %v1528 = vpop.f32.mrf.mxu0
      %1529 = vmatprep.mubr.f32.mxu0 %v662
      %1530 = vmatmul.mubr.f32.gmra.mxu0 %v630
      %v1531 = vpop.f32.mrf.mxu0
      %v1532 = vadd.f32 %v1307, %v1531
      %v1533 = vpop.f32.mrf.mxu0
      %1534 = vmatprep.mubr.f32.mxu0 %v663
      %1535 = vmatmul.mubr.f32.gmra.mxu0 %v631
      %v1536 = vpop.f32.mrf.mxu0
      %v1537 = vadd.f32 %v1312, %v1536
      %v1538 = vpop.f32.mrf.mxu0
      %1539 = vmatprep.mubr.f32.mxu0 %v664
      %1540 = vmatmul.mubr.f32.gmra.mxu0 %v632
      %v1541 = vpop.f32.mrf.mxu0
      %v1542 = vadd.f32 %v1317, %v1541
      %v1543 = vpop.f32.mrf.mxu0
      %1544 = vmatprep.mubr.f32.mxu0 %v665
      %1545 = vmatmul.mubr.f32.gmra.mxu0 %v633
      %v1546 = vpop.f32.mrf.mxu0
      %v1547 = vadd.f32 %v1322, %v1546
      %v1548 = vpop.f32.mrf.mxu0
      %1549 = vmatprep.mubr.f32.mxu0 %v666
      %1550 = vmatmul.mubr.f32.gmra.mxu0 %v634
      %v1551 = vpop.f32.mrf.mxu0
      %v1552 = vadd.f32 %v1327, %v1551
      %v1553 = vpop.f32.mrf.mxu0
      %1554 = vmatprep.mubr.f32.mxu0 %v667
      %1555 = vmatmul.mubr.f32.gmra.mxu0 %v635
      %v1556 = vpop.f32.mrf.mxu0
      %v1557 = vadd.f32 %v1332, %v1556
      %v1558 = vpop.f32.mrf.mxu0
      %1559 = vmatprep.mubr.f32.mxu0 %v668
      %1560 = vmatmul.mubr.f32.gmra.mxu0 %v636
      %v1561 = vpop.f32.mrf.mxu0
      %v1562 = vadd.f32 %v1337, %v1561
      %v1563 = vpop.f32.mrf.mxu0
      %1564 = vmatprep.mubr.f32.mxu0 %v669
      %1565 = vmatmul.mubr.f32.gmra.mxu0 %v637
      %v1566 = vpop.f32.mrf.mxu0
      %v1567 = vadd.f32 %v1342, %v1566
      %v1568 = vpop.f32.mrf.mxu0
      %1569 = vmatprep.mubr.f32.mxu0 %v670
      %1570 = vmatmul.mubr.f32.gmra.mxu0 %v638
      %v1571 = vpop.f32.mrf.mxu0
      %v1572 = vadd.f32 %v1347, %v1571
      %v1573 = vpop.f32.mrf.mxu0
      %1574 = vmatprep.mubr.f32.mxu0 %v671
      %1575 = vmatmul.mubr.f32.gmra.mxu0 %v639
      %v1576 = vpop.f32.mrf.mxu0
      %v1577 = vadd.f32 %v1352, %v1576
      %v1578 = vpop.f32.mrf.mxu0
      %1579 = vmatprep.mubr.f32.mxu0 %v672
      %1580 = vmatmul.mubr.f32.gmra.mxu0 %v640
      %v1581 = vpop.f32.mrf.mxu0
      %v1582 = vadd.f32 %v1357, %v1581
      %v1583 = vpop.f32.mrf.mxu0
      %1584 = vmatprep.mubr.f32.mxu0 %v673
      %1585 = vmatmul.mubr.f32.gmra.mxu0 %v641
      %v1586 = vpop.f32.mrf.mxu0
      %v1587 = vadd.f32 %v1362, %v1586
      %v1588 = vpop.f32.mrf.mxu0
      %1589 = vdwg.mxu0
      %1590 = vmatprep.subr.mxu0 0.0
      %1591 = vmatpush1.msra.mxu0 %v882
      %1592 = vmatprep.subr.mxu0 0.0
      %1593 = vmatpush1.msra.mxu0 %v881
      %1594 = vmatprep.subr.mxu0 0.0
      %1595 = vmatpush1.msra.mxu0 %v880
      %1596 = vmatprep.subr.mxu0 0.0
      %1597 = vmatpush1.msra.mxu0 %v879
      %1598 = vmatprep.subr.mxu0 0.0
      %1599 = vmatpush1.msra.mxu0 %v878
      %1600 = vmatprep.subr.mxu0 0.0
      %1601 = vmatpush1.msra.mxu0 %v877
      %1602 = vmatprep.subr.mxu0 0.0
      %1603 = vmatpush1.msra.mxu0 %v876
      %1604 = vmatprep.subr.mxu0 0.0
      %1605 = vmatpush1.msra.mxu0 %v875
      %1606 = vmatprep.subr.mxu0 0.0
      %1607 = vmatpush1.msra.mxu0 %v874
      %1608 = vmatprep.subr.mxu0 0.0
      %1609 = vmatpush1.msra.mxu0 %v873
      %1610 = vmatprep.subr.mxu0 0.0
      %1611 = vmatpush1.msra.mxu0 %v872
      %1612 = vmatprep.subr.mxu0 0.0
      %1613 = vmatpush1.msra.mxu0 %v871
      %1614 = vmatprep.subr.mxu0 0.0
      %1615 = vmatpush1.msra.mxu0 %v870
      %1616 = vmatprep.subr.mxu0 0.0
      %1617 = vmatpush1.msra.mxu0 %v869
      %1618 = vmatprep.subr.mxu0 0.0
      %1619 = vmatpush1.msra.mxu0 %v868
      %1620 = vmatprep.subr.mxu0 0.0
      %1621 = vmatpush1.msra.mxu0 %v867
      %1622 = vmatprep.subr.mxu0 0.0
      %1623 = vmatpush2.msra.mxu0 %v898
      %1624 = vmatprep.subr.mxu0 0.0
      %1625 = vmatpush2.msra.mxu0 %v897
      %1626 = vmatprep.subr.mxu0 0.0
      %1627 = vmatpush2.msra.mxu0 %v896
      %1628 = vmatprep.subr.mxu0 0.0
      %1629 = vmatpush2.msra.mxu0 %v895
      %1630 = vmatprep.subr.mxu0 0.0
      %1631 = vmatpush2.msra.mxu0 %v894
      %1632 = vmatprep.subr.mxu0 0.0
      %1633 = vmatpush2.msra.mxu0 %v893
      %1634 = vmatprep.subr.mxu0 0.0
      %1635 = vmatpush2.msra.mxu0 %v892
      %1636 = vmatprep.subr.mxu0 0.0
      %1637 = vmatpush2.msra.mxu0 %v891
      %1638 = vmatprep.subr.mxu0 0.0
      %1639 = vmatpush2.msra.mxu0 %v890
      %1640 = vmatprep.subr.mxu0 0.0
      %1641 = vmatpush2.msra.mxu0 %v889
      %1642 = vmatprep.subr.mxu0 0.0
      %1643 = vmatpush2.msra.mxu0 %v888
      %1644 = vmatprep.subr.mxu0 0.0
      %1645 = vmatpush2.msra.mxu0 %v887
      %1646 = vmatprep.subr.mxu0 0.0
      %1647 = vmatpush2.msra.mxu0 %v886
      %1648 = vmatprep.subr.mxu0 0.0
      %1649 = vmatpush2.msra.mxu0 %v885
      %1650 = vmatprep.subr.mxu0 0.0
      %1651 = vmatpush2.msra.mxu0 %v884
      %1652 = vmatprep.subr.mxu0 0.0
      %1653 = vmatpush2.msra.mxu0 %v883
      %1654 = vmatprep.mubr.f32.mxu0 %v707
      %1655 = vmatmul.mubr.f32.gmra.mxu0 %v675
      %v1656 = vpop.f32.mrf.mxu0
      %v1657 = vadd.f32 %v1432, %v1656
      %v1658 = vpop.f32.mrf.mxu0
      %1659 = vmatprep.mubr.f32.mxu0 %v708
      %1660 = vmatmul.mubr.f32.gmra.mxu0 %v676
      %v1661 = vpop.f32.mrf.mxu0
      %v1662 = vadd.f32 %v1437, %v1661
      %v1663 = vpop.f32.mrf.mxu0
      %1664 = vmatprep.mubr.f32.mxu0 %v709
      %1665 = vmatmul.mubr.f32.gmra.mxu0 %v677
      %v1666 = vpop.f32.mrf.mxu0
      %v1667 = vadd.f32 %v1442, %v1666
      %v1668 = vpop.f32.mrf.mxu0
      %1669 = vmatprep.mubr.f32.mxu0 %v710
      %1670 = vmatmul.mubr.f32.gmra.mxu0 %v678
      %v1671 = vpop.f32.mrf.mxu0
      %v1672 = vadd.f32 %v1447, %v1671
      %v1673 = vpop.f32.mrf.mxu0
      %1674 = vmatprep.mubr.f32.mxu0 %v711
      %1675 = vmatmul.mubr.f32.gmra.mxu0 %v679
      %v1676 = vpop.f32.mrf.mxu0
      %v1677 = vadd.f32 %v1452, %v1676
      %v1678 = vpop.f32.mrf.mxu0
      %1679 = vmatprep.mubr.f32.mxu0 %v712
      %1680 = vmatmul.mubr.f32.gmra.mxu0 %v680
      %v1681 = vpop.f32.mrf.mxu0
      %v1682 = vadd.f32 %v1457, %v1681
      %v1683 = vpop.f32.mrf.mxu0
      %1684 = vmatprep.mubr.f32.mxu0 %v713
      %1685 = vmatmul.mubr.f32.gmra.mxu0 %v681
      %v1686 = vpop.f32.mrf.mxu0
      %v1687 = vadd.f32 %v1462, %v1686
      %v1688 = vpop.f32.mrf.mxu0
      %1689 = vmatprep.mubr.f32.mxu0 %v714
      %1690 = vmatmul.mubr.f32.gmra.mxu0 %v682
      %v1691 = vpop.f32.mrf.mxu0
      %v1692 = vadd.f32 %v1467, %v1691
      %v1693 = vpop.f32.mrf.mxu0
      %1694 = vmatprep.mubr.f32.mxu0 %v715
      %1695 = vmatmul.mubr.f32.gmra.mxu0 %v683
      %v1696 = vpop.f32.mrf.mxu0
      %v1697 = vadd.f32 %v1472, %v1696
      %v1698 = vpop.f32.mrf.mxu0
      %1699 = vmatprep.mubr.f32.mxu0 %v716
      %1700 = vmatmul.mubr.f32.gmra.mxu0 %v684
      %v1701 = vpop.f32.mrf.mxu0
      %v1702 = vadd.f32 %v1477, %v1701
      %v1703 = vpop.f32.mrf.mxu0
      %1704 = vmatprep.mubr.f32.mxu0 %v717
      %1705 = vmatmul.mubr.f32.gmra.mxu0 %v685
      %v1706 = vpop.f32.mrf.mxu0
      %v1707 = vadd.f32 %v1482, %v1706
      %v1708 = vpop.f32.mrf.mxu0
      %1709 = vmatprep.mubr.f32.mxu0 %v718
      %1710 = vmatmul.mubr.f32.gmra.mxu0 %v686
      %v1711 = vpop.f32.mrf.mxu0
      %v1712 = vadd.f32 %v1487, %v1711
      %v1713 = vpop.f32.mrf.mxu0
      %1714 = vmatprep.mubr.f32.mxu0 %v719
      %1715 = vmatmul.mubr.f32.gmra.mxu0 %v687
      %v1716 = vpop.f32.mrf.mxu0
      %v1717 = vadd.f32 %v1492, %v1716
      %v1718 = vpop.f32.mrf.mxu0
      %1719 = vmatprep.mubr.f32.mxu0 %v720
      %1720 = vmatmul.mubr.f32.gmra.mxu0 %v688
      %v1721 = vpop.f32.mrf.mxu0
      %v1722 = vadd.f32 %v1497, %v1721
      %v1723 = vpop.f32.mrf.mxu0
      %1724 = vmatprep.mubr.f32.mxu0 %v721
      %1725 = vmatmul.mubr.f32.gmra.mxu0 %v689
      %v1726 = vpop.f32.mrf.mxu0
      %v1727 = vadd.f32 %v1502, %v1726
      %v1728 = vpop.f32.mrf.mxu0
      %1729 = vmatprep.mubr.f32.mxu0 %v722
      %1730 = vmatmul.mubr.f32.gmra.mxu0 %v690
      %v1731 = vpop.f32.mrf.mxu0
      %v1732 = vadd.f32 %v1507, %v1731
      %v1733 = vpop.f32.mrf.mxu0
      %1734 = vmatprep.mubr.f32.mxu0 %v723
      %1735 = vmatmul.mubr.f32.gmra.mxu0 %v691
      %v1736 = vpop.f32.mrf.mxu0
      %v1737 = vadd.f32 %v1512, %v1736
      %v1738 = vpop.f32.mrf.mxu0
      %1739 = vmatprep.mubr.f32.mxu0 %v724
      %1740 = vmatmul.mubr.f32.gmra.mxu0 %v692
      %v1741 = vpop.f32.mrf.mxu0
      %v1742 = vadd.f32 %v1517, %v1741
      %v1743 = vpop.f32.mrf.mxu0
      %1744 = vmatprep.mubr.f32.mxu0 %v725
      %1745 = vmatmul.mubr.f32.gmra.mxu0 %v693
      %v1746 = vpop.f32.mrf.mxu0
      %v1747 = vadd.f32 %v1522, %v1746
      %v1748 = vpop.f32.mrf.mxu0
      %1749 = vmatprep.mubr.f32.mxu0 %v726
      %1750 = vmatmul.mubr.f32.gmra.mxu0 %v694
      %v1751 = vpop.f32.mrf.mxu0
      %v1752 = vadd.f32 %v1527, %v1751
      %v1753 = vpop.f32.mrf.mxu0
      %1754 = vmatprep.mubr.f32.mxu0 %v727
      %1755 = vmatmul.mubr.f32.gmra.mxu0 %v695
      %v1756 = vpop.f32.mrf.mxu0
      %v1757 = vadd.f32 %v1532, %v1756
      %v1758 = vpop.f32.mrf.mxu0
      %1759 = vmatprep.mubr.f32.mxu0 %v728
      %1760 = vmatmul.mubr.f32.gmra.mxu0 %v696
      %v1761 = vpop.f32.mrf.mxu0
      %v1762 = vadd.f32 %v1537, %v1761
      %v1763 = vpop.f32.mrf.mxu0
      %1764 = vmatprep.mubr.f32.mxu0 %v729
      %1765 = vmatmul.mubr.f32.gmra.mxu0 %v697
      %v1766 = vpop.f32.mrf.mxu0
      %v1767 = vadd.f32 %v1542, %v1766
      %v1768 = vpop.f32.mrf.mxu0
      %1769 = vmatprep.mubr.f32.mxu0 %v730
      %1770 = vmatmul.mubr.f32.gmra.mxu0 %v698
      %v1771 = vpop.f32.mrf.mxu0
      %v1772 = vadd.f32 %v1547, %v1771
      %v1773 = vpop.f32.mrf.mxu0
      %1774 = vmatprep.mubr.f32.mxu0 %v731
      %1775 = vmatmul.mubr.f32.gmra.mxu0 %v699
      %v1776 = vpop.f32.mrf.mxu0
      %v1777 = vadd.f32 %v1552, %v1776
      %v1778 = vpop.f32.mrf.mxu0
      %1779 = vmatprep.mubr.f32.mxu0 %v732
      %1780 = vmatmul.mubr.f32.gmra.mxu0 %v700
      %v1781 = vpop.f32.mrf.mxu0
      %v1782 = vadd.f32 %v1557, %v1781
      %v1783 = vpop.f32.mrf.mxu0
      %1784 = vmatprep.mubr.f32.mxu0 %v733
      %1785 = vmatmul.mubr.f32.gmra.mxu0 %v701
      %v1786 = vpop.f32.mrf.mxu0
      %v1787 = vadd.f32 %v1562, %v1786
      %v1788 = vpop.f32.mrf.mxu0
      %1789 = vmatprep.mubr.f32.mxu0 %v734
      %1790 = vmatmul.mubr.f32.gmra.mxu0 %v702
      %v1791 = vpop.f32.mrf.mxu0
      %v1792 = vadd.f32 %v1567, %v1791
      %v1793 = vpop.f32.mrf.mxu0
      %1794 = vmatprep.mubr.f32.mxu0 %v735
      %1795 = vmatmul.mubr.f32.gmra.mxu0 %v703
      %v1796 = vpop.f32.mrf.mxu0
      %v1797 = vadd.f32 %v1572, %v1796
      %v1798 = vpop.f32.mrf.mxu0
      %1799 = vmatprep.mubr.f32.mxu0 %v736
      %1800 = vmatmul.mubr.f32.gmra.mxu0 %v704
      %v1801 = vpop.f32.mrf.mxu0
      %v1802 = vadd.f32 %v1577, %v1801
      %v1803 = vpop.f32.mrf.mxu0
      %1804 = vmatprep.mubr.f32.mxu0 %v737
      %1805 = vmatmul.mubr.f32.gmra.mxu0 %v705
      %v1806 = vpop.f32.mrf.mxu0
      %v1807 = vadd.f32 %v1582, %v1806
      %v1808 = vpop.f32.mrf.mxu0
      %1809 = vmatprep.mubr.f32.mxu0 %v738
      %1810 = vmatmul.mubr.f32.gmra.mxu0 %v706
      %v1811 = vpop.f32.mrf.mxu0
      %v1812 = vadd.f32 %v1587, %v1811
      %v1813 = vpop.f32.mrf.mxu0
      %1814 = vdwg.mxu0
      %1815 = vmatprep.subr.mxu0 0.0
      %1816 = vmatpush1.msra.mxu0 %v914
      %1817 = vmatprep.subr.mxu0 0.0
      %1818 = vmatpush1.msra.mxu0 %v913
      %1819 = vmatprep.subr.mxu0 0.0
      %1820 = vmatpush1.msra.mxu0 %v912
      %1821 = vmatprep.subr.mxu0 0.0
      %1822 = vmatpush1.msra.mxu0 %v911
      %1823 = vmatprep.subr.mxu0 0.0
      %1824 = vmatpush1.msra.mxu0 %v910
      %1825 = vmatprep.subr.mxu0 0.0
      %1826 = vmatpush1.msra.mxu0 %v909
      %1827 = vmatprep.subr.mxu0 0.0
      %1828 = vmatpush1.msra.mxu0 %v908
      %1829 = vmatprep.subr.mxu0 0.0
      %1830 = vmatpush1.msra.mxu0 %v907
      %1831 = vmatprep.subr.mxu0 0.0
      %1832 = vmatpush1.msra.mxu0 %v906
      %1833 = vmatprep.subr.mxu0 0.0
      %1834 = vmatpush1.msra.mxu0 %v905
      %1835 = vmatprep.subr.mxu0 0.0
      %1836 = vmatpush1.msra.mxu0 %v904
      %1837 = vmatprep.subr.mxu0 0.0
      %1838 = vmatpush1.msra.mxu0 %v903
      %1839 = vmatprep.subr.mxu0 0.0
      %1840 = vmatpush1.msra.mxu0 %v902
      %1841 = vmatprep.subr.mxu0 0.0
      %1842 = vmatpush1.msra.mxu0 %v901
      %1843 = vmatprep.subr.mxu0 0.0
      %1844 = vmatpush1.msra.mxu0 %v900
      %1845 = vmatprep.subr.mxu0 0.0
      %1846 = vmatpush1.msra.mxu0 %v899
      %1847 = vmatprep.subr.mxu0 0.0
      %1848 = vmatpush2.msra.mxu0 0.0
      %1849 = vmatprep.subr.mxu0 0.0
      %1850 = vmatpush2.msra.mxu0 0.0
      %1851 = vmatprep.subr.mxu0 0.0
      %1852 = vmatpush2.msra.mxu0 0.0
      %1853 = vmatprep.subr.mxu0 0.0
      %1854 = vmatpush2.msra.mxu0 0.0
      %1855 = vmatprep.subr.mxu0 0.0
      %1856 = vmatpush2.msra.mxu0 0.0
      %1857 = vmatprep.subr.mxu0 0.0
      %1858 = vmatpush2.msra.mxu0 0.0
      %1859 = vmatprep.subr.mxu0 0.0
      %1860 = vmatpush2.msra.mxu0 0.0
      %1861 = vmatprep.subr.mxu0 0.0
      %1862 = vmatpush2.msra.mxu0 0.0
      %1863 = vmatprep.subr.mxu0 0.0
      %1864 = vmatpush2.msra.mxu0 0.0
      %1865 = vmatprep.subr.mxu0 0.0
      %1866 = vmatpush2.msra.mxu0 0.0
      %1867 = vmatprep.subr.mxu0 0.0
      %1868 = vmatpush2.msra.mxu0 0.0
      %1869 = vmatprep.subr.mxu0 0.0
      %1870 = vmatpush2.msra.mxu0 0.0
      %1871 = vmatprep.subr.mxu0 0.0
      %1872 = vmatpush2.msra.mxu0 0.0
      %1873 = vmatprep.subr.mxu0 0.0
      %1874 = vmatpush2.msra.mxu0 0.0
      %1875 = vmatprep.subr.mxu0 0.0
      %1876 = vmatpush2.msra.mxu0 0.0
      %1877 = vmatprep.subr.mxu0 0.0
      %1878 = vmatpush2.msra.mxu0 0.0
      %1879 = vmatprep.mubr.f32.mxu0 0.0
      %1880 = vmatmul.mubr.f32.gmra.mxu0 %v739
      %v1881 = vpop.f32.mrf.mxu0
      %v1882 = vadd.f32 %v1657, %v1881
      %v1883 = vpop.f32.mrf.mxu0
      %1884 = vmatprep.mubr.f32.mxu0 0.0
      %1885 = vmatmul.mubr.f32.gmra.mxu0 %v740
      %v1886 = vpop.f32.mrf.mxu0
      %v1887 = vadd.f32 %v1662, %v1886
      %v1888 = vpop.f32.mrf.mxu0
      %1889 = vmatprep.mubr.f32.mxu0 0.0
      %1890 = vmatmul.mubr.f32.gmra.mxu0 %v741
      %v1891 = vpop.f32.mrf.mxu0
      %v1892 = vadd.f32 %v1667, %v1891
      %v1893 = vpop.f32.mrf.mxu0
      %1894 = vmatprep.mubr.f32.mxu0 0.0
      %1895 = vmatmul.mubr.f32.gmra.mxu0 %v742
      %v1896 = vpop.f32.mrf.mxu0
      %v1897 = vadd.f32 %v1672, %v1896
      %v1898 = vpop.f32.mrf.mxu0
      %1899 = vmatprep.mubr.f32.mxu0 0.0
      %1900 = vmatmul.mubr.f32.gmra.mxu0 %v743
      %v1901 = vpop.f32.mrf.mxu0
      %v1902 = vadd.f32 %v1677, %v1901
      %v1903 = vpop.f32.mrf.mxu0
      %1904 = vmatprep.mubr.f32.mxu0 0.0
      %1905 = vmatmul.mubr.f32.gmra.mxu0 %v744
      %v1906 = vpop.f32.mrf.mxu0
      %v1907 = vadd.f32 %v1682, %v1906
      %v1908 = vpop.f32.mrf.mxu0
      %1909 = vmatprep.mubr.f32.mxu0 0.0
      %1910 = vmatmul.mubr.f32.gmra.mxu0 %v745
      %v1911 = vpop.f32.mrf.mxu0
      %v1912 = vadd.f32 %v1687, %v1911
      %v1913 = vpop.f32.mrf.mxu0
      %1914 = vmatprep.mubr.f32.mxu0 0.0
      %1915 = vmatmul.mubr.f32.gmra.mxu0 %v746
      %v1916 = vpop.f32.mrf.mxu0
      %v1917 = vadd.f32 %v1692, %v1916
      %v1918 = vpop.f32.mrf.mxu0
      %1919 = vmatprep.mubr.f32.mxu0 0.0
      %1920 = vmatmul.mubr.f32.gmra.mxu0 %v747
      %v1921 = vpop.f32.mrf.mxu0
      %v1922 = vadd.f32 %v1697, %v1921
      %v1923 = vpop.f32.mrf.mxu0
      %1924 = vmatprep.mubr.f32.mxu0 0.0
      %1925 = vmatmul.mubr.f32.gmra.mxu0 %v748
      %v1926 = vpop.f32.mrf.mxu0
      %v1927 = vadd.f32 %v1702, %v1926
      %v1928 = vpop.f32.mrf.mxu0
      %1929 = vmatprep.mubr.f32.mxu0 0.0
      %1930 = vmatmul.mubr.f32.gmra.mxu0 %v749
      %v1931 = vpop.f32.mrf.mxu0
      %v1932 = vadd.f32 %v1707, %v1931
      %v1933 = vpop.f32.mrf.mxu0
      %1934 = vmatprep.mubr.f32.mxu0 0.0
      %1935 = vmatmul.mubr.f32.gmra.mxu0 %v750
      %v1936 = vpop.f32.mrf.mxu0
      %v1937 = vadd.f32 %v1712, %v1936
      %v1938 = vpop.f32.mrf.mxu0
      %1939 = vmatprep.mubr.f32.mxu0 0.0
      %1940 = vmatmul.mubr.f32.gmra.mxu0 %v751
      %v1941 = vpop.f32.mrf.mxu0
      %v1942 = vadd.f32 %v1717, %v1941
      %v1943 = vpop.f32.mrf.mxu0
      %1944 = vmatprep.mubr.f32.mxu0 0.0
      %1945 = vmatmul.mubr.f32.gmra.mxu0 %v752
      %v1946 = vpop.f32.mrf.mxu0
      %v1947 = vadd.f32 %v1722, %v1946
      %v1948 = vpop.f32.mrf.mxu0
      %1949 = vmatprep.mubr.f32.mxu0 0.0
      %1950 = vmatmul.mubr.f32.gmra.mxu0 %v753
      %v1951 = vpop.f32.mrf.mxu0
      %v1952 = vadd.f32 %v1727, %v1951
      %v1953 = vpop.f32.mrf.mxu0
      %1954 = vmatprep.mubr.f32.mxu0 0.0
      %1955 = vmatmul.mubr.f32.gmra.mxu0 %v754
      %v1956 = vpop.f32.mrf.mxu0
      %v1957 = vadd.f32 %v1732, %v1956
      %v1958 = vpop.f32.mrf.mxu0
      %1959 = vmatprep.mubr.f32.mxu0 0.0
      %1960 = vmatmul.mubr.f32.gmra.mxu0 %v755
      %v1961 = vpop.f32.mrf.mxu0
      %v1962 = vadd.f32 %v1737, %v1961
      %v1963 = vpop.f32.mrf.mxu0
      %1964 = vmatprep.mubr.f32.mxu0 0.0
      %1965 = vmatmul.mubr.f32.gmra.mxu0 %v756
      %v1966 = vpop.f32.mrf.mxu0
      %v1967 = vadd.f32 %v1742, %v1966
      %v1968 = vpop.f32.mrf.mxu0
      %1969 = vmatprep.mubr.f32.mxu0 0.0
      %1970 = vmatmul.mubr.f32.gmra.mxu0 %v757
      %v1971 = vpop.f32.mrf.mxu0
      %v1972 = vadd.f32 %v1747, %v1971
      %v1973 = vpop.f32.mrf.mxu0
      %1974 = vmatprep.mubr.f32.mxu0 0.0
      %1975 = vmatmul.mubr.f32.gmra.mxu0 %v758
      %v1976 = vpop.f32.mrf.mxu0
      %v1977 = vadd.f32 %v1752, %v1976
      %v1978 = vpop.f32.mrf.mxu0
      %1979 = vmatprep.mubr.f32.mxu0 0.0
      %1980 = vmatmul.mubr.f32.gmra.mxu0 %v759
      %v1981 = vpop.f32.mrf.mxu0
      %v1982 = vadd.f32 %v1757, %v1981
      %v1983 = vpop.f32.mrf.mxu0
      %1984 = vmatprep.mubr.f32.mxu0 0.0
      %1985 = vmatmul.mubr.f32.gmra.mxu0 %v760
      %v1986 = vpop.f32.mrf.mxu0
      %v1987 = vadd.f32 %v1762, %v1986
      %v1988 = vpop.f32.mrf.mxu0
      %1989 = vmatprep.mubr.f32.mxu0 0.0
      %1990 = vmatmul.mubr.f32.gmra.mxu0 %v761
      %v1991 = vpop.f32.mrf.mxu0
      %v1992 = vadd.f32 %v1767, %v1991
      %v1993 = vpop.f32.mrf.mxu0
      %1994 = vmatprep.mubr.f32.mxu0 0.0
      %1995 = vmatmul.mubr.f32.gmra.mxu0 %v762
      %v1996 = vpop.f32.mrf.mxu0
      %v1997 = vadd.f32 %v1772, %v1996
      %v1998 = vpop.f32.mrf.mxu0
      %1999 = vmatprep.mubr.f32.mxu0 0.0
      %2000 = vmatmul.mubr.f32.gmra.mxu0 %v763
      %v2001 = vpop.f32.mrf.mxu0
      %v2002 = vadd.f32 %v1777, %v2001
      %v2003 = vpop.f32.mrf.mxu0
      %2004 = vmatprep.mubr.f32.mxu0 0.0
      %2005 = vmatmul.mubr.f32.gmra.mxu0 %v764
      %v2006 = vpop.f32.mrf.mxu0
      %v2007 = vadd.f32 %v1782, %v2006
      %v2008 = vpop.f32.mrf.mxu0
      %2009 = vmatprep.mubr.f32.mxu0 0.0
      %2010 = vmatmul.mubr.f32.gmra.mxu0 %v765
      %v2011 = vpop.f32.mrf.mxu0
      %v2012 = vadd.f32 %v1787, %v2011
      %v2013 = vpop.f32.mrf.mxu0
      %2014 = vmatprep.mubr.f32.mxu0 0.0
      %2015 = vmatmul.mubr.f32.gmra.mxu0 %v766
      %v2016 = vpop.f32.mrf.mxu0
      %v2017 = vadd.f32 %v1792, %v2016
      %v2018 = vpop.f32.mrf.mxu0
      %2019 = vmatprep.mubr.f32.mxu0 0.0
      %2020 = vmatmul.mubr.f32.gmra.mxu0 %v767
      %v2021 = vpop.f32.mrf.mxu0
      %v2022 = vadd.f32 %v1797, %v2021
      %v2023 = vpop.f32.mrf.mxu0
      %2024 = vmatprep.mubr.f32.mxu0 0.0
      %2025 = vmatmul.mubr.f32.gmra.mxu0 %v768
      %v2026 = vpop.f32.mrf.mxu0
      %v2027 = vadd.f32 %v1802, %v2026
      %v2028 = vpop.f32.mrf.mxu0
      %2029 = vmatprep.mubr.f32.mxu0 0.0
      %2030 = vmatmul.mubr.f32.gmra.mxu0 %v769
      %v2031 = vpop.f32.mrf.mxu0
      %v2032 = vadd.f32 %v1807, %v2031
      %v2033 = vpop.f32.mrf.mxu0
      %2034 = vmatprep.mubr.f32.mxu0 0.0
      %2035 = vmatmul.mubr.f32.gmra.mxu0 %v770
      %v2036 = vpop.f32.mrf.mxu0
      %v2037 = vadd.f32 %v1812, %v2036
      %v2038 = vpop.f32.mrf.mxu0
      %2039 = vdwg.mxu0
      %2040 = vst [vmem:[%s246] sm:$0xff] %v1882
      %2041 = vst [vmem:[%s246 + $0x8] sm:$0xff] %v1887
      %2042 = vst [vmem:[%s246 + $0x10] sm:$0xff] %v1892
      %2043 = vst [vmem:[%s246 + $0x18] sm:$0xff] %v1897
      %2044 = vst [vmem:[%s246 + $0x20] sm:$0xff] %v1902
      %2045 = vst [vmem:[%s246 + $0x28] sm:$0xff] %v1907
      %2046 = vst [vmem:[%s246 + $0x30] sm:$0xff] %v1912
      %2047 = vst [vmem:[%s246 + $0x38] sm:$0xff] %v1917
      %2048 = vst [vmem:[%s246 + $0x40] sm:$0xff] %v1922
      %2049 = vst [vmem:[%s246 + $0x48] sm:$0xff] %v1927
      %2050 = vst [vmem:[%s246 + $0x50] sm:$0xff] %v1932
      %2051 = vst [vmem:[%s246 + $0x58] sm:$0xff] %v1937
      %2052 = vst [vmem:[%s246 + $0x60] sm:$0xff] %v1942
      %2053 = vst [vmem:[%s246 + $0x68] sm:$0xff] %v1947
      %2054 = vst [vmem:[%s246 + $0x70] sm:$0xff] %v1952
      %2055 = vst [vmem:[%s246 + $0x78] sm:$0xff] %v1957
      %2056 = vst [vmem:[%s246 + $0x80] sm:$0xff] %v1962
      %2057 = vst [vmem:[%s246 + $0x88] sm:$0xff] %v1967
      %2058 = vst [vmem:[%s246 + $0x90] sm:$0xff] %v1972
      %2059 = vst [vmem:[%s246 + $0x98] sm:$0xff] %v1977
      %2060 = vst [vmem:[%s246 + $0xa0] sm:$0xff] %v1982
      %2061 = vst [vmem:[%s246 + $0xa8] sm:$0xff] %v1987
      %2062 = vst [vmem:[%s246 + $0xb0] sm:$0xff] %v1992
      %2063 = vst [vmem:[%s246 + $0xb8] sm:$0xff] %v1997
      %2064 = vst [vmem:[%s246 + $0xc0] sm:$0xff] %v2002
      %2065 = vst [vmem:[%s246 + $0xc8] sm:$0xff] %v2007
      %2066 = vst [vmem:[%s246 + $0xd0] sm:$0xff] %v2012
      %2067 = vst [vmem:[%s246 + $0xd8] sm:$0xff] %v2017
      %2068 = vst [vmem:[%s246 + $0xe0] sm:$0xff] %v2022
      %2069 = vst [vmem:[%s246 + $0xe8] sm:$0xff] %v2027
      %2070 = vst [vmem:[%s246 + $0xf0] sm:$0xff] %v2032
      %2071 = vst [vmem:[%s246 + $0xf8] sm:$0xff] %v2037
      %v2072 = vld [vmem:[%s5] sm:$0x1]
      %v2073 = vadd.f32 %v1882, %v1887
      %v2074 = vadd.f32 %v2073, %v1892
      %v2075 = vadd.f32 %v2074, %v1897
      %v2076 = vadd.f32 %v2075, %v1902
      %v2077 = vadd.f32 %v2076, %v1907
      %v2078 = vadd.f32 %v2077, %v1912
      %v2079 = vadd.f32 %v2078, %v1917
      %v2080 = vadd.f32 %v2079, %v1922
      %v2081 = vadd.f32 %v2080, %v1927
      %v2082 = vadd.f32 %v2081, %v1932
      %v2083 = vadd.f32 %v2082, %v1937
      %v2084 = vadd.f32 %v2083, %v1942
      %v2085 = vadd.f32 %v2084, %v1947
      %v2086 = vadd.f32 %v2085, %v1952
      %v2087 = vadd.f32 %v2086, %v1957
      %v2088 = vadd.f32 %v2087, %v1962
      %v2089 = vadd.f32 %v2088, %v1967
      %v2090 = vadd.f32 %v2089, %v1972
      %v2091 = vadd.f32 %v2090, %v1977
      %v2092 = vadd.f32 %v2091, %v1982
      %v2093 = vadd.f32 %v2092, %v1987
      %v2094 = vadd.f32 %v2093, %v1992
      %v2095 = vadd.f32 %v2094, %v1997
      %v2096 = vadd.f32 %v2095, %v2002
      %v2097 = vadd.f32 %v2096, %v2007
      %v2098 = vadd.f32 %v2097, %v2012
      %v2099 = vadd.f32 %v2098, %v2017
      %v2100 = vadd.f32 %v2099, %v2022
      %v2101 = vadd.f32 %v2100, %v2027
      %v2102 = vadd.f32 %v2101, %v2032
      %v2103 = vadd.f32 %v2102, %v2037
      %v2104 = vrot.slane %v2103, 4
      %v2105 = vadd.f32 %v2103, %v2104
      %v2106 = vrot.slane %v2105, 2
      %v2107 = vadd.f32 %v2105, %v2106
      %v2108 = vrot.slane %v2107, 1
      %v2109 = vadd.f32 %v2107, %v2108
      %v2110 = vadd.f32 %v2072, %v2109
      %2111 = vst [vmem:[%s5] sm:$0x1] %v2110
      %v2112 = vld [vmem:[%s6] sm:$0x1]
      %v2113 = vmul.f32 %v1882, %v1882
      %v2114 = vmul.f32 %v1887, %v1887
      %v2115 = vmul.f32 %v1892, %v1892
      %v2116 = vmul.f32 %v1897, %v1897
      %v2117 = vmul.f32 %v1902, %v1902
      %v2118 = vmul.f32 %v1907, %v1907
      %v2119 = vmul.f32 %v1912, %v1912
      %v2120 = vmul.f32 %v1917, %v1917
      %v2121 = vmul.f32 %v1922, %v1922
      %v2122 = vmul.f32 %v1927, %v1927
      %v2123 = vmul.f32 %v1932, %v1932
      %v2124 = vmul.f32 %v1937, %v1937
      %v2125 = vmul.f32 %v1942, %v1942
      %v2126 = vmul.f32 %v1947, %v1947
      %v2127 = vmul.f32 %v1952, %v1952
      %v2128 = vmul.f32 %v1957, %v1957
      %v2129 = vmul.f32 %v1962, %v1962
      %v2130 = vmul.f32 %v1967, %v1967
      %v2131 = vmul.f32 %v1972, %v1972
      %v2132 = vmul.f32 %v1977, %v1977
      %v2133 = vmul.f32 %v1982, %v1982
      %v2134 = vmul.f32 %v1987, %v1987
      %v2135 = vmul.f32 %v1992, %v1992
      %v2136 = vmul.f32 %v1997, %v1997
      %v2137 = vmul.f32 %v2002, %v2002
      %v2138 = vmul.f32 %v2007, %v2007
      %v2139 = vmul.f32 %v2012, %v2012
      %v2140 = vmul.f32 %v2017, %v2017
      %v2141 = vmul.f32 %v2022, %v2022
      %v2142 = vmul.f32 %v2027, %v2027
      %v2143 = vmul.f32 %v2032, %v2032
      %v2144 = vmul.f32 %v2037, %v2037
      %v2145 = vadd.f32 %v2113, %v2114
      %v2146 = vadd.f32 %v2145, %v2115
      %v2147 = vadd.f32 %v2146, %v2116
      %v2148 = vadd.f32 %v2147, %v2117
      %v2149 = vadd.f32 %v2148, %v2118
      %v2150 = vadd.f32 %v2149, %v2119
      %v2151 = vadd.f32 %v2150, %v2120
      %v2152 = vadd.f32 %v2151, %v2121
      %v2153 = vadd.f32 %v2152, %v2122
      %v2154 = vadd.f32 %v2153, %v2123
      %v2155 = vadd.f32 %v2154, %v2124
      %v2156 = vadd.f32 %v2155, %v2125
      %v2157 = vadd.f32 %v2156, %v2126
      %v2158 = vadd.f32 %v2157, %v2127
      %v2159 = vadd.f32 %v2158, %v2128
      %v2160 = vadd.f32 %v2159, %v2129
      %v2161 = vadd.f32 %v2160, %v2130
      %v2162 = vadd.f32 %v2161, %v2131
      %v2163 = vadd.f32 %v2162, %v2132
      %v2164 = vadd.f32 %v2163, %v2133
      %v2165 = vadd.f32 %v2164, %v2134
      %v2166 = vadd.f32 %v2165, %v2135
      %v2167 = vadd.f32 %v2166, %v2136
      %v2168 = vadd.f32 %v2167, %v2137
      %v2169 = vadd.f32 %v2168, %v2138
      %v2170 = vadd.f32 %v2169, %v2139
      %v2171 = vadd.f32 %v2170, %v2140
      %v2172 = vadd.f32 %v2171, %v2141
      %v2173 = vadd.f32 %v2172, %v2142
      %v2174 = vadd.f32 %v2173, %v2143
      %v2175 = vadd.f32 %v2174, %v2144
      %v2176 = vrot.slane %v2175, 4
      %v2177 = vadd.f32 %v2175, %v2176
      %v2178 = vrot.slane %v2177, 2
      %v2179 = vadd.f32 %v2177, %v2178
      %v2180 = vrot.slane %v2179, 1
      %v2181 = vadd.f32 %v2179, %v2180
      %v2182 = vadd.f32 %v2112, %v2181
      %2183 = vst [vmem:[%s6] sm:$0x1] %v2182
      %p2184 = scmp.lt.s32.totalorder %s18, 1
      %s2185 = scalar_select %p2184, %s18, 1
      %s2186 = smul.addr %s2185, 32
      %s2187 = smul.addr %s2186, 8
      %s2188 = scalar_lea.vmem %s4, %s2187
      // Predicated region
      $region41: #{double_conv_pallas.4} parent=35 // pred_check
        %p2189 = pneg %p125
      $region42: #{double_conv_pallas.4} parent=35 // pred_check_branch
        %2191 = sbr.rel (%p2189) target = $region44
      $region43: #{double_conv_pallas.4} parent=35 // pred_region
        _
      $region44: #{double_conv_pallas.4} parent=35 // pred_fallthru
        _
      // Predicated region
      $region45: #{double_conv_pallas.4} parent=35 // pred_check
        %p2192 = pneg %p146
      $region46: #{double_conv_pallas.4} parent=35 // pred_check_branch
        %2194 = sbr.rel (%p2192) target = $region48
      $region47: #{double_conv_pallas.4} parent=35 // pred_region
        _
      $region48: #{double_conv_pallas.4} parent=35 // pred_fallthru
        _
      // Predicated region
      $region49: #{double_conv_pallas.4} parent=35 // pred_check
        %p2195 = pneg %p167
      $region50: #{double_conv_pallas.4} parent=35 // pred_check_branch
        %2197 = sbr.rel (%p2195) target = $region52
      $region51: #{double_conv_pallas.4} parent=35 // pred_region
        _
      $region52: #{double_conv_pallas.4} parent=35 // pred_fallthru
        _
      // Predicated region
      $region53: #{double_conv_pallas.4} parent=35 // pred_check
        %p2198 = pneg %p146
      $region54: #{double_conv_pallas.4} parent=35 // pred_check_branch
        %2200 = sbr.rel (%p2198) target = $region56
      $region55: #{double_conv_pallas.4} parent=35 // pred_region
        _
      $region56: #{double_conv_pallas.4} parent=35 // pred_fallthru
        _
      // Predicated region
      $region57: #{double_conv_pallas.4} parent=35 // pred_check
        %p2201 = pneg %p167
      $region58: #{double_conv_pallas.4} parent=35 // pred_check_branch
        %2203 = sbr.rel (%p2201) target = $region60
      $region59: #{double_conv_pallas.4} parent=35 // pred_region
        _
      $region60: #{double_conv_pallas.4} parent=35 // pred_fallthru
        _
    $region36: #{double_conv_pallas.4} parent=5 // pred_fallthru
      _
    %p2204 = scmp.le.s32.totalorder 2, %s13
    // Predicated region
    $region61: #{double_conv_pallas.4} parent=5 // pred_check
      %p2205 = pneg %p2204
    $region62: #{double_conv_pallas.4} parent=5 // pred_check_branch
      %2207 = sbr.rel (%p2205) target = $region64
    $region63: #{double_conv_pallas.4} parent=5 // pred_region
      %s2208 = ssub.s32 %s13, 2
      // Predicated region
      $region65: #{double_conv_pallas.4} parent=63 // pred_check
        %p2209 = pneg %p131
      $region66: #{double_conv_pallas.4} parent=63 // pred_check_branch
        %2211 = sbr.rel (%p2209) target = $region68
      $region67: #{double_conv_pallas.4} parent=63 // pred_region
        %p2212 = scmp.lt.s32.totalorder %s19, 1
        %s2213 = scalar_select %p2212, %s19, 1
        %s2214 = smul.addr %s2213, 32
        %s2215 = smul.addr %s2214, 8
        %s2216 = scalar_lea.vmem %s4, %s2215
      $region68: #{double_conv_pallas.4} parent=63 // pred_fallthru
        _
    $region64: #{double_conv_pallas.4} parent=5 // pred_fallthru
      _
  $region6: #{double_conv_pallas.4} parent=0 // loop_footer
    %s17 = sadd.s32 1, %s13
  $region7: #{double_conv_pallas.4} parent=0 // loop_footer_branch
    %12 = sbr.rel target = $region3
  $region8: #{double_conv_pallas.4} parent=0 // loop_exit
    _

</llo_original>
